<compile_context>
chip_gen: v6e
topology: v6e:2x2x1
jax: 0.10.0
libtpu: 0.0.40
codegen_flags: <defaults>
</compile_context>

<pallas_src>
import jax
import jax.numpy as jnp
import numpy as np
from jax import lax
from jax.experimental import pallas as pl
from jax.experimental.pallas import tpu as pltpu


def _residual_conv_bn_relu_kernel(x_ref, w_ref, b_ref, o_ref, xpad_ref, acc_ref):
    """Fused out = x + relu(conv3x3(x)*bn_scale + bn_bias) for one batch tile.

    x_ref    : (TB, H, W, C)        bf16  unpadded NHWC input tile
    w_ref    : (3, 3C, Cout)        bf16  weights, ky-major, kx folded into K,
                                          BN scale folded into output channels
    b_ref    : (1, Cout)            f32   folded BatchNorm bias
    o_ref    : (TB*H*W, Cout)       bf16  output tile (row-flattened NHWC)
    xpad_ref : (TB, H+2, W+2, C)    bf16  VMEM scratch, zero-padded input
    acc_ref  : (TB*H*W, Cout)       f32   VMEM accumulator scratch
    """
    tb, h, w, c = x_ref.shape
    m = tb * h * w

    # In-kernel zero padding: zero the whole scratch every step (cheap VMEM
    # store; re-zeroing each step keeps it correct under megacore sharding of
    # the parallel batch grid), then overwrite the center with this tile.
    xpad_ref[...] = jnp.zeros(xpad_ref.shape, xpad_ref.dtype)
    xpad_ref[:, 1:h + 1, 1:w + 1, :] = x_ref[...]

    # 3x3 conv as 3 MXU dots: for each row tap ky, fold the three kx taps into
    # the contraction dim -> (M, 3C) @ (3C, Cout), accumulated in VMEM in f32.
    for ky in range(3):
        win = jnp.concatenate(
            [xpad_ref[:, ky:ky + h, kx:kx + w, :] for kx in range(3)],
            axis=-1).reshape(m, 3 * c)
        contrib = jnp.dot(win, w_ref[ky], preferred_element_type=jnp.float32)
        if ky == 0:
            acc_ref[...] = contrib
        else:
            acc_ref[...] += contrib

    # Folded-BN bias + ReLU + residual add in f32; store bf16.
    y = jnp.maximum(acc_ref[...] + b_ref[...], 0.0)
    res = x_ref[...].reshape(m, c).astype(jnp.float32)   # bf16-rounded skip path
    o_ref[...] = (res + y).astype(o_ref.dtype)


def _vmem_limit_bytes():
    """Generation-aware scoped-VMEM cap: ~3/4 of physical, capped at 96 MiB.

    v5e/v6e (128 MiB physical) -> 96 MiB, v7x (64 MiB) -> 48 MiB. Falls back to
    the conservative v7x number if the hardware query is unavailable."""
    try:
        cap = int(pltpu.get_tpu_info().vmem_capacity_bytes)
    except Exception:
        cap = 64 * 1024 * 1024
    return max(32 * 1024 * 1024, min(3 * cap // 4, 96 * 1024 * 1024))


def _pick_images_per_block(n, h, w, c, cout, block_budget_bytes):
    """Images per grid step, bounded by an explicit VMEM budget, a per-step
    row target (amortize ~0.35us/step), and >=4 grid steps (2 per TensorCore
    on v7x) so the BlockSpec double-buffering actually overlaps DMA."""
    per_img = (h * w * c * 2 * 2                 # bf16 input block, 2 buffers
               + (h + 2) * (w + 2) * c * 2       # bf16 padded scratch
               + h * w * cout * 4                # f32 accumulator scratch
               + h * w * cout * 2 * 2            # bf16 output block, 2 buffers
               + h * w * 3 * c * 2               # (M, 3C) bf16 window temp
               + h * w * cout * 4)               # f32 dot-result temp
    tb = max(1, block_budget_bytes // per_img)
    tb = min(tb, max(1, 4096 // max(1, h * w)))  # per-step row target
    tb = min(tb, max(1, n // 4))                 # >=4 grid steps when possible
    tb = min(tb, n)
    tb = max(1, tb)
    while n % tb:                                # must divide the batch exactly
        tb -= 1
    return tb


def residual_forward_nhwc(x_nhwc, conv_w, bn_scale, bn_bias):
    """NHWC/bf16-native path. x_nhwc: (N,H,W,C); conv_w: (Cout,Cin,3,3) OIHW."""
    n, h, w, c = x_nhwc.shape
    cout = conv_w.shape[0]
    assert cout == c, "Residual requires module output channels == input channels"

    x_bf16 = x_nhwc.astype(jnp.bfloat16)

    # (Cout,Cin,kh,kw) -> (kh,kw,Cin,Cout) -> (3, 3*Cin, Cout): row index of the
    # K dim is kx*Cin + ci, matching the kernel's channel-concat window order.
    # BN scale is folded into the output-channel columns.
    w_mat = jnp.transpose(conv_w, (2, 3, 1, 0)).reshape(3, 3 * c, cout)
    w_mat = (w_mat * bn_scale.reshape(1, 1, cout)).astype(jnp.bfloat16)
    b_row = bn_bias.reshape(1, cout).astype(jnp.float32)

    vmem_limit = _vmem_limit_bytes()
    tb = _pick_images_per_block(n, h, w, c, cout, vmem_limit // 2)
    grid = (n // tb,)
    m_blk = tb * h * w

    out_flat = pl.pallas_call(
        _residual_conv_bn_relu_kernel,
        out_shape=jax.ShapeDtypeStruct((n * h * w, cout), jnp.bfloat16),
        grid=grid,
        in_specs=[
            pl.BlockSpec((tb, h, w, c), lambda i: (i, 0, 0, 0)),
            pl.BlockSpec((3, 3 * c, cout), lambda i: (0, 0, 0)),  # VMEM-resident
            pl.BlockSpec((1, cout), lambda i: (0, 0)),            # VMEM-resident
        ],
        out_specs=pl.BlockSpec((m_blk, cout), lambda i: (i, 0)),
        scratch_shapes=[
            pltpu.VMEM((tb, h + 2, w + 2, c), jnp.bfloat16),  # padded input
            pltpu.VMEM((m_blk, cout), jnp.float32),           # f32 accumulator
        ],
        compiler_params=pltpu.CompilerParams(
            dimension_semantics=("parallel",),        # shard batch over 2 TCs
            vmem_limit_bytes=vmem_limit),
    )(x_bf16, w_mat, b_row)

    return out_flat.reshape(n, h, w, cout)


def residual_forward(x_nchw, conv_w, bn_scale, bn_bias):
    """PyTorch-layout adapter: (N,C,H,W) f32 in, (N,C,H,W) f32 out."""
    x_nhwc = jnp.transpose(x_nchw, (0, 2, 3, 1))
    out_nhwc = residual_forward_nhwc(x_nhwc, conv_w, bn_scale, bn_bias)
    return jnp.transpose(out_nhwc, (0, 3, 1, 2)).astype(x_nchw.dtype)


def _reference_forward(x_nchw, conv_w, bn_scale, bn_bias):
    """Pure-JAX f32 reference: x + relu(bn(conv3x3(x)))."""
    y = lax.conv_general_dilated(
        x_nchw, conv_w, window_strides=(1, 1), padding="SAME",
        dimension_numbers=("NCHW", "OIHW", "NCHW"))
    y = y * bn_scale[None, :, None, None] + bn_bias[None, :, None, None]
    y = jnp.maximum(y, 0.0)
    return x_nchw + y


if __name__ == "__main__":
    key = jax.random.PRNGKey(0)
    k_x, k_w = jax.random.split(key)

    # Small shapes consistent with the module: batch=2, channels=4, spatial=16.
    N, C, H, W = 2, 4, 16, 16
    x = jax.random.normal(k_x, (N, C, H, W), dtype=jnp.float32)

    # Deterministic parameters for the wrapped conv_bn module.
    conv_w = jax.random.normal(k_w, (C, C, 3, 3), dtype=jnp.float32) * 0.1
    # Folded eval-mode BatchNorm: gamma=1, beta=0, running_mean=0, running_var=1.
    eps = 1e-5
    gamma = jnp.ones((C,), jnp.float32)
    beta = jnp.zeros((C,), jnp.float32)
    running_mean = jnp.zeros((C,), jnp.float32)
    running_var = jnp.ones((C,), jnp.float32)
    bn_scale = gamma / jnp.sqrt(running_var + eps)
    bn_bias = beta - running_mean * bn_scale

    fwd = jax.jit(residual_forward)
    out = jax.block_until_ready(fwd(x, conv_w, bn_scale, bn_bias))

    ref = jax.block_until_ready(_reference_forward(x, conv_w, bn_scale, bn_bias))
    # Tolerances sized for bf16 conv operands / bf16 output & skip path
    # (f32 accumulation and epilogue math).
    np.testing.assert_allclose(np.asarray(out, dtype=np.float32), np.asarray(ref),
                               rtol=5e-2, atol=5e-2)

    print("KERNEL_OK")
</pallas_src>

<mosaic_0001>
module attributes {stable_mosaic.version = 11 : i64} {
  func.func @_residual_conv_bn_relu_kernel(%arg0: i32, %arg1: memref<1x16x16x4xbf16, #tpu.memory_space<vmem>>, %arg2: memref<3x12x4xbf16, #tpu.memory_space<vmem>>, %arg3: memref<1x4xf32, #tpu.memory_space<vmem>>, %arg4: memref<256x4xbf16, #tpu.memory_space<vmem>>, %arg5: memref<1x18x18x4xbf16, #tpu.memory_space<vmem>>, %arg6: memref<256x4xf32, #tpu.memory_space<vmem>>) attributes {dimension_semantics = [#tpu.dimension_semantics<parallel>], iteration_bounds = array<i64: 2>, scalar_prefetch = 0 : i64, scratch_operands = 2 : i64, tpu.core_type = #tpu.core_type<tc>, window_params = [{transform_indices = @transform_0, window_bounds = array<i64: 1, 16, 16, 4>}, {pipeline_mode = #tpu.pipeline_mode<synchronous>, transform_indices = @transform_1, window_bounds = array<i64: 3, 12, 4>}, {pipeline_mode = #tpu.pipeline_mode<synchronous>, transform_indices = @transform_2, window_bounds = array<i64: 1, 4>}, {transform_indices = @transform_3, window_bounds = array<i64: 256, 4>}]} {
    %cst = arith.constant 0.000000e+00 : bf16
    %0 = vector.broadcast %cst : bf16 to vector<1x18x18x4xbf16>
    %c0 = arith.constant 0 : index
    %c0_0 = arith.constant 0 : index
    %c0_1 = arith.constant 0 : index
    %c0_2 = arith.constant 0 : index
    %1 = vector.load %arg5[%c0, %c0_0, %c0_1, %c0_2] : memref<1x18x18x4xbf16, #tpu.memory_space<vmem>>, vector<1x18x18x4xbf16>
    tpu.vector_store %arg5[%c0, %c0_0, %c0_1, %c0_2], %0 {strides = array<i32>} : memref<1x18x18x4xbf16, #tpu.memory_space<vmem>>, vector<1x18x18x4xbf16>,
    %c0_3 = arith.constant 0 : index
    %c0_4 = arith.constant 0 : index
    %c0_5 = arith.constant 0 : index
    %c0_6 = arith.constant 0 : index
    %2 = vector.load %arg1[%c0_3, %c0_4, %c0_5, %c0_6] : memref<1x16x16x4xbf16, #tpu.memory_space<vmem>>, vector<1x16x16x4xbf16>
    %c0_7 = arith.constant 0 : index
    %c1 = arith.constant 1 : index
    %c1_8 = arith.constant 1 : index
    %c0_9 = arith.constant 0 : index
    %3 = vector.load %arg5[%c0_7, %c1, %c1_8, %c0_9] : memref<1x18x18x4xbf16, #tpu.memory_space<vmem>>, vector<1x16x16x4xbf16>
    tpu.vector_store %arg5[%c0_7, %c1, %c1_8, %c0_9], %2 {strides = array<i32>} : memref<1x18x18x4xbf16, #tpu.memory_space<vmem>>, vector<1x16x16x4xbf16>,
    %c0_10 = arith.constant 0 : index
    %c0_11 = arith.constant 0 : index
    %c0_12 = arith.constant 0 : index
    %c0_13 = arith.constant 0 : index
    %4 = vector.load %arg5[%c0_10, %c0_11, %c0_12, %c0_13] : memref<1x18x18x4xbf16, #tpu.memory_space<vmem>>, vector<1x16x16x4xbf16>
    %c0_14 = arith.constant 0 : index
    %c0_15 = arith.constant 0 : index
    %c1_16 = arith.constant 1 : index
    %c0_17 = arith.constant 0 : index
    %5 = vector.load %arg5[%c0_14, %c0_15, %c1_16, %c0_17] : memref<1x18x18x4xbf16, #tpu.memory_space<vmem>>, vector<1x16x16x4xbf16>
    %c0_18 = arith.constant 0 : index
    %c0_19 = arith.constant 0 : index
    %c2 = arith.constant 2 : index
    %c0_20 = arith.constant 0 : index
    %6 = vector.load %arg5[%c0_18, %c0_19, %c2, %c0_20] : memref<1x18x18x4xbf16, #tpu.memory_space<vmem>>, vector<1x16x16x4xbf16>
    %7 = tpu.concatenate %4, %5, %6 in 3 : vector<1x16x16x4xbf16>, vector<1x16x16x4xbf16>, vector<1x16x16x4xbf16> -> vector<1x16x16x12xbf16>
    %8 = vector.shape_cast %7 : vector<1x16x16x12xbf16> to vector<256x12xbf16>
    %c0_21 = arith.constant 0 : index
    %c0_22 = arith.constant 0 : index
    %c0_23 = arith.constant 0 : index
    %9 = vector.load %arg2[%c0_21, %c0_22, %c0_23] : memref<3x12x4xbf16, #tpu.memory_space<vmem>>, vector<1x12x4xbf16>
    %10 = vector.shape_cast %9 : vector<1x12x4xbf16> to vector<12x4xbf16>
    %cst_24 = arith.constant dense<0.000000e+00> : vector<256x4xf32>
    %11 = tpu.matmul %8, %10, %cst_24 {dimension_numbers = #tpu.dot_dimension_numbers<[1], [0], [0], [1], [0, 0, 1, 1], [], []>} : vector<256x12xbf16>, vector<12x4xbf16>, vector<256x4xf32> -> vector<256x4xf32>
    %c0_25 = arith.constant 0 : index
    %c0_26 = arith.constant 0 : index
    %12 = vector.load %arg6[%c0_25, %c0_26] : memref<256x4xf32, #tpu.memory_space<vmem>>, vector<256x4xf32>
    tpu.vector_store %arg6[%c0_25, %c0_26], %11 {strides = array<i32>} : memref<256x4xf32, #tpu.memory_space<vmem>>, vector<256x4xf32>,
    %c0_27 = arith.constant 0 : index
    %c1_28 = arith.constant 1 : index
    %c0_29 = arith.constant 0 : index
    %c0_30 = arith.constant 0 : index
    %13 = vector.load %arg5[%c0_27, %c1_28, %c0_29, %c0_30] : memref<1x18x18x4xbf16, #tpu.memory_space<vmem>>, vector<1x16x16x4xbf16>
    %c0_31 = arith.constant 0 : index
    %c1_32 = arith.constant 1 : index
    %c1_33 = arith.constant 1 : index
    %c0_34 = arith.constant 0 : index
    %14 = vector.load %arg5[%c0_31, %c1_32, %c1_33, %c0_34] : memref<1x18x18x4xbf16, #tpu.memory_space<vmem>>, vector<1x16x16x4xbf16>
    %c0_35 = arith.constant 0 : index
    %c1_36 = arith.constant 1 : index
    %c2_37 = arith.constant 2 : index
    %c0_38 = arith.constant 0 : index
    %15 = vector.load %arg5[%c0_35, %c1_36, %c2_37, %c0_38] : memref<1x18x18x4xbf16, #tpu.memory_space<vmem>>, vector<1x16x16x4xbf16>
    %16 = tpu.concatenate %13, %14, %15 in 3 : vector<1x16x16x4xbf16>, vector<1x16x16x4xbf16>, vector<1x16x16x4xbf16> -> vector<1x16x16x12xbf16>
    %17 = vector.shape_cast %16 : vector<1x16x16x12xbf16> to vector<256x12xbf16>
    %c1_39 = arith.constant 1 : index
    %c0_40 = arith.constant 0 : index
    %c0_41 = arith.constant 0 : index
    %18 = vector.load %arg2[%c1_39, %c0_40, %c0_41] : memref<3x12x4xbf16, #tpu.memory_space<vmem>>, vector<1x12x4xbf16>
    %19 = vector.shape_cast %18 : vector<1x12x4xbf16> to vector<12x4xbf16>
    %cst_42 = arith.constant dense<0.000000e+00> : vector<256x4xf32>
    %20 = tpu.matmul %17, %19, %cst_42 {dimension_numbers = #tpu.dot_dimension_numbers<[1], [0], [0], [1], [0, 0, 1, 1], [], []>} : vector<256x12xbf16>, vector<12x4xbf16>, vector<256x4xf32> -> vector<256x4xf32>
    %c0_43 = arith.constant 0 : index
    %c0_44 = arith.constant 0 : index
    %21 = vector.load %arg6[%c0_43, %c0_44] : memref<256x4xf32, #tpu.memory_space<vmem>>, vector<256x4xf32>
    %22 = arith.addf %21, %20 : vector<256x4xf32>
    %c0_45 = arith.constant 0 : index
    %c0_46 = arith.constant 0 : index
    %23 = vector.load %arg6[%c0_45, %c0_46] : memref<256x4xf32, #tpu.memory_space<vmem>>, vector<256x4xf32>
    tpu.vector_store %arg6[%c0_45, %c0_46], %22 {strides = array<i32>} : memref<256x4xf32, #tpu.memory_space<vmem>>, vector<256x4xf32>,
    %c0_47 = arith.constant 0 : index
    %c2_48 = arith.constant 2 : index
    %c0_49 = arith.constant 0 : index
    %c0_50 = arith.constant 0 : index
    %24 = vector.load %arg5[%c0_47, %c2_48, %c0_49, %c0_50] : memref<1x18x18x4xbf16, #tpu.memory_space<vmem>>, vector<1x16x16x4xbf16>
    %c0_51 = arith.constant 0 : index
    %c2_52 = arith.constant 2 : index
    %c1_53 = arith.constant 1 : index
    %c0_54 = arith.constant 0 : index
    %25 = vector.load %arg5[%c0_51, %c2_52, %c1_53, %c0_54] : memref<1x18x18x4xbf16, #tpu.memory_space<vmem>>, vector<1x16x16x4xbf16>
    %c0_55 = arith.constant 0 : index
    %c2_56 = arith.constant 2 : index
    %c2_57 = arith.constant 2 : index
    %c0_58 = arith.constant 0 : index
    %26 = vector.load %arg5[%c0_55, %c2_56, %c2_57, %c0_58] : memref<1x18x18x4xbf16, #tpu.memory_space<vmem>>, vector<1x16x16x4xbf16>
    %27 = tpu.concatenate %24, %25, %26 in 3 : vector<1x16x16x4xbf16>, vector<1x16x16x4xbf16>, vector<1x16x16x4xbf16> -> vector<1x16x16x12xbf16>
    %28 = vector.shape_cast %27 : vector<1x16x16x12xbf16> to vector<256x12xbf16>
    %c2_59 = arith.constant 2 : index
    %c0_60 = arith.constant 0 : index
    %c0_61 = arith.constant 0 : index
    %29 = vector.load %arg2[%c2_59, %c0_60, %c0_61] : memref<3x12x4xbf16, #tpu.memory_space<vmem>>, vector<1x12x4xbf16>
    %30 = vector.shape_cast %29 : vector<1x12x4xbf16> to vector<12x4xbf16>
    %cst_62 = arith.constant dense<0.000000e+00> : vector<256x4xf32>
    %31 = tpu.matmul %28, %30, %cst_62 {dimension_numbers = #tpu.dot_dimension_numbers<[1], [0], [0], [1], [0, 0, 1, 1], [], []>} : vector<256x12xbf16>, vector<12x4xbf16>, vector<256x4xf32> -> vector<256x4xf32>
    %c0_63 = arith.constant 0 : index
    %c0_64 = arith.constant 0 : index
    %32 = vector.load %arg6[%c0_63, %c0_64] : memref<256x4xf32, #tpu.memory_space<vmem>>, vector<256x4xf32>
    %33 = arith.addf %32, %31 : vector<256x4xf32>
    %c0_65 = arith.constant 0 : index
    %c0_66 = arith.constant 0 : index
    %34 = vector.load %arg6[%c0_65, %c0_66] : memref<256x4xf32, #tpu.memory_space<vmem>>, vector<256x4xf32>
    tpu.vector_store %arg6[%c0_65, %c0_66], %33 {strides = array<i32>} : memref<256x4xf32, #tpu.memory_space<vmem>>, vector<256x4xf32>,
    %c0_67 = arith.constant 0 : index
    %c0_68 = arith.constant 0 : index
    %35 = vector.load %arg6[%c0_67, %c0_68] : memref<256x4xf32, #tpu.memory_space<vmem>>, vector<256x4xf32>
    %c0_69 = arith.constant 0 : index
    %c0_70 = arith.constant 0 : index
    %36 = vector.load %arg3[%c0_69, %c0_70] : memref<1x4xf32, #tpu.memory_space<vmem>>, vector<1x4xf32>
    %37 = vector.broadcast %36 : vector<1x4xf32> to vector<256x4xf32>
    %38 = arith.addf %35, %37 : vector<256x4xf32>
    %cst_71 = arith.constant 0.000000e+00 : f32
    %39 = vector.broadcast %cst_71 : f32 to vector<256x4xf32>
    %40 = arith.maximumf %38, %39 : vector<256x4xf32>
    %c0_72 = arith.constant 0 : index
    %c0_73 = arith.constant 0 : index
    %c0_74 = arith.constant 0 : index
    %c0_75 = arith.constant 0 : index
    %41 = vector.load %arg1[%c0_72, %c0_73, %c0_74, %c0_75] : memref<1x16x16x4xbf16, #tpu.memory_space<vmem>>, vector<1x16x16x4xbf16>
    %42 = vector.shape_cast %41 : vector<1x16x16x4xbf16> to vector<256x4xbf16>
    %43 = arith.extf %42 : vector<256x4xbf16> to vector<256x4xf32>
    %44 = arith.addf %43, %40 : vector<256x4xf32>
    %45 = arith.truncf %44 : vector<256x4xf32> to vector<256x4xbf16>
    %c0_76 = arith.constant 0 : index
    %c0_77 = arith.constant 0 : index
    %46 = vector.load %arg4[%c0_76, %c0_77] : memref<256x4xbf16, #tpu.memory_space<vmem>>, vector<256x4xbf16>
    tpu.vector_store %arg4[%c0_76, %c0_77], %45 {strides = array<i32>} : memref<256x4xbf16, #tpu.memory_space<vmem>>, vector<256x4xbf16>,
    return
  }
  func.func @transform_0(%arg0: i32) -> (i32, i32, i32, i32) {
    %c0_i32 = arith.constant 0 : i32
    %c0_i32_0 = arith.constant 0 : i32
    %c0_i32_1 = arith.constant 0 : i32
    %c0_i32_2 = arith.constant 0 : i32
    return %arg0, %c0_i32, %c0_i32_0, %c0_i32_1 : i32, i32, i32, i32
  }
  func.func @transform_1(%arg0: i32) -> (i32, i32, i32) {
    %c0_i32 = arith.constant 0 : i32
    %c0_i32_0 = arith.constant 0 : i32
    %c0_i32_1 = arith.constant 0 : i32
    %c0_i32_2 = arith.constant 0 : i32
    return %c0_i32, %c0_i32_0, %c0_i32_1 : i32, i32, i32
  }
  func.func @transform_2(%arg0: i32) -> (i32, i32) {
    %c0_i32 = arith.constant 0 : i32
    %c0_i32_0 = arith.constant 0 : i32
    %c0_i32_1 = arith.constant 0 : i32
    return %c0_i32, %c0_i32_0 : i32, i32
  }
  func.func @transform_3(%arg0: i32) -> (i32, i32) {
    %c0_i32 = arith.constant 0 : i32
    %c0_i32_0 = arith.constant 0 : i32
    return %arg0, %c0_i32 : i32, i32
  }
}

</mosaic_0001>

<llo_original>
// kernel: residual_forward.1
$region0: #{residual_forward.1}
  #allocation0 [shape = 'u32[]', space=smem, size = 0x4, offset = 0x4, fixed_abs, tag = 'smem constant byte address 0x4 - core index']
  #allocation1 [shape = 'u32[144,128]{1,0:T(1,128)}', space=vmem, size = 0x12000, scoped, tag = 'internal scratch']
  #allocation2 [shape = 'bf16[1,18,18,4]{3,2,1,0:T(8,128)(2,1)}', space=vmem, size = 0x1b000, scoped, tag = 'scratch operand']
  #allocation3 [shape = 'f32[256,4]{1,0:T(8,128)}', space=vmem, size = 0x20000, scoped, tag = 'scratch operand']
  %s0 = inlined_call_operand.vmem [shape: bf16[2,16,16,4], index: 0, kind: input, shape index: {}]
  %s1 = inlined_call_operand.vmem [shape: bf16[3,12,4], index: 1, kind: input, shape index: {}]
  %s2 = inlined_call_operand.vmem [shape: f32[1,4], index: 2, kind: input, shape index: {}]
  %s3 = inlined_call_operand.vmem [shape: bf16[512,4], index: 3, kind: output, shape index: {}]
  %s4 = sld [smem:[#allocation0]]
  $region45: #{residual_forward.1} parent=0
    _
  %s6 = ssub.s32 1, %s4
  %s7 = scalar_select 0, %s6, %s4
  loop: start=0, step=1, limit=4
  $region2: #{residual_forward.1} parent=0 // loop_pre_header
    _
  $region3: #{residual_forward.1} parent=0 // loop_header
    %s9 = sphi 0, %s13
    %p10 = scmp.ge.s32.totalorder %s9, 4
    %s19 = sphi 0, %s21
    %s22 = sphi 0, %s19
    %s23 = sphi 0, %s22
    %s39 = sphi 0, %s23
    %s43 = sphi 0, %s43
    %s45 = sphi 0, %s43
    %s46 = sphi 0, %s45
    %s60 = sphi 0, %s46
    %s64 = sphi 0, %s64
    %s66 = sphi 0, %s64
    %s67 = sphi 0, %s66
    %s81 = sphi 0, %s67
    %s87 = sphi 0, %s89
    %s90 = sphi 0, %s87
    %s91 = sphi 0, %s90
    %s107 = sphi 0, %s91
  $region4: #{residual_forward.1} parent=0 // loop_header_branch
    %12 = sbr.rel (%p10) target = $region8
  $region5: #{residual_forward.1} parent=0 // loop_body
    %s14 = ssub.s32 %s9, 1
    %s15 = ssub.s32 %s9, 2
    %s16 = sadd.s32 %s9, 1
    %s17 = ssub.s32 %s9, %s16
    %p18 = scmp.eq.s32.totalorder %s17, 0
    %s20 = sadd.s32 %s19, 1
    %s21 = scalar_select %p18, %s19, %s20
    %p24 = pneg %p18
    %p25 = scmp.eq.s32.totalorder %s9, 1
    %p26 = por %p24, %p25
    %p27 = scmp.ne.s32.totalorder %s19, %s22
    %p28 = scmp.eq.s32.totalorder %s9, 0
    %p29 = por %p27, %p28
    %p30 = scmp.ne.s32.totalorder %s19, %s22
    %p31 = scmp.eq.s32.totalorder %s14, 1
    %p32 = por %p30, %p31
    %p33 = scmp.ne.s32.totalorder %s22, %s23
    %p34 = scmp.eq.s32.totalorder %s14, 0
    %p35 = por %p33, %p34
    %p36 = scmp.ne.s32.totalorder %s22, %s23
    %p37 = scmp.eq.s32.totalorder %s15, 1
    %p38 = por %p36, %p37
    %p40 = scmp.ne.s32.totalorder %s23, %s39
    %p41 = scmp.eq.s32.totalorder %s15, 0
    %p42 = por %p40, %p41
    %s44 = sadd.s32 %s43, 1
    %p47 = scmp.eq.s32.totalorder %s9, 1
    %p48 = scmp.ne.s32.totalorder %s43, %s45
    %p49 = scmp.eq.s32.totalorder %s9, 0
    %p50 = por %p48, %p49
    %p51 = scmp.ne.s32.totalorder %s43, %s45
    %p52 = scmp.eq.s32.totalorder %s14, 1
    %p53 = por %p51, %p52
    %p54 = scmp.ne.s32.totalorder %s45, %s46
    %p55 = scmp.eq.s32.totalorder %s14, 0
    %p56 = por %p54, %p55
    %p57 = scmp.ne.s32.totalorder %s45, %s46
    %p58 = scmp.eq.s32.totalorder %s15, 1
    %p59 = por %p57, %p58
    %p61 = scmp.ne.s32.totalorder %s46, %s60
    %p62 = scmp.eq.s32.totalorder %s15, 0
    %p63 = por %p61, %p62
    %s65 = sadd.s32 %s64, 1
    %p68 = scmp.eq.s32.totalorder %s9, 1
    %p69 = scmp.ne.s32.totalorder %s64, %s66
    %p70 = scmp.eq.s32.totalorder %s9, 0
    %p71 = por %p69, %p70
    %p72 = scmp.ne.s32.totalorder %s64, %s66
    %p73 = scmp.eq.s32.totalorder %s14, 1
    %p74 = por %p72, %p73
    %p75 = scmp.ne.s32.totalorder %s66, %s67
    %p76 = scmp.eq.s32.totalorder %s14, 0
    %p77 = por %p75, %p76
    %p78 = scmp.ne.s32.totalorder %s66, %s67
    %p79 = scmp.eq.s32.totalorder %s15, 1
    %p80 = por %p78, %p79
    %p82 = scmp.ne.s32.totalorder %s67, %s81
    %p83 = scmp.eq.s32.totalorder %s15, 0
    %p84 = por %p82, %p83
    %s85 = ssub.s32 %s9, %s16
    %p86 = scmp.eq.s32.totalorder %s85, 0
    %s88 = sadd.s32 %s87, 1
    %s89 = scalar_select %p86, %s87, %s88
    %p92 = pneg %p86
    %p93 = scmp.eq.s32.totalorder %s9, 1
    %p94 = por %p92, %p93
    %p95 = scmp.ne.s32.totalorder %s87, %s90
    %p96 = scmp.eq.s32.totalorder %s9, 0
    %p97 = por %p95, %p96
    %p98 = scmp.ne.s32.totalorder %s87, %s90
    %p99 = scmp.eq.s32.totalorder %s14, 1
    %p100 = por %p98, %p99
    %p101 = scmp.ne.s32.totalorder %s90, %s91
    %p102 = scmp.eq.s32.totalorder %s14, 0
    %p103 = por %p101, %p102
    %p104 = scmp.ne.s32.totalorder %s90, %s91
    %p105 = scmp.eq.s32.totalorder %s15, 1
    %p106 = por %p104, %p105
    %p108 = scmp.ne.s32.totalorder %s91, %s107
    %p109 = scmp.eq.s32.totalorder %s15, 0
    %p110 = por %p108, %p109
    %p111 = scmp.le.s32.totalorder 1, %s9
    %p112 = scmp.lt.s32.totalorder %s9, 3
    %p113 = pnand %p111, %p112
    %p114 = pneg %p113
    // Predicated region
    $region9: #{residual_forward.1} parent=5 // pred_check
      _
    $region10: #{residual_forward.1} parent=5 // pred_check_branch
      %116 = sbr.rel (%p113) target = $region12
    $region11: #{residual_forward.1} parent=5 // pred_region
      %s117 = ssub.s32 %s9, 1
      // Predicated region
      $region13: #{residual_forward.1} parent=11 // pred_check
        %p118 = pneg %p56
      $region14: #{residual_forward.1} parent=11 // pred_check_branch
        %120 = sbr.rel (%p118) target = $region16
      $region15: #{residual_forward.1} parent=11 // pred_region
        _
      $region16: #{residual_forward.1} parent=11 // pred_fallthru
        _
      // Predicated region
      $region17: #{residual_forward.1} parent=11 // pred_check
        %p121 = pneg %p77
      $region18: #{residual_forward.1} parent=11 // pred_check_branch
        %123 = sbr.rel (%p121) target = $region20
      $region19: #{residual_forward.1} parent=11 // pred_region
        _
      $region20: #{residual_forward.1} parent=11 // pred_fallthru
        _
    $region12: #{residual_forward.1} parent=5 // pred_fallthru
      _
    %p124 = scmp.lt.s32.totalorder %s9, 2
    // Predicated region
    $region21: #{residual_forward.1} parent=5 // pred_check
      %p125 = pneg %p124
    $region22: #{residual_forward.1} parent=5 // pred_check_branch
      %127 = sbr.rel (%p125) target = $region24
    $region23: #{residual_forward.1} parent=5 // pred_region
      // Predicated region
      $region25: #{residual_forward.1} parent=23 // pred_check
        %p128 = pneg %p29
      $region26: #{residual_forward.1} parent=23 // pred_check_branch
        %130 = sbr.rel (%p128) target = $region28
      $region27: #{residual_forward.1} parent=23 // pred_region
        %p131 = scmp.lt.s32.totalorder %s9, 1
        %s132 = scalar_select %p131, %s9, 1
        %s133 = smul.addr %s132, 32
        %s134 = smul.addr %s133, 4
        %s135 = scalar_lea.vmem %s0, %s134
      $region28: #{residual_forward.1} parent=23 // pred_fallthru
        _
    $region24: #{residual_forward.1} parent=5 // pred_fallthru
      _
    %p136 = scmp.le.s32.totalorder 1, %s9
    %p137 = scmp.lt.s32.totalorder %s9, 3
    %p138 = pnand %p136, %p137
    %p139 = pneg %p138
    // Predicated region
    $region29: #{residual_forward.1} parent=5 // pred_check
      _
    $region30: #{residual_forward.1} parent=5 // pred_check_branch
      %141 = sbr.rel (%p138) target = $region32
    $region31: #{residual_forward.1} parent=5 // pred_region
      %s142 = ssub.s32 %s9, 1
      %p143 = scmp.lt.s32.totalorder %s14, 1
      %s144 = scalar_select %p143, %s14, 1
      %s145 = smul.addr %s144, 32
      %s146 = smul.addr %s145, 4
      %s147 = scalar_lea.vmem %s0, %s146
      %p148 = pneg %p35
      %p149 = pneg %p32
      %p150 = pneg %p56
      %p151 = pneg %p53
      %p152 = pneg %p77
      %p153 = pneg %p74
      %p154 = pneg %p103
      %p155 = pneg %p100
      %s156 = smul.u32 32, %s14
      %p157 = scmp.lt.s32.totalorder %s156, 63
      %s158 = scalar_select %p157, %s156, 63
      %s159 = smul.addr %s158, 4
      %s160 = scalar_lea.vmem %s3, %s159
      %p161 = scmp.lt.s32.totalorder %s14, 1
      %s162 = scalar_select %p161, %s14, 1
      %s163 = smul.addr %s162, 32
      %s164 = smul.addr %s163, 4
      %s165 = scalar_lea.vmem %s0, %s164
      %s166 = smul.u32 32, %s14
      %p167 = scmp.lt.s32.totalorder %s166, 63
      %s168 = scalar_select %p167, %s166, 63
      %s169 = smul.addr %s168, 4
      %s170 = scalar_lea.vmem %s3, %s169
      %s171 = smul.u32 32, %s14
      %vm173 = vcmask 27648
      %174 = vst.msk [vmem:[#allocation2] sm:$0xf] %vm173, 0
      %175 = vst.msk [vmem:[#allocation2 + $0x4] sm:$0xf] %vm173, 0
      %vm176 = vcmask 24576
      %177 = vst.msk [vmem:[#allocation2 + $0x8] sm:$0x1] %vm176, 0
      %178 = vst.msk [vmem:[#allocation2 + $0xc] sm:$0xf] %vm173, 0
      %179 = vst.msk [vmem:[#allocation2 + $0x10] sm:$0xf] %vm173, 0
      %180 = vst.msk [vmem:[#allocation2 + $0x14] sm:$0x1] %vm176, 0
      %181 = vst.msk [vmem:[#allocation2 + $0x18] sm:$0xf] %vm173, 0
      %182 = vst.msk [vmem:[#allocation2 + $0x1c] sm:$0xf] %vm173, 0
      %183 = vst.msk [vmem:[#allocation2 + $0x20] sm:$0x1] %vm176, 0
      %184 = vst.msk [vmem:[#allocation2 + $0x24] sm:$0xf] %vm173, 0
      %185 = vst.msk [vmem:[#allocation2 + $0x28] sm:$0xf] %vm173, 0
      %186 = vst.msk [vmem:[#allocation2 + $0x2c] sm:$0x1] %vm176, 0
      %187 = vst.msk [vmem:[#allocation2 + $0x30] sm:$0xf] %vm173, 0
      %188 = vst.msk [vmem:[#allocation2 + $0x34] sm:$0xf] %vm173, 0
      %189 = vst.msk [vmem:[#allocation2 + $0x38] sm:$0x1] %vm176, 0
      %190 = vst.msk [vmem:[#allocation2 + $0x3c] sm:$0xf] %vm173, 0
      %191 = vst.msk [vmem:[#allocation2 + $0x40] sm:$0xf] %vm173, 0
      %192 = vst.msk [vmem:[#allocation2 + $0x44] sm:$0x1] %vm176, 0
      %193 = vst.msk [vmem:[#allocation2 + $0x48] sm:$0xf] %vm173, 0
      %194 = vst.msk [vmem:[#allocation2 + $0x4c] sm:$0xf] %vm173, 0
      %195 = vst.msk [vmem:[#allocation2 + $0x50] sm:$0x1] %vm176, 0
      %196 = vst.msk [vmem:[#allocation2 + $0x54] sm:$0xf] %vm173, 0
      %197 = vst.msk [vmem:[#allocation2 + $0x58] sm:$0xf] %vm173, 0
      %198 = vst.msk [vmem:[#allocation2 + $0x5c] sm:$0x1] %vm176, 0
      %199 = vst.msk [vmem:[#allocation2 + $0x60] sm:$0xf] %vm173, 0
      %200 = vst.msk [vmem:[#allocation2 + $0x64] sm:$0xf] %vm173, 0
      %201 = vst.msk [vmem:[#allocation2 + $0x68] sm:$0x1] %vm176, 0
      %202 = vst.msk [vmem:[#allocation2 + $0x6c] sm:$0xf] %vm173, 0
      %203 = vst.msk [vmem:[#allocation2 + $0x70] sm:$0xf] %vm173, 0
      %204 = vst.msk [vmem:[#allocation2 + $0x74] sm:$0x1] %vm176, 0
      %205 = vst.msk [vmem:[#allocation2 + $0x78] sm:$0xf] %vm173, 0
      %206 = vst.msk [vmem:[#allocation2 + $0x7c] sm:$0xf] %vm173, 0
      %207 = vst.msk [vmem:[#allocation2 + $0x80] sm:$0x1] %vm176, 0
      %208 = vst.msk [vmem:[#allocation2 + $0x84] sm:$0xf] %vm173, 0
      %209 = vst.msk [vmem:[#allocation2 + $0x88] sm:$0xf] %vm173, 0
      %210 = vst.msk [vmem:[#allocation2 + $0x8c] sm:$0x1] %vm176, 0
      %211 = vst.msk [vmem:[#allocation2 + $0x90] sm:$0xf] %vm173, 0
      %212 = vst.msk [vmem:[#allocation2 + $0x94] sm:$0xf] %vm173, 0
      %213 = vst.msk [vmem:[#allocation2 + $0x98] sm:$0x1] %vm176, 0
      %214 = vst.msk [vmem:[#allocation2 + $0x9c] sm:$0xf] %vm173, 0
      %215 = vst.msk [vmem:[#allocation2 + $0xa0] sm:$0xf] %vm173, 0
      %216 = vst.msk [vmem:[#allocation2 + $0xa4] sm:$0x1] %vm176, 0
      %217 = vst.msk [vmem:[#allocation2 + $0xa8] sm:$0xf] %vm173, 0
      %218 = vst.msk [vmem:[#allocation2 + $0xac] sm:$0xf] %vm173, 0
      %219 = vst.msk [vmem:[#allocation2 + $0xb0] sm:$0x1] %vm176, 0
      %220 = vst.msk [vmem:[#allocation2 + $0xb4] sm:$0xf] %vm173, 0
      %221 = vst.msk [vmem:[#allocation2 + $0xb8] sm:$0xf] %vm173, 0
      %222 = vst.msk [vmem:[#allocation2 + $0xbc] sm:$0x1] %vm176, 0
      %223 = vst.msk [vmem:[#allocation2 + $0xc0] sm:$0xf] %vm173, 0
      %224 = vst.msk [vmem:[#allocation2 + $0xc4] sm:$0xf] %vm173, 0
      %225 = vst.msk [vmem:[#allocation2 + $0xc8] sm:$0x1] %vm176, 0
      %226 = vst.msk [vmem:[#allocation2 + $0xcc] sm:$0xf] %vm173, 0
      %227 = vst.msk [vmem:[#allocation2 + $0xd0] sm:$0xf] %vm173, 0
      %228 = vst.msk [vmem:[#allocation2 + $0xd4] sm:$0x1] %vm176, 0
      %v229 = vld [vmem:[%s165] sm:$0xf]
      %v230 = vld [vmem:[%s165 + $0x4] sm:$0xf]
      %v231 = vld [vmem:[%s165 + $0x8] sm:$0xf]
      %v232 = vld [vmem:[%s165 + $0xc] sm:$0xf]
      %v233 = vld [vmem:[%s165 + $0x10] sm:$0xf]
      %v234 = vld [vmem:[%s165 + $0x14] sm:$0xf]
      %v235 = vld [vmem:[%s165 + $0x18] sm:$0xf]
      %v236 = vld [vmem:[%s165 + $0x1c] sm:$0xf]
      %v237 = vld [vmem:[%s165 + $0x20] sm:$0xf]
      %v238 = vld [vmem:[%s165 + $0x24] sm:$0xf]
      %v239 = vld [vmem:[%s165 + $0x28] sm:$0xf]
      %v240 = vld [vmem:[%s165 + $0x2c] sm:$0xf]
      %v241 = vld [vmem:[%s165 + $0x30] sm:$0xf]
      %v242 = vld [vmem:[%s165 + $0x34] sm:$0xf]
      %v243 = vld [vmem:[%s165 + $0x38] sm:$0xf]
      %v244 = vld [vmem:[%s165 + $0x3c] sm:$0xf]
      %v245 = vld [vmem:[%s165 + $0x40] sm:$0xf]
      %v246 = vld [vmem:[%s165 + $0x44] sm:$0xf]
      %v247 = vld [vmem:[%s165 + $0x48] sm:$0xf]
      %v248 = vld [vmem:[%s165 + $0x4c] sm:$0xf]
      %v249 = vld [vmem:[%s165 + $0x50] sm:$0xf]
      %v250 = vld [vmem:[%s165 + $0x54] sm:$0xf]
      %v251 = vld [vmem:[%s165 + $0x58] sm:$0xf]
      %v252 = vld [vmem:[%s165 + $0x5c] sm:$0xf]
      %v253 = vld [vmem:[%s165 + $0x60] sm:$0xf]
      %v254 = vld [vmem:[%s165 + $0x64] sm:$0xf]
      %v255 = vld [vmem:[%s165 + $0x68] sm:$0xf]
      %v256 = vld [vmem:[%s165 + $0x6c] sm:$0xf]
      %v257 = vld [vmem:[%s165 + $0x70] sm:$0xf]
      %v258 = vld [vmem:[%s165 + $0x74] sm:$0xf]
      %v259 = vld [vmem:[%s165 + $0x78] sm:$0xf]
      %v260 = vld [vmem:[%s165 + $0x7c] sm:$0xf]
      %vm261 = vsmask.f32 256
      %vm262 = vsmask.f32 4368
      %vm263 = vmor %vm261, %vm262
      %v265 = vshrl.u32 %v229, 16
      %v267 = vrot.slane %v265, 7
      %v268 = vshll.u32 %v229, 16
      %v270 = vor.u32 %v267, %v268
      %v271 = vrot.slane %v267, 4
      %v273 = vshrl.u32 %v230, 16
      %v275 = vrot.slane %v273, 7
      %v276 = vshll.u32 %v230, 16
      %v278 = vor.u32 %v275, %v276
      %v279 = vsel %vm263, %v271, %v278
      %v280 = vrot.slane %v275, 4
      %v282 = vshrl.u32 %v231, 16
      %v284 = vrot.slane %v282, 7
      %v285 = vshll.u32 %v231, 16
      %v287 = vor.u32 %v284, %v285
      %v288 = vrot.slane %v284, 4
      %v290 = vshrl.u32 %v232, 16
      %v292 = vrot.slane %v290, 7
      %v293 = vshll.u32 %v232, 16
      %v295 = vor.u32 %v292, %v293
      %v296 = vsel %vm263, %v288, %v295
      %v297 = vrot.slane %v292, 4
      %v299 = vshrl.u32 %v233, 16
      %v301 = vrot.slane %v299, 7
      %v302 = vshll.u32 %v233, 16
      %v304 = vor.u32 %v301, %v302
      %v305 = vrot.slane %v301, 4
      %v307 = vshrl.u32 %v234, 16
      %v309 = vrot.slane %v307, 7
      %v310 = vshll.u32 %v234, 16
      %v312 = vor.u32 %v309, %v310
      %v313 = vsel %vm263, %v305, %v312
      %v314 = vrot.slane %v309, 4
      %v316 = vshrl.u32 %v235, 16
      %v318 = vrot.slane %v316, 7
      %v319 = vshll.u32 %v235, 16
      %v321 = vor.u32 %v318, %v319
      %v322 = vrot.slane %v318, 4
      %v324 = vshrl.u32 %v236, 16
      %v326 = vrot.slane %v324, 7
      %v327 = vshll.u32 %v236, 16
      %v329 = vor.u32 %v326, %v327
      %v330 = vsel %vm263, %v322, %v329
      %v331 = vrot.slane %v326, 4
      %v333 = vshrl.u32 %v237, 16
      %v335 = vrot.slane %v333, 7
      %v336 = vshll.u32 %v237, 16
      %v338 = vor.u32 %v335, %v336
      %v339 = vrot.slane %v335, 4
      %v341 = vshrl.u32 %v238, 16
      %v343 = vrot.slane %v341, 7
      %v344 = vshll.u32 %v238, 16
      %v346 = vor.u32 %v343, %v344
      %v347 = vsel %vm263, %v339, %v346
      %v348 = vrot.slane %v343, 4
      %v350 = vshrl.u32 %v239, 16
      %v352 = vrot.slane %v350, 7
      %v353 = vshll.u32 %v239, 16
      %v355 = vor.u32 %v352, %v353
      %v356 = vrot.slane %v352, 4
      %v358 = vshrl.u32 %v240, 16
      %v360 = vrot.slane %v358, 7
      %v361 = vshll.u32 %v240, 16
      %v363 = vor.u32 %v360, %v361
      %v364 = vsel %vm263, %v356, %v363
      %v365 = vrot.slane %v360, 4
      %v367 = vshrl.u32 %v241, 16
      %v369 = vrot.slane %v367, 7
      %v370 = vshll.u32 %v241, 16
      %v372 = vor.u32 %v369, %v370
      %v373 = vrot.slane %v369, 4
      %v375 = vshrl.u32 %v242, 16
      %v377 = vrot.slane %v375, 7
      %v378 = vshll.u32 %v242, 16
      %v380 = vor.u32 %v377, %v378
      %v381 = vsel %vm263, %v373, %v380
      %v382 = vrot.slane %v377, 4
      %v384 = vshrl.u32 %v243, 16
      %v386 = vrot.slane %v384, 7
      %v387 = vshll.u32 %v243, 16
      %v389 = vor.u32 %v386, %v387
      %v390 = vrot.slane %v386, 4
      %v392 = vshrl.u32 %v244, 16
      %v394 = vrot.slane %v392, 7
      %v395 = vshll.u32 %v244, 16
      %v397 = vor.u32 %v394, %v395
      %v398 = vsel %vm263, %v390, %v397
      %v399 = vrot.slane %v394, 4
      %v401 = vshrl.u32 %v245, 16
      %v403 = vrot.slane %v401, 7
      %v404 = vshll.u32 %v245, 16
      %v406 = vor.u32 %v403, %v404
      %v407 = vrot.slane %v403, 4
      %v409 = vshrl.u32 %v246, 16
      %v411 = vrot.slane %v409, 7
      %v412 = vshll.u32 %v246, 16
      %v414 = vor.u32 %v411, %v412
      %v415 = vsel %vm263, %v407, %v414
      %v416 = vrot.slane %v411, 4
      %v418 = vshrl.u32 %v247, 16
      %v420 = vrot.slane %v418, 7
      %v421 = vshll.u32 %v247, 16
      %v423 = vor.u32 %v420, %v421
      %v424 = vrot.slane %v420, 4
      %v426 = vshrl.u32 %v248, 16
      %v428 = vrot.slane %v426, 7
      %v429 = vshll.u32 %v248, 16
      %v431 = vor.u32 %v428, %v429
      %v432 = vsel %vm263, %v424, %v431
      %v433 = vrot.slane %v428, 4
      %v435 = vshrl.u32 %v249, 16
      %v437 = vrot.slane %v435, 7
      %v438 = vshll.u32 %v249, 16
      %v440 = vor.u32 %v437, %v438
      %v441 = vrot.slane %v437, 4
      %v443 = vshrl.u32 %v250, 16
      %v445 = vrot.slane %v443, 7
      %v446 = vshll.u32 %v250, 16
      %v448 = vor.u32 %v445, %v446
      %v449 = vsel %vm263, %v441, %v448
      %v450 = vrot.slane %v445, 4
      %v452 = vshrl.u32 %v251, 16
      %v454 = vrot.slane %v452, 7
      %v455 = vshll.u32 %v251, 16
      %v457 = vor.u32 %v454, %v455
      %v458 = vrot.slane %v454, 4
      %v460 = vshrl.u32 %v252, 16
      %v462 = vrot.slane %v460, 7
      %v463 = vshll.u32 %v252, 16
      %v465 = vor.u32 %v462, %v463
      %v466 = vsel %vm263, %v458, %v465
      %v467 = vrot.slane %v462, 4
      %v469 = vshrl.u32 %v253, 16
      %v471 = vrot.slane %v469, 7
      %v472 = vshll.u32 %v253, 16
      %v474 = vor.u32 %v471, %v472
      %v475 = vrot.slane %v471, 4
      %v477 = vshrl.u32 %v254, 16
      %v479 = vrot.slane %v477, 7
      %v480 = vshll.u32 %v254, 16
      %v482 = vor.u32 %v479, %v480
      %v483 = vsel %vm263, %v475, %v482
      %v484 = vrot.slane %v479, 4
      %v486 = vshrl.u32 %v255, 16
      %v488 = vrot.slane %v486, 7
      %v489 = vshll.u32 %v255, 16
      %v491 = vor.u32 %v488, %v489
      %v492 = vrot.slane %v488, 4
      %v494 = vshrl.u32 %v256, 16
      %v496 = vrot.slane %v494, 7
      %v497 = vshll.u32 %v256, 16
      %v499 = vor.u32 %v496, %v497
      %v500 = vsel %vm263, %v492, %v499
      %v501 = vrot.slane %v496, 4
      %v503 = vshrl.u32 %v257, 16
      %v505 = vrot.slane %v503, 7
      %v506 = vshll.u32 %v257, 16
      %v508 = vor.u32 %v505, %v506
      %v509 = vrot.slane %v505, 4
      %v511 = vshrl.u32 %v258, 16
      %v513 = vrot.slane %v511, 7
      %v514 = vshll.u32 %v258, 16
      %v516 = vor.u32 %v513, %v514
      %v517 = vsel %vm263, %v509, %v516
      %v518 = vrot.slane %v513, 4
      %v520 = vshrl.u32 %v259, 16
      %v522 = vrot.slane %v520, 7
      %v523 = vshll.u32 %v259, 16
      %v525 = vor.u32 %v522, %v523
      %v526 = vrot.slane %v522, 4
      %v528 = vshrl.u32 %v260, 16
      %v530 = vrot.slane %v528, 7
      %v531 = vshll.u32 %v260, 16
      %v533 = vor.u32 %v530, %v531
      %v534 = vsel %vm263, %v526, %v533
      %v535 = vrot.slane %v530, 4
      %s584 = scalar_lea.vmem [#allocation2], 12
      %vm585 = vcmask 27648
      %vm586 = vsmask.f32 7938
      %vm587 = vmand %vm585, %vm586
      %v588 = vld [vmem:[%s584] sm:$0xf]
      %v589 = vsel %vm587, %v270, %v588
      %590 = vst [vmem:[%s584] sm:$0xf] %v589
      %591 = vst.msk [vmem:[%s584 + $0x4] sm:$0xf] %vm173, %v279
      %vm592 = vcmask 24576
      %vm593 = vmand %vm592, %vm261
      %v594 = vld [vmem:[%s584 + $0x8] sm:$0x1]
      %v595 = vsel %vm593, %v280, %v594
      %596 = vst [vmem:[%s584 + $0x8] sm:$0x1] %v595
      %v597 = vld [vmem:[%s584 + $0xc] sm:$0xf]
      %v598 = vsel %vm587, %v287, %v597
      %599 = vst [vmem:[%s584 + $0xc] sm:$0xf] %v598
      %600 = vst.msk [vmem:[%s584 + $0x10] sm:$0xf] %vm173, %v296
      %v601 = vld [vmem:[%s584 + $0x14] sm:$0x1]
      %v602 = vsel %vm593, %v297, %v601
      %603 = vst [vmem:[%s584 + $0x14] sm:$0x1] %v602
      %v604 = vld [vmem:[%s584 + $0x18] sm:$0xf]
      %v605 = vsel %vm587, %v304, %v604
      %606 = vst [vmem:[%s584 + $0x18] sm:$0xf] %v605
      %607 = vst.msk [vmem:[%s584 + $0x1c] sm:$0xf] %vm173, %v313
      %v608 = vld [vmem:[%s584 + $0x20] sm:$0x1]
      %v609 = vsel %vm593, %v314, %v608
      %610 = vst [vmem:[%s584 + $0x20] sm:$0x1] %v609
      %v611 = vld [vmem:[%s584 + $0x24] sm:$0xf]
      %v612 = vsel %vm587, %v321, %v611
      %613 = vst [vmem:[%s584 + $0x24] sm:$0xf] %v612
      %614 = vst.msk [vmem:[%s584 + $0x28] sm:$0xf] %vm173, %v330
      %v615 = vld [vmem:[%s584 + $0x2c] sm:$0x1]
      %v616 = vsel %vm593, %v331, %v615
      %617 = vst [vmem:[%s584 + $0x2c] sm:$0x1] %v616
      %v618 = vld [vmem:[%s584 + $0x30] sm:$0xf]
      %v619 = vsel %vm587, %v338, %v618
      %620 = vst [vmem:[%s584 + $0x30] sm:$0xf] %v619
      %621 = vst.msk [vmem:[%s584 + $0x34] sm:$0xf] %vm173, %v347
      %v622 = vld [vmem:[%s584 + $0x38] sm:$0x1]
      %v623 = vsel %vm593, %v348, %v622
      %624 = vst [vmem:[%s584 + $0x38] sm:$0x1] %v623
      %v625 = vld [vmem:[%s584 + $0x3c] sm:$0xf]
      %v626 = vsel %vm587, %v355, %v625
      %627 = vst [vmem:[%s584 + $0x3c] sm:$0xf] %v626
      %628 = vst.msk [vmem:[%s584 + $0x40] sm:$0xf] %vm173, %v364
      %v629 = vld [vmem:[%s584 + $0x44] sm:$0x1]
      %v630 = vsel %vm593, %v365, %v629
      %631 = vst [vmem:[%s584 + $0x44] sm:$0x1] %v630
      %v632 = vld [vmem:[%s584 + $0x48] sm:$0xf]
      %v633 = vsel %vm587, %v372, %v632
      %634 = vst [vmem:[%s584 + $0x48] sm:$0xf] %v633
      %635 = vst.msk [vmem:[%s584 + $0x4c] sm:$0xf] %vm173, %v381
      %v636 = vld [vmem:[%s584 + $0x50] sm:$0x1]
      %v637 = vsel %vm593, %v382, %v636
      %638 = vst [vmem:[%s584 + $0x50] sm:$0x1] %v637
      %v639 = vld [vmem:[%s584 + $0x54] sm:$0xf]
      %v640 = vsel %vm587, %v389, %v639
      %641 = vst [vmem:[%s584 + $0x54] sm:$0xf] %v640
      %642 = vst.msk [vmem:[%s584 + $0x58] sm:$0xf] %vm173, %v398
      %v643 = vld [vmem:[%s584 + $0x5c] sm:$0x1]
      %v644 = vsel %vm593, %v399, %v643
      %645 = vst [vmem:[%s584 + $0x5c] sm:$0x1] %v644
      %v646 = vld [vmem:[%s584 + $0x60] sm:$0xf]
      %v647 = vsel %vm587, %v406, %v646
      %648 = vst [vmem:[%s584 + $0x60] sm:$0xf] %v647
      %649 = vst.msk [vmem:[%s584 + $0x64] sm:$0xf] %vm173, %v415
      %v650 = vld [vmem:[%s584 + $0x68] sm:$0x1]
      %v651 = vsel %vm593, %v416, %v650
      %652 = vst [vmem:[%s584 + $0x68] sm:$0x1] %v651
      %v653 = vld [vmem:[%s584 + $0x6c] sm:$0xf]
      %v654 = vsel %vm587, %v423, %v653
      %655 = vst [vmem:[%s584 + $0x6c] sm:$0xf] %v654
      %656 = vst.msk [vmem:[%s584 + $0x70] sm:$0xf] %vm173, %v432
      %v657 = vld [vmem:[%s584 + $0x74] sm:$0x1]
      %v658 = vsel %vm593, %v433, %v657
      %659 = vst [vmem:[%s584 + $0x74] sm:$0x1] %v658
      %v660 = vld [vmem:[%s584 + $0x78] sm:$0xf]
      %v661 = vsel %vm587, %v440, %v660
      %662 = vst [vmem:[%s584 + $0x78] sm:$0xf] %v661
      %663 = vst.msk [vmem:[%s584 + $0x7c] sm:$0xf] %vm173, %v449
      %v664 = vld [vmem:[%s584 + $0x80] sm:$0x1]
      %v665 = vsel %vm593, %v450, %v664
      %666 = vst [vmem:[%s584 + $0x80] sm:$0x1] %v665
      %v667 = vld [vmem:[%s584 + $0x84] sm:$0xf]
      %v668 = vsel %vm587, %v457, %v667
      %669 = vst [vmem:[%s584 + $0x84] sm:$0xf] %v668
      %670 = vst.msk [vmem:[%s584 + $0x88] sm:$0xf] %vm173, %v466
      %v671 = vld [vmem:[%s584 + $0x8c] sm:$0x1]
      %v672 = vsel %vm593, %v467, %v671
      %673 = vst [vmem:[%s584 + $0x8c] sm:$0x1] %v672
      %v674 = vld [vmem:[%s584 + $0x90] sm:$0xf]
      %v675 = vsel %vm587, %v474, %v674
      %676 = vst [vmem:[%s584 + $0x90] sm:$0xf] %v675
      %677 = vst.msk [vmem:[%s584 + $0x94] sm:$0xf] %vm173, %v483
      %v678 = vld [vmem:[%s584 + $0x98] sm:$0x1]
      %v679 = vsel %vm593, %v484, %v678
      %680 = vst [vmem:[%s584 + $0x98] sm:$0x1] %v679
      %v681 = vld [vmem:[%s584 + $0x9c] sm:$0xf]
      %v682 = vsel %vm587, %v491, %v681
      %683 = vst [vmem:[%s584 + $0x9c] sm:$0xf] %v682
      %684 = vst.msk [vmem:[%s584 + $0xa0] sm:$0xf] %vm173, %v500
      %v685 = vld [vmem:[%s584 + $0xa4] sm:$0x1]
      %v686 = vsel %vm593, %v501, %v685
      %687 = vst [vmem:[%s584 + $0xa4] sm:$0x1] %v686
      %v688 = vld [vmem:[%s584 + $0xa8] sm:$0xf]
      %v689 = vsel %vm587, %v508, %v688
      %690 = vst [vmem:[%s584 + $0xa8] sm:$0xf] %v689
      %691 = vst.msk [vmem:[%s584 + $0xac] sm:$0xf] %vm173, %v517
      %v692 = vld [vmem:[%s584 + $0xb0] sm:$0x1]
      %v693 = vsel %vm593, %v518, %v692
      %694 = vst [vmem:[%s584 + $0xb0] sm:$0x1] %v693
      %v695 = vld [vmem:[%s584 + $0xb4] sm:$0xf]
      %v696 = vsel %vm587, %v525, %v695
      %697 = vst [vmem:[%s584 + $0xb4] sm:$0xf] %v696
      %698 = vst.msk [vmem:[%s584 + $0xb8] sm:$0xf] %vm173, %v534
      %v699 = vld [vmem:[%s584 + $0xbc] sm:$0x1]
      %v700 = vsel %vm593, %v535, %v699
      %701 = vst [vmem:[%s584 + $0xbc] sm:$0x1] %v700
      %v702 = vld [vmem:[#allocation2] sm:$0xf]
      %v703 = vld [vmem:[#allocation2 + $0x4] sm:$0xf]
      %v704 = vld [vmem:[#allocation2 + $0xc] sm:$0xf]
      %v705 = vld [vmem:[#allocation2 + $0x10] sm:$0xf]
      %v706 = vld [vmem:[#allocation2 + $0x18] sm:$0xf]
      %v707 = vld [vmem:[#allocation2 + $0x1c] sm:$0xf]
      %v708 = vld [vmem:[#allocation2 + $0x24] sm:$0xf]
      %v709 = vld [vmem:[#allocation2 + $0x28] sm:$0xf]
      %v710 = vld [vmem:[#allocation2 + $0x30] sm:$0xf]
      %v711 = vld [vmem:[#allocation2 + $0x34] sm:$0xf]
      %v712 = vld [vmem:[#allocation2 + $0x3c] sm:$0xf]
      %v713 = vld [vmem:[#allocation2 + $0x40] sm:$0xf]
      %v714 = vld [vmem:[#allocation2 + $0x48] sm:$0xf]
      %v715 = vld [vmem:[#allocation2 + $0x4c] sm:$0xf]
      %v716 = vld [vmem:[#allocation2 + $0x54] sm:$0xf]
      %v717 = vld [vmem:[#allocation2 + $0x58] sm:$0xf]
      %v718 = vld [vmem:[#allocation2 + $0x60] sm:$0xf]
      %v719 = vld [vmem:[#allocation2 + $0x64] sm:$0xf]
      %v720 = vld [vmem:[#allocation2 + $0x6c] sm:$0xf]
      %v721 = vld [vmem:[#allocation2 + $0x70] sm:$0xf]
      %v722 = vld [vmem:[#allocation2 + $0x78] sm:$0xf]
      %v723 = vld [vmem:[#allocation2 + $0x7c] sm:$0xf]
      %v724 = vld [vmem:[#allocation2 + $0x84] sm:$0xf]
      %v725 = vld [vmem:[#allocation2 + $0x88] sm:$0xf]
      %v726 = vld [vmem:[#allocation2 + $0x90] sm:$0xf]
      %v727 = vld [vmem:[#allocation2 + $0x94] sm:$0xf]
      %v728 = vld [vmem:[#allocation2 + $0x9c] sm:$0xf]
      %v729 = vld [vmem:[#allocation2 + $0xa0] sm:$0xf]
      %v730 = vld [vmem:[#allocation2 + $0xa8] sm:$0xf]
      %v731 = vld [vmem:[#allocation2 + $0xac] sm:$0xf]
      %v732 = vld [vmem:[#allocation2 + $0xb4] sm:$0xf]
      %v733 = vld [vmem:[#allocation2 + $0xb8] sm:$0xf]
      %v734 = vld [vmem:[#allocation2 + $0x8] sm:$0x1]
      %v735 = vld [vmem:[#allocation2 + $0x14] sm:$0x1]
      %v736 = vld [vmem:[#allocation2 + $0x20] sm:$0x1]
      %v737 = vld [vmem:[#allocation2 + $0x2c] sm:$0x1]
      %v738 = vld [vmem:[#allocation2 + $0x38] sm:$0x1]
      %v739 = vld [vmem:[#allocation2 + $0x44] sm:$0x1]
      %v740 = vld [vmem:[#allocation2 + $0x50] sm:$0x1]
      %v741 = vld [vmem:[#allocation2 + $0x5c] sm:$0x1]
      %v742 = vld [vmem:[#allocation2 + $0x68] sm:$0x1]
      %v743 = vld [vmem:[#allocation2 + $0x74] sm:$0x1]
      %v744 = vld [vmem:[#allocation2 + $0x80] sm:$0x1]
      %v745 = vld [vmem:[#allocation2 + $0x8c] sm:$0x1]
      %v746 = vld [vmem:[#allocation2 + $0x98] sm:$0x1]
      %v747 = vld [vmem:[#allocation2 + $0xa4] sm:$0x1]
      %v748 = vld [vmem:[#allocation2 + $0xb0] sm:$0x1]
      %v749 = vld [vmem:[#allocation2 + $0xbc] sm:$0x1]
      %v750 = vld [vmem:[#allocation2] sm:$0xe]
      %v751 = vld [vmem:[#allocation2 + $0xc] sm:$0xe]
      %v752 = vld [vmem:[#allocation2 + $0x18] sm:$0xe]
      %v753 = vld [vmem:[#allocation2 + $0x24] sm:$0xe]
      %v754 = vld [vmem:[#allocation2 + $0x30] sm:$0xe]
      %v755 = vld [vmem:[#allocation2 + $0x3c] sm:$0xe]
      %v756 = vld [vmem:[#allocation2 + $0x48] sm:$0xe]
      %v757 = vld [vmem:[#allocation2 + $0x54] sm:$0xe]
      %v758 = vld [vmem:[#allocation2 + $0x60] sm:$0xe]
      %v759 = vld [vmem:[#allocation2 + $0x6c] sm:$0xe]
      %v760 = vld [vmem:[#allocation2 + $0x78] sm:$0xe]
      %v761 = vld [vmem:[#allocation2 + $0x84] sm:$0xe]
      %v762 = vld [vmem:[#allocation2 + $0x90] sm:$0xe]
      %v763 = vld [vmem:[#allocation2 + $0x9c] sm:$0xe]
      %v764 = vld [vmem:[#allocation2 + $0xa8] sm:$0xe]
      %v765 = vld [vmem:[#allocation2 + $0xb4] sm:$0xe]
      %v798 = vunpack.c.l.b16 %v702
      %v799 = vunpack.c.l.b16 %v703
      %v800 = vunpack.c.l.b16 %v704
      %v801 = vunpack.c.l.b16 %v705
      %v802 = vunpack.c.l.b16 %v706
      %v803 = vunpack.c.l.b16 %v707
      %v804 = vunpack.c.l.b16 %v708
      %v805 = vunpack.c.l.b16 %v709
      %v806 = vunpack.c.l.b16 %v710
      %v807 = vunpack.c.l.b16 %v711
      %v808 = vunpack.c.l.b16 %v712
      %v809 = vunpack.c.l.b16 %v713
      %v810 = vunpack.c.l.b16 %v714
      %v811 = vunpack.c.l.b16 %v715
      %v812 = vunpack.c.l.b16 %v716
      %v813 = vunpack.c.l.b16 %v717
      %v814 = vunpack.c.l.b16 %v718
      %v815 = vunpack.c.l.b16 %v719
      %v816 = vunpack.c.l.b16 %v720
      %v817 = vunpack.c.l.b16 %v721
      %v818 = vunpack.c.l.b16 %v722
      %v819 = vunpack.c.l.b16 %v723
      %v820 = vunpack.c.l.b16 %v724
      %v821 = vunpack.c.l.b16 %v725
      %v822 = vunpack.c.l.b16 %v726
      %v823 = vunpack.c.l.b16 %v727
      %v824 = vunpack.c.l.b16 %v728
      %v825 = vunpack.c.l.b16 %v729
      %v826 = vunpack.c.l.b16 %v730
      %v827 = vunpack.c.l.b16 %v731
      %v828 = vunpack.c.l.b16 %v732
      %v829 = vunpack.c.l.b16 %v733
      %v830 = vpack.c.b16 %v799, %v798
      %v831 = vpack.c.b16 %v801, %v800
      %v832 = vpack.c.b16 %v803, %v802
      %v833 = vpack.c.b16 %v805, %v804
      %v834 = vpack.c.b16 %v807, %v806
      %v835 = vpack.c.b16 %v809, %v808
      %v836 = vpack.c.b16 %v811, %v810
      %v837 = vpack.c.b16 %v813, %v812
      %v838 = vpack.c.b16 %v815, %v814
      %v839 = vpack.c.b16 %v817, %v816
      %v840 = vpack.c.b16 %v819, %v818
      %v841 = vpack.c.b16 %v821, %v820
      %v842 = vpack.c.b16 %v823, %v822
      %v843 = vpack.c.b16 %v825, %v824
      %v844 = vpack.c.b16 %v827, %v826
      %v845 = vpack.c.b16 %v829, %v828
      %v862 = vunpack.c.l.b16 %v734
      %v863 = vunpack.c.l.b16 %v735
      %v864 = vunpack.c.l.b16 %v736
      %v865 = vunpack.c.l.b16 %v737
      %v866 = vunpack.c.l.b16 %v738
      %v867 = vunpack.c.l.b16 %v739
      %v868 = vunpack.c.l.b16 %v740
      %v869 = vunpack.c.l.b16 %v741
      %v870 = vunpack.c.l.b16 %v742
      %v871 = vunpack.c.l.b16 %v743
      %v872 = vunpack.c.l.b16 %v744
      %v873 = vunpack.c.l.b16 %v745
      %v874 = vunpack.c.l.b16 %v746
      %v875 = vunpack.c.l.b16 %v747
      %v876 = vunpack.c.l.b16 %v748
      %v877 = vunpack.c.l.b16 %v749
      %v878 = vpack.c.b16 %v862, %v862
      %v879 = vpack.c.b16 %v863, %v863
      %v880 = vpack.c.b16 %v864, %v864
      %v881 = vpack.c.b16 %v865, %v865
      %v882 = vpack.c.b16 %v866, %v866
      %v883 = vpack.c.b16 %v867, %v867
      %v884 = vpack.c.b16 %v868, %v868
      %v885 = vpack.c.b16 %v869, %v869
      %v886 = vpack.c.b16 %v870, %v870
      %v887 = vpack.c.b16 %v871, %v871
      %v888 = vpack.c.b16 %v872, %v872
      %v889 = vpack.c.b16 %v873, %v873
      %v890 = vpack.c.b16 %v874, %v874
      %v891 = vpack.c.b16 %v875, %v875
      %v892 = vpack.c.b16 %v876, %v876
      %v893 = vpack.c.b16 %v877, %v877
      %vm894 = vsmask.f32 7424
      %v896 = vshrl.u32 %v830, 16
      %v898 = vshll.u32 %v830, 16
      %v900 = vrot.slane %v898, 1
      %v901 = vor.u32 %v896, %v900
      %v903 = vshll.u32 %v878, 16
      %v905 = vrot.slane %v903, 1
      %v906 = vsel %vm894, %v901, %v905
      %v908 = vshrl.u32 %v831, 16
      %v910 = vshll.u32 %v831, 16
      %v912 = vrot.slane %v910, 1
      %v913 = vor.u32 %v908, %v912
      %v915 = vshll.u32 %v879, 16
      %v917 = vrot.slane %v915, 1
      %v918 = vsel %vm894, %v913, %v917
      %v920 = vshrl.u32 %v832, 16
      %v922 = vshll.u32 %v832, 16
      %v924 = vrot.slane %v922, 1
      %v925 = vor.u32 %v920, %v924
      %v927 = vshll.u32 %v880, 16
      %v929 = vrot.slane %v927, 1
      %v930 = vsel %vm894, %v925, %v929
      %v932 = vshrl.u32 %v833, 16
      %v934 = vshll.u32 %v833, 16
      %v936 = vrot.slane %v934, 1
      %v937 = vor.u32 %v932, %v936
      %v939 = vshll.u32 %v881, 16
      %v941 = vrot.slane %v939, 1
      %v942 = vsel %vm894, %v937, %v941
      %v944 = vshrl.u32 %v834, 16
      %v946 = vshll.u32 %v834, 16
      %v948 = vrot.slane %v946, 1
      %v949 = vor.u32 %v944, %v948
      %v951 = vshll.u32 %v882, 16
      %v953 = vrot.slane %v951, 1
      %v954 = vsel %vm894, %v949, %v953
      %v956 = vshrl.u32 %v835, 16
      %v958 = vshll.u32 %v835, 16
      %v960 = vrot.slane %v958, 1
      %v961 = vor.u32 %v956, %v960
      %v963 = vshll.u32 %v883, 16
      %v965 = vrot.slane %v963, 1
      %v966 = vsel %vm894, %v961, %v965
      %v968 = vshrl.u32 %v836, 16
      %v970 = vshll.u32 %v836, 16
      %v972 = vrot.slane %v970, 1
      %v973 = vor.u32 %v968, %v972
      %v975 = vshll.u32 %v884, 16
      %v977 = vrot.slane %v975, 1
      %v978 = vsel %vm894, %v973, %v977
      %v980 = vshrl.u32 %v837, 16
      %v982 = vshll.u32 %v837, 16
      %v984 = vrot.slane %v982, 1
      %v985 = vor.u32 %v980, %v984
      %v987 = vshll.u32 %v885, 16
      %v989 = vrot.slane %v987, 1
      %v990 = vsel %vm894, %v985, %v989
      %v992 = vshrl.u32 %v838, 16
      %v994 = vshll.u32 %v838, 16
      %v996 = vrot.slane %v994, 1
      %v997 = vor.u32 %v992, %v996
      %v999 = vshll.u32 %v886, 16
      %v1001 = vrot.slane %v999, 1
      %v1002 = vsel %vm894, %v997, %v1001
      %v1004 = vshrl.u32 %v839, 16
      %v1006 = vshll.u32 %v839, 16
      %v1008 = vrot.slane %v1006, 1
      %v1009 = vor.u32 %v1004, %v1008
      %v1011 = vshll.u32 %v887, 16
      %v1013 = vrot.slane %v1011, 1
      %v1014 = vsel %vm894, %v1009, %v1013
      %v1016 = vshrl.u32 %v840, 16
      %v1018 = vshll.u32 %v840, 16
      %v1020 = vrot.slane %v1018, 1
      %v1021 = vor.u32 %v1016, %v1020
      %v1023 = vshll.u32 %v888, 16
      %v1025 = vrot.slane %v1023, 1
      %v1026 = vsel %vm894, %v1021, %v1025
      %v1028 = vshrl.u32 %v841, 16
      %v1030 = vshll.u32 %v841, 16
      %v1032 = vrot.slane %v1030, 1
      %v1033 = vor.u32 %v1028, %v1032
      %v1035 = vshll.u32 %v889, 16
      %v1037 = vrot.slane %v1035, 1
      %v1038 = vsel %vm894, %v1033, %v1037
      %v1040 = vshrl.u32 %v842, 16
      %v1042 = vshll.u32 %v842, 16
      %v1044 = vrot.slane %v1042, 1
      %v1045 = vor.u32 %v1040, %v1044
      %v1047 = vshll.u32 %v890, 16
      %v1049 = vrot.slane %v1047, 1
      %v1050 = vsel %vm894, %v1045, %v1049
      %v1052 = vshrl.u32 %v843, 16
      %v1054 = vshll.u32 %v843, 16
      %v1056 = vrot.slane %v1054, 1
      %v1057 = vor.u32 %v1052, %v1056
      %v1059 = vshll.u32 %v891, 16
      %v1061 = vrot.slane %v1059, 1
      %v1062 = vsel %vm894, %v1057, %v1061
      %v1064 = vshrl.u32 %v844, 16
      %v1066 = vshll.u32 %v844, 16
      %v1068 = vrot.slane %v1066, 1
      %v1069 = vor.u32 %v1064, %v1068
      %v1071 = vshll.u32 %v892, 16
      %v1073 = vrot.slane %v1071, 1
      %v1074 = vsel %vm894, %v1069, %v1073
      %v1076 = vshrl.u32 %v845, 16
      %v1078 = vshll.u32 %v845, 16
      %v1080 = vrot.slane %v1078, 1
      %v1081 = vor.u32 %v1076, %v1080
      %v1083 = vshll.u32 %v893, 16
      %v1085 = vrot.slane %v1083, 1
      %v1086 = vsel %vm894, %v1081, %v1085
      %1087 = vrot.lane.b32.xlu0 %v906, 4
      %v1088 = vpop.permute.xlu0 %1087
      %1089 = vrot.lane.b32.xlu0 %v918, 4
      %v1090 = vpop.permute.xlu0 %1089
      %1091 = vrot.lane.b32.xlu0 %v930, 4
      %v1092 = vpop.permute.xlu0 %1091
      %1093 = vrot.lane.b32.xlu0 %v942, 4
      %v1094 = vpop.permute.xlu0 %1093
      %1095 = vrot.lane.b32.xlu0 %v954, 4
      %v1096 = vpop.permute.xlu0 %1095
      %1097 = vrot.lane.b32.xlu0 %v966, 4
      %v1098 = vpop.permute.xlu0 %1097
      %1099 = vrot.lane.b32.xlu0 %v978, 4
      %v1100 = vpop.permute.xlu0 %1099
      %1101 = vrot.lane.b32.xlu0 %v990, 4
      %v1102 = vpop.permute.xlu0 %1101
      %1103 = vrot.lane.b32.xlu0 %v1002, 4
      %v1104 = vpop.permute.xlu0 %1103
      %1105 = vrot.lane.b32.xlu0 %v1014, 4
      %v1106 = vpop.permute.xlu0 %1105
      %1107 = vrot.lane.b32.xlu0 %v1026, 4
      %v1108 = vpop.permute.xlu0 %1107
      %1109 = vrot.lane.b32.xlu0 %v1038, 4
      %v1110 = vpop.permute.xlu0 %1109
      %1111 = vrot.lane.b32.xlu0 %v1050, 4
      %v1112 = vpop.permute.xlu0 %1111
      %1113 = vrot.lane.b32.xlu0 %v1062, 4
      %v1114 = vpop.permute.xlu0 %1113
      %1115 = vrot.lane.b32.xlu0 %v1074, 4
      %v1116 = vpop.permute.xlu0 %1115
      %1117 = vrot.lane.b32.xlu0 %v1086, 4
      %v1118 = vpop.permute.xlu0 %1117
      %v1135 = vunpack.c.l.b16 %v750
      %v1136 = vunpack.c.l.b16 %v751
      %v1137 = vunpack.c.l.b16 %v752
      %v1138 = vunpack.c.l.b16 %v753
      %v1139 = vunpack.c.l.b16 %v754
      %v1140 = vunpack.c.l.b16 %v755
      %v1141 = vunpack.c.l.b16 %v756
      %v1142 = vunpack.c.l.b16 %v757
      %v1143 = vunpack.c.l.b16 %v758
      %v1144 = vunpack.c.l.b16 %v759
      %v1145 = vunpack.c.l.b16 %v760
      %v1146 = vunpack.c.l.b16 %v761
      %v1147 = vunpack.c.l.b16 %v762
      %v1148 = vunpack.c.l.b16 %v763
      %v1149 = vunpack.c.l.b16 %v764
      %v1150 = vunpack.c.l.b16 %v765
      %v1151 = vpack.c.b16 %v799, %v1135
      %v1152 = vpack.c.b16 %v801, %v1136
      %v1153 = vpack.c.b16 %v803, %v1137
      %v1154 = vpack.c.b16 %v805, %v1138
      %v1155 = vpack.c.b16 %v807, %v1139
      %v1156 = vpack.c.b16 %v809, %v1140
      %v1157 = vpack.c.b16 %v811, %v1141
      %v1158 = vpack.c.b16 %v813, %v1142
      %v1159 = vpack.c.b16 %v815, %v1143
      %v1160 = vpack.c.b16 %v817, %v1144
      %v1161 = vpack.c.b16 %v819, %v1145
      %v1162 = vpack.c.b16 %v821, %v1146
      %v1163 = vpack.c.b16 %v823, %v1147
      %v1164 = vpack.c.b16 %v825, %v1148
      %v1165 = vpack.c.b16 %v827, %v1149
      %v1166 = vpack.c.b16 %v829, %v1150
      %vm1167 = vcmask 1046528
      %v1168 = vrot.slane %v1151, 1
      %v1169 = vrot.slane %v878, 1
      %v1170 = vsel %vm1167, %v1168, %v1169
      %v1171 = vrot.slane %v1152, 1
      %v1172 = vrot.slane %v879, 1
      %v1173 = vsel %vm1167, %v1171, %v1172
      %v1174 = vrot.slane %v1153, 1
      %v1175 = vrot.slane %v880, 1
      %v1176 = vsel %vm1167, %v1174, %v1175
      %v1177 = vrot.slane %v1154, 1
      %v1178 = vrot.slane %v881, 1
      %v1179 = vsel %vm1167, %v1177, %v1178
      %v1180 = vrot.slane %v1155, 1
      %v1181 = vrot.slane %v882, 1
      %v1182 = vsel %vm1167, %v1180, %v1181
      %v1183 = vrot.slane %v1156, 1
      %v1184 = vrot.slane %v883, 1
      %v1185 = vsel %vm1167, %v1183, %v1184
      %v1186 = vrot.slane %v1157, 1
      %v1187 = vrot.slane %v884, 1
      %v1188 = vsel %vm1167, %v1186, %v1187
      %v1189 = vrot.slane %v1158, 1
      %v1190 = vrot.slane %v885, 1
      %v1191 = vsel %vm1167, %v1189, %v1190
      %v1192 = vrot.slane %v1159, 1
      %v1193 = vrot.slane %v886, 1
      %v1194 = vsel %vm1167, %v1192, %v1193
      %v1195 = vrot.slane %v1160, 1
      %v1196 = vrot.slane %v887, 1
      %v1197 = vsel %vm1167, %v1195, %v1196
      %v1198 = vrot.slane %v1161, 1
      %v1199 = vrot.slane %v888, 1
      %v1200 = vsel %vm1167, %v1198, %v1199
      %v1201 = vrot.slane %v1162, 1
      %v1202 = vrot.slane %v889, 1
      %v1203 = vsel %vm1167, %v1201, %v1202
      %v1204 = vrot.slane %v1163, 1
      %v1205 = vrot.slane %v890, 1
      %v1206 = vsel %vm1167, %v1204, %v1205
      %v1207 = vrot.slane %v1164, 1
      %v1208 = vrot.slane %v891, 1
      %v1209 = vsel %vm1167, %v1207, %v1208
      %v1210 = vrot.slane %v1165, 1
      %v1211 = vrot.slane %v892, 1
      %v1212 = vsel %vm1167, %v1210, %v1211
      %v1213 = vrot.slane %v1166, 1
      %v1214 = vrot.slane %v893, 1
      %v1215 = vsel %vm1167, %v1213, %v1214
      %1216 = vrot.lane.b32.xlu0 %v1170, 8
      %v1217 = vpop.permute.xlu0 %1216
      %1218 = vrot.lane.b32.xlu0 %v1173, 8
      %v1219 = vpop.permute.xlu0 %1218
      %1220 = vrot.lane.b32.xlu0 %v1176, 8
      %v1221 = vpop.permute.xlu0 %1220
      %1222 = vrot.lane.b32.xlu0 %v1179, 8
      %v1223 = vpop.permute.xlu0 %1222
      %1224 = vrot.lane.b32.xlu0 %v1182, 8
      %v1225 = vpop.permute.xlu0 %1224
      %1226 = vrot.lane.b32.xlu0 %v1185, 8
      %v1227 = vpop.permute.xlu0 %1226
      %1228 = vrot.lane.b32.xlu0 %v1188, 8
      %v1229 = vpop.permute.xlu0 %1228
      %1230 = vrot.lane.b32.xlu0 %v1191, 8
      %v1231 = vpop.permute.xlu0 %1230
      %1232 = vrot.lane.b32.xlu0 %v1194, 8
      %v1233 = vpop.permute.xlu0 %1232
      %1234 = vrot.lane.b32.xlu0 %v1197, 8
      %v1235 = vpop.permute.xlu0 %1234
      %1236 = vrot.lane.b32.xlu0 %v1200, 8
      %v1237 = vpop.permute.xlu0 %1236
      %1238 = vrot.lane.b32.xlu0 %v1203, 8
      %v1239 = vpop.permute.xlu0 %1238
      %1240 = vrot.lane.b32.xlu0 %v1206, 8
      %v1241 = vpop.permute.xlu0 %1240
      %1242 = vrot.lane.b32.xlu0 %v1209, 8
      %v1243 = vpop.permute.xlu0 %1242
      %1244 = vrot.lane.b32.xlu0 %v1212, 8
      %v1245 = vpop.permute.xlu0 %1244
      %1246 = vrot.lane.b32.xlu0 %v1215, 8
      %v1247 = vpop.permute.xlu0 %1246
      %vm1248 = vcmask 31744
      %v1250 = vsel %vm1248, %v830, %v1088
      %v1252 = vsel %vm1248, %v831, %v1090
      %v1254 = vsel %vm1248, %v832, %v1092
      %v1256 = vsel %vm1248, %v833, %v1094
      %v1258 = vsel %vm1248, %v834, %v1096
      %v1260 = vsel %vm1248, %v835, %v1098
      %v1262 = vsel %vm1248, %v836, %v1100
      %v1264 = vsel %vm1248, %v837, %v1102
      %v1266 = vsel %vm1248, %v838, %v1104
      %v1268 = vsel %vm1248, %v839, %v1106
      %v1270 = vsel %vm1248, %v840, %v1108
      %v1272 = vsel %vm1248, %v841, %v1110
      %v1274 = vsel %vm1248, %v842, %v1112
      %v1276 = vsel %vm1248, %v843, %v1114
      %v1278 = vsel %vm1248, %v844, %v1116
      %v1280 = vsel %vm1248, %v845, %v1118
      %vm1281 = vcmask 64512
      %v1283 = vsel %vm1281, %v1250, %v1217
      %v1285 = vsel %vm1281, %v1252, %v1219
      %v1287 = vsel %vm1281, %v1254, %v1221
      %v1289 = vsel %vm1281, %v1256, %v1223
      %v1291 = vsel %vm1281, %v1258, %v1225
      %v1293 = vsel %vm1281, %v1260, %v1227
      %v1295 = vsel %vm1281, %v1262, %v1229
      %v1297 = vsel %vm1281, %v1264, %v1231
      %v1299 = vsel %vm1281, %v1266, %v1233
      %v1301 = vsel %vm1281, %v1268, %v1235
      %v1303 = vsel %vm1281, %v1270, %v1237
      %v1305 = vsel %vm1281, %v1272, %v1239
      %v1307 = vsel %vm1281, %v1274, %v1241
      %v1309 = vsel %vm1281, %v1276, %v1243
      %v1311 = vsel %vm1281, %v1278, %v1245
      %v1313 = vsel %vm1281, %v1280, %v1247
      %v1314 = vld [vmem:[%s1] sm:$0xf]
      %v1315 = vld [vmem:[%s1 + $0x4] sm:$0x3]
      %v1318 = vunpack.c.l.b16 %v1314
      %v1319 = vunpack.c.l.b16 %v1315
      %v1320 = vpack.c.b16 %v1319, %v1318
      %vm1321 = vcmask 97280
      %v1322 = vsel %vm1321, %v1283, 0
      %v1324 = vsel %vm1321, %v1285, 0
      %v1326 = vsel %vm1321, %v1287, 0
      %v1328 = vsel %vm1321, %v1289, 0
      %v1330 = vsel %vm1321, %v1291, 0
      %v1332 = vsel %vm1321, %v1293, 0
      %v1334 = vsel %vm1321, %v1295, 0
      %v1336 = vsel %vm1321, %v1297, 0
      %v1338 = vsel %vm1321, %v1299, 0
      %v1340 = vsel %vm1321, %v1301, 0
      %v1342 = vsel %vm1321, %v1303, 0
      %v1344 = vsel %vm1321, %v1305, 0
      %v1346 = vsel %vm1321, %v1307, 0
      %v1348 = vsel %vm1321, %v1309, 0
      %v1350 = vsel %vm1321, %v1311, 0
      %v1352 = vsel %vm1321, %v1313, 0
      %vm1354 = vcmask 1045504
      %v1356 = vsel %vm1354, %v1320, 0
      %1358 = vmatprep.subr.bf16.mxu0 0
      %1359 = vmatpush1.bf16.msra.mxu0 0
      %1360 = vmatprep.subr.bf16.mxu0 0
      %1361 = vmatpush1.bf16.msra.mxu0 0
      %1362 = vmatprep.subr.bf16.mxu0 0
      %1363 = vmatpush1.bf16.msra.mxu0 0
      %1364 = vmatprep.subr.bf16.mxu0 0
      %1365 = vmatpush1.bf16.msra.mxu0 0
      %1366 = vmatprep.subr.bf16.mxu0 0
      %1367 = vmatpush1.bf16.msra.mxu0 0
      %1368 = vmatprep.subr.bf16.mxu0 0
      %1369 = vmatpush1.bf16.msra.mxu0 0
      %1370 = vmatprep.subr.bf16.mxu0 0
      %1371 = vmatpush1.bf16.msra.mxu0 0
      %1372 = vmatprep.subr.bf16.mxu0 0
      %1373 = vmatpush1.bf16.msra.mxu0 %v1356
      %1374 = vmatprep.subr.bf16.mxu0 0
      %1375 = vmatpush2.bf16.msra.mxu0 0
      %1376 = vmatprep.subr.bf16.mxu0 0
      %1377 = vmatpush2.bf16.msra.mxu0 0
      %1378 = vmatprep.subr.bf16.mxu0 0
      %1379 = vmatpush2.bf16.msra.mxu0 0
      %1380 = vmatprep.subr.bf16.mxu0 0
      %1381 = vmatpush2.bf16.msra.mxu0 0
      %1382 = vmatprep.subr.bf16.mxu0 0
      %1383 = vmatpush2.bf16.msra.mxu0 0
      %1384 = vmatprep.subr.bf16.mxu0 0
      %1385 = vmatpush2.bf16.msra.mxu0 0
      %1386 = vmatprep.subr.bf16.mxu0 0
      %1387 = vmatpush2.bf16.msra.mxu0 0
      %1388 = vmatprep.subr.bf16.mxu0 0
      %1389 = vmatpush2.bf16.msra.mxu0 0
      %1390 = vmatprep.mubr.bf16.mxu0 0
      %1391 = vmatmul.mubr.bf16.gmra.mxu0 %v1322
      %v1392 = vpop.f32.mrf.mxu0
      %v1393 = vadd.f32 0.0, %v1392
      %v1394 = vpop.f32.mrf.mxu0
      %v1395 = vpop.f32.mrf.mxu0
      %v1396 = vadd.f32 0.0, %v1395
      %v1397 = vpop.f32.mrf.mxu0
      %1398 = vmatprep.mubr.bf16.mxu0 0
      %1399 = vmatmul.mubr.bf16.gmra.mxu0 %v1324
      %v1400 = vpop.f32.mrf.mxu0
      %v1401 = vadd.f32 0.0, %v1400
      %v1402 = vpop.f32.mrf.mxu0
      %v1403 = vpop.f32.mrf.mxu0
      %v1404 = vadd.f32 0.0, %v1403
      %v1405 = vpop.f32.mrf.mxu0
      %1406 = vmatprep.mubr.bf16.mxu0 0
      %1407 = vmatmul.mubr.bf16.gmra.mxu0 %v1326
      %v1408 = vpop.f32.mrf.mxu0
      %v1409 = vadd.f32 0.0, %v1408
      %v1410 = vpop.f32.mrf.mxu0
      %v1411 = vpop.f32.mrf.mxu0
      %v1412 = vadd.f32 0.0, %v1411
      %v1413 = vpop.f32.mrf.mxu0
      %1414 = vmatprep.mubr.bf16.mxu0 0
      %1415 = vmatmul.mubr.bf16.gmra.mxu0 %v1328
      %v1416 = vpop.f32.mrf.mxu0
      %v1417 = vadd.f32 0.0, %v1416
      %v1418 = vpop.f32.mrf.mxu0
      %v1419 = vpop.f32.mrf.mxu0
      %v1420 = vadd.f32 0.0, %v1419
      %v1421 = vpop.f32.mrf.mxu0
      %1422 = vmatprep.mubr.bf16.mxu0 0
      %1423 = vmatmul.mubr.bf16.gmra.mxu0 %v1330
      %v1424 = vpop.f32.mrf.mxu0
      %v1425 = vadd.f32 0.0, %v1424
      %v1426 = vpop.f32.mrf.mxu0
      %v1427 = vpop.f32.mrf.mxu0
      %v1428 = vadd.f32 0.0, %v1427
      %v1429 = vpop.f32.mrf.mxu0
      %1430 = vmatprep.mubr.bf16.mxu0 0
      %1431 = vmatmul.mubr.bf16.gmra.mxu0 %v1332
      %v1432 = vpop.f32.mrf.mxu0
      %v1433 = vadd.f32 0.0, %v1432
      %v1434 = vpop.f32.mrf.mxu0
      %v1435 = vpop.f32.mrf.mxu0
      %v1436 = vadd.f32 0.0, %v1435
      %v1437 = vpop.f32.mrf.mxu0
      %1438 = vmatprep.mubr.bf16.mxu0 0
      %1439 = vmatmul.mubr.bf16.gmra.mxu0 %v1334
      %v1440 = vpop.f32.mrf.mxu0
      %v1441 = vadd.f32 0.0, %v1440
      %v1442 = vpop.f32.mrf.mxu0
      %v1443 = vpop.f32.mrf.mxu0
      %v1444 = vadd.f32 0.0, %v1443
      %v1445 = vpop.f32.mrf.mxu0
      %1446 = vmatprep.mubr.bf16.mxu0 0
      %1447 = vmatmul.mubr.bf16.gmra.mxu0 %v1336
      %v1448 = vpop.f32.mrf.mxu0
      %v1449 = vadd.f32 0.0, %v1448
      %v1450 = vpop.f32.mrf.mxu0
      %v1451 = vpop.f32.mrf.mxu0
      %v1452 = vadd.f32 0.0, %v1451
      %v1453 = vpop.f32.mrf.mxu0
      %1454 = vmatprep.mubr.bf16.mxu0 0
      %1455 = vmatmul.mubr.bf16.gmra.mxu0 %v1338
      %v1456 = vpop.f32.mrf.mxu0
      %v1457 = vadd.f32 0.0, %v1456
      %v1458 = vpop.f32.mrf.mxu0
      %v1459 = vpop.f32.mrf.mxu0
      %v1460 = vadd.f32 0.0, %v1459
      %v1461 = vpop.f32.mrf.mxu0
      %1462 = vmatprep.mubr.bf16.mxu0 0
      %1463 = vmatmul.mubr.bf16.gmra.mxu0 %v1340
      %v1464 = vpop.f32.mrf.mxu0
      %v1465 = vadd.f32 0.0, %v1464
      %v1466 = vpop.f32.mrf.mxu0
      %v1467 = vpop.f32.mrf.mxu0
      %v1468 = vadd.f32 0.0, %v1467
      %v1469 = vpop.f32.mrf.mxu0
      %1470 = vmatprep.mubr.bf16.mxu0 0
      %1471 = vmatmul.mubr.bf16.gmra.mxu0 %v1342
      %v1472 = vpop.f32.mrf.mxu0
      %v1473 = vadd.f32 0.0, %v1472
      %v1474 = vpop.f32.mrf.mxu0
      %v1475 = vpop.f32.mrf.mxu0
      %v1476 = vadd.f32 0.0, %v1475
      %v1477 = vpop.f32.mrf.mxu0
      %1478 = vmatprep.mubr.bf16.mxu0 0
      %1479 = vmatmul.mubr.bf16.gmra.mxu0 %v1344
      %v1480 = vpop.f32.mrf.mxu0
      %v1481 = vadd.f32 0.0, %v1480
      %v1482 = vpop.f32.mrf.mxu0
      %v1483 = vpop.f32.mrf.mxu0
      %v1484 = vadd.f32 0.0, %v1483
      %v1485 = vpop.f32.mrf.mxu0
      %1486 = vmatprep.mubr.bf16.mxu0 0
      %1487 = vmatmul.mubr.bf16.gmra.mxu0 %v1346
      %v1488 = vpop.f32.mrf.mxu0
      %v1489 = vadd.f32 0.0, %v1488
      %v1490 = vpop.f32.mrf.mxu0
      %v1491 = vpop.f32.mrf.mxu0
      %v1492 = vadd.f32 0.0, %v1491
      %v1493 = vpop.f32.mrf.mxu0
      %1494 = vmatprep.mubr.bf16.mxu0 0
      %1495 = vmatmul.mubr.bf16.gmra.mxu0 %v1348
      %v1496 = vpop.f32.mrf.mxu0
      %v1497 = vadd.f32 0.0, %v1496
      %v1498 = vpop.f32.mrf.mxu0
      %v1499 = vpop.f32.mrf.mxu0
      %v1500 = vadd.f32 0.0, %v1499
      %v1501 = vpop.f32.mrf.mxu0
      %1502 = vmatprep.mubr.bf16.mxu0 0
      %1503 = vmatmul.mubr.bf16.gmra.mxu0 %v1350
      %v1504 = vpop.f32.mrf.mxu0
      %v1505 = vadd.f32 0.0, %v1504
      %v1506 = vpop.f32.mrf.mxu0
      %v1507 = vpop.f32.mrf.mxu0
      %v1508 = vadd.f32 0.0, %v1507
      %v1509 = vpop.f32.mrf.mxu0
      %1510 = vmatprep.mubr.bf16.mxu0 0
      %1511 = vmatmul.mubr.bf16.gmra.mxu0 %v1352
      %v1512 = vpop.f32.mrf.mxu0
      %v1513 = vadd.f32 0.0, %v1512
      %v1514 = vpop.f32.mrf.mxu0
      %v1515 = vpop.f32.mrf.mxu0
      %v1516 = vadd.f32 0.0, %v1515
      %v1517 = vpop.f32.mrf.mxu0
      %1518 = vdwg.mxu0
      %1519 = vst.msk [vmem:[#allocation3] sm:$0xff] %vm1248, %v1393
      %1520 = vst.msk [vmem:[#allocation3 + $0x8] sm:$0xff] %vm1248, %v1396
      %1521 = vst.msk [vmem:[#allocation3 + $0x10] sm:$0xff] %vm1248, %v1401
      %1522 = vst.msk [vmem:[#allocation3 + $0x18] sm:$0xff] %vm1248, %v1404
      %1523 = vst.msk [vmem:[#allocation3 + $0x20] sm:$0xff] %vm1248, %v1409
      %1524 = vst.msk [vmem:[#allocation3 + $0x28] sm:$0xff] %vm1248, %v1412
      %1525 = vst.msk [vmem:[#allocation3 + $0x30] sm:$0xff] %vm1248, %v1417
      %1526 = vst.msk [vmem:[#allocation3 + $0x38] sm:$0xff] %vm1248, %v1420
      %1527 = vst.msk [vmem:[#allocation3 + $0x40] sm:$0xff] %vm1248, %v1425
      %1528 = vst.msk [vmem:[#allocation3 + $0x48] sm:$0xff] %vm1248, %v1428
      %1529 = vst.msk [vmem:[#allocation3 + $0x50] sm:$0xff] %vm1248, %v1433
      %1530 = vst.msk [vmem:[#allocation3 + $0x58] sm:$0xff] %vm1248, %v1436
      %1531 = vst.msk [vmem:[#allocation3 + $0x60] sm:$0xff] %vm1248, %v1441
      %1532 = vst.msk [vmem:[#allocation3 + $0x68] sm:$0xff] %vm1248, %v1444
      %1533 = vst.msk [vmem:[#allocation3 + $0x70] sm:$0xff] %vm1248, %v1449
      %1534 = vst.msk [vmem:[#allocation3 + $0x78] sm:$0xff] %vm1248, %v1452
      %1535 = vst.msk [vmem:[#allocation3 + $0x80] sm:$0xff] %vm1248, %v1457
      %1536 = vst.msk [vmem:[#allocation3 + $0x88] sm:$0xff] %vm1248, %v1460
      %1537 = vst.msk [vmem:[#allocation3 + $0x90] sm:$0xff] %vm1248, %v1465
      %1538 = vst.msk [vmem:[#allocation3 + $0x98] sm:$0xff] %vm1248, %v1468
      %1539 = vst.msk [vmem:[#allocation3 + $0xa0] sm:$0xff] %vm1248, %v1473
      %1540 = vst.msk [vmem:[#allocation3 + $0xa8] sm:$0xff] %vm1248, %v1476
      %1541 = vst.msk [vmem:[#allocation3 + $0xb0] sm:$0xff] %vm1248, %v1481
      %1542 = vst.msk [vmem:[#allocation3 + $0xb8] sm:$0xff] %vm1248, %v1484
      %1543 = vst.msk [vmem:[#allocation3 + $0xc0] sm:$0xff] %vm1248, %v1489
      %1544 = vst.msk [vmem:[#allocation3 + $0xc8] sm:$0xff] %vm1248, %v1492
      %1545 = vst.msk [vmem:[#allocation3 + $0xd0] sm:$0xff] %vm1248, %v1497
      %1546 = vst.msk [vmem:[#allocation3 + $0xd8] sm:$0xff] %vm1248, %v1500
      %1547 = vst.msk [vmem:[#allocation3 + $0xe0] sm:$0xff] %vm1248, %v1505
      %1548 = vst.msk [vmem:[#allocation3 + $0xe8] sm:$0xff] %vm1248, %v1508
      %1549 = vst.msk [vmem:[#allocation3 + $0xf0] sm:$0xff] %vm1248, %v1513
      %1550 = vst.msk [vmem:[#allocation3 + $0xf8] sm:$0xff] %vm1248, %v1516
      %v1551 = vld [vmem:[%s584] sm:$0xf]
      %v1552 = vld [vmem:[%s584 + $0x4] sm:$0xf]
      %v1553 = vld [vmem:[%s584 + $0xc] sm:$0xf]
      %v1554 = vld [vmem:[%s584 + $0x10] sm:$0xf]
      %v1555 = vld [vmem:[%s584 + $0x18] sm:$0xf]
      %v1556 = vld [vmem:[%s584 + $0x1c] sm:$0xf]
      %v1557 = vld [vmem:[%s584 + $0x24] sm:$0xf]
      %v1558 = vld [vmem:[%s584 + $0x28] sm:$0xf]
      %v1559 = vld [vmem:[%s584 + $0x30] sm:$0xf]
      %v1560 = vld [vmem:[%s584 + $0x34] sm:$0xf]
      %v1561 = vld [vmem:[%s584 + $0x3c] sm:$0xf]
      %v1562 = vld [vmem:[%s584 + $0x40] sm:$0xf]
      %v1563 = vld [vmem:[%s584 + $0x48] sm:$0xf]
      %v1564 = vld [vmem:[%s584 + $0x4c] sm:$0xf]
      %v1565 = vld [vmem:[%s584 + $0x54] sm:$0xf]
      %v1566 = vld [vmem:[%s584 + $0x58] sm:$0xf]
      %v1567 = vld [vmem:[%s584 + $0x60] sm:$0xf]
      %v1568 = vld [vmem:[%s584 + $0x64] sm:$0xf]
      %v1569 = vld [vmem:[%s584 + $0x6c] sm:$0xf]
      %v1570 = vld [vmem:[%s584 + $0x70] sm:$0xf]
      %v1571 = vld [vmem:[%s584 + $0x78] sm:$0xf]
      %v1572 = vld [vmem:[%s584 + $0x7c] sm:$0xf]
      %v1573 = vld [vmem:[%s584 + $0x84] sm:$0xf]
      %v1574 = vld [vmem:[%s584 + $0x88] sm:$0xf]
      %v1575 = vld [vmem:[%s584 + $0x90] sm:$0xf]
      %v1576 = vld [vmem:[%s584 + $0x94] sm:$0xf]
      %v1577 = vld [vmem:[%s584 + $0x9c] sm:$0xf]
      %v1578 = vld [vmem:[%s584 + $0xa0] sm:$0xf]
      %v1579 = vld [vmem:[%s584 + $0xa8] sm:$0xf]
      %v1580 = vld [vmem:[%s584 + $0xac] sm:$0xf]
      %v1581 = vld [vmem:[%s584 + $0xb4] sm:$0xf]
      %v1582 = vld [vmem:[%s584 + $0xb8] sm:$0xf]
      %v1583 = vld [vmem:[%s584 + $0x8] sm:$0x1]
      %v1584 = vld [vmem:[%s584 + $0x14] sm:$0x1]
      %v1585 = vld [vmem:[%s584 + $0x20] sm:$0x1]
      %v1586 = vld [vmem:[%s584 + $0x2c] sm:$0x1]
      %v1587 = vld [vmem:[%s584 + $0x38] sm:$0x1]
      %v1588 = vld [vmem:[%s584 + $0x44] sm:$0x1]
      %v1589 = vld [vmem:[%s584 + $0x50] sm:$0x1]
      %v1590 = vld [vmem:[%s584 + $0x5c] sm:$0x1]
      %v1591 = vld [vmem:[%s584 + $0x68] sm:$0x1]
      %v1592 = vld [vmem:[%s584 + $0x74] sm:$0x1]
      %v1593 = vld [vmem:[%s584 + $0x80] sm:$0x1]
      %v1594 = vld [vmem:[%s584 + $0x8c] sm:$0x1]
      %v1595 = vld [vmem:[%s584 + $0x98] sm:$0x1]
      %v1596 = vld [vmem:[%s584 + $0xa4] sm:$0x1]
      %v1597 = vld [vmem:[%s584 + $0xb0] sm:$0x1]
      %v1598 = vld [vmem:[%s584 + $0xbc] sm:$0x1]
      %v1599 = vld [vmem:[%s584] sm:$0xe]
      %v1600 = vld [vmem:[%s584 + $0xc] sm:$0xe]
      %v1601 = vld [vmem:[%s584 + $0x18] sm:$0xe]
      %v1602 = vld [vmem:[%s584 + $0x24] sm:$0xe]
      %v1603 = vld [vmem:[%s584 + $0x30] sm:$0xe]
      %v1604 = vld [vmem:[%s584 + $0x3c] sm:$0xe]
      %v1605 = vld [vmem:[%s584 + $0x48] sm:$0xe]
      %v1606 = vld [vmem:[%s584 + $0x54] sm:$0xe]
      %v1607 = vld [vmem:[%s584 + $0x60] sm:$0xe]
      %v1608 = vld [vmem:[%s584 + $0x6c] sm:$0xe]
      %v1609 = vld [vmem:[%s584 + $0x78] sm:$0xe]
      %v1610 = vld [vmem:[%s584 + $0x84] sm:$0xe]
      %v1611 = vld [vmem:[%s584 + $0x90] sm:$0xe]
      %v1612 = vld [vmem:[%s584 + $0x9c] sm:$0xe]
      %v1613 = vld [vmem:[%s584 + $0xa8] sm:$0xe]
      %v1614 = vld [vmem:[%s584 + $0xb4] sm:$0xe]
      %v1647 = vunpack.c.l.b16 %v1551
      %v1648 = vunpack.c.l.b16 %v1552
      %v1649 = vunpack.c.l.b16 %v1553
      %v1650 = vunpack.c.l.b16 %v1554
      %v1651 = vunpack.c.l.b16 %v1555
      %v1652 = vunpack.c.l.b16 %v1556
      %v1653 = vunpack.c.l.b16 %v1557
      %v1654 = vunpack.c.l.b16 %v1558
      %v1655 = vunpack.c.l.b16 %v1559
      %v1656 = vunpack.c.l.b16 %v1560
      %v1657 = vunpack.c.l.b16 %v1561
      %v1658 = vunpack.c.l.b16 %v1562
      %v1659 = vunpack.c.l.b16 %v1563
      %v1660 = vunpack.c.l.b16 %v1564
      %v1661 = vunpack.c.l.b16 %v1565
      %v1662 = vunpack.c.l.b16 %v1566
      %v1663 = vunpack.c.l.b16 %v1567
      %v1664 = vunpack.c.l.b16 %v1568
      %v1665 = vunpack.c.l.b16 %v1569
      %v1666 = vunpack.c.l.b16 %v1570
      %v1667 = vunpack.c.l.b16 %v1571
      %v1668 = vunpack.c.l.b16 %v1572
      %v1669 = vunpack.c.l.b16 %v1573
      %v1670 = vunpack.c.l.b16 %v1574
      %v1671 = vunpack.c.l.b16 %v1575
      %v1672 = vunpack.c.l.b16 %v1576
      %v1673 = vunpack.c.l.b16 %v1577
      %v1674 = vunpack.c.l.b16 %v1578
      %v1675 = vunpack.c.l.b16 %v1579
      %v1676 = vunpack.c.l.b16 %v1580
      %v1677 = vunpack.c.l.b16 %v1581
      %v1678 = vunpack.c.l.b16 %v1582
      %v1679 = vpack.c.b16 %v1648, %v1647
      %v1680 = vpack.c.b16 %v1650, %v1649
      %v1681 = vpack.c.b16 %v1652, %v1651
      %v1682 = vpack.c.b16 %v1654, %v1653
      %v1683 = vpack.c.b16 %v1656, %v1655
      %v1684 = vpack.c.b16 %v1658, %v1657
      %v1685 = vpack.c.b16 %v1660, %v1659
      %v1686 = vpack.c.b16 %v1662, %v1661
      %v1687 = vpack.c.b16 %v1664, %v1663
      %v1688 = vpack.c.b16 %v1666, %v1665
      %v1689 = vpack.c.b16 %v1668, %v1667
      %v1690 = vpack.c.b16 %v1670, %v1669
      %v1691 = vpack.c.b16 %v1672, %v1671
      %v1692 = vpack.c.b16 %v1674, %v1673
      %v1693 = vpack.c.b16 %v1676, %v1675
      %v1694 = vpack.c.b16 %v1678, %v1677
      %v1711 = vunpack.c.l.b16 %v1583
      %v1712 = vunpack.c.l.b16 %v1584
      %v1713 = vunpack.c.l.b16 %v1585
      %v1714 = vunpack.c.l.b16 %v1586
      %v1715 = vunpack.c.l.b16 %v1587
      %v1716 = vunpack.c.l.b16 %v1588
      %v1717 = vunpack.c.l.b16 %v1589
      %v1718 = vunpack.c.l.b16 %v1590
      %v1719 = vunpack.c.l.b16 %v1591
      %v1720 = vunpack.c.l.b16 %v1592
      %v1721 = vunpack.c.l.b16 %v1593
      %v1722 = vunpack.c.l.b16 %v1594
      %v1723 = vunpack.c.l.b16 %v1595
      %v1724 = vunpack.c.l.b16 %v1596
      %v1725 = vunpack.c.l.b16 %v1597
      %v1726 = vunpack.c.l.b16 %v1598
      %v1727 = vpack.c.b16 %v1711, %v1711
      %v1728 = vpack.c.b16 %v1712, %v1712
      %v1729 = vpack.c.b16 %v1713, %v1713
      %v1730 = vpack.c.b16 %v1714, %v1714
      %v1731 = vpack.c.b16 %v1715, %v1715
      %v1732 = vpack.c.b16 %v1716, %v1716
      %v1733 = vpack.c.b16 %v1717, %v1717
      %v1734 = vpack.c.b16 %v1718, %v1718
      %v1735 = vpack.c.b16 %v1719, %v1719
      %v1736 = vpack.c.b16 %v1720, %v1720
      %v1737 = vpack.c.b16 %v1721, %v1721
      %v1738 = vpack.c.b16 %v1722, %v1722
      %v1739 = vpack.c.b16 %v1723, %v1723
      %v1740 = vpack.c.b16 %v1724, %v1724
      %v1741 = vpack.c.b16 %v1725, %v1725
      %v1742 = vpack.c.b16 %v1726, %v1726
      %v1744 = vshrl.u32 %v1679, 16
      %v1746 = vshll.u32 %v1679, 16
      %v1748 = vrot.slane %v1746, 1
      %v1749 = vor.u32 %v1744, %v1748
      %v1751 = vshll.u32 %v1727, 16
      %v1753 = vrot.slane %v1751, 1
      %v1754 = vsel %vm894, %v1749, %v1753
      %v1756 = vshrl.u32 %v1680, 16
      %v1758 = vshll.u32 %v1680, 16
      %v1760 = vrot.slane %v1758, 1
      %v1761 = vor.u32 %v1756, %v1760
      %v1763 = vshll.u32 %v1728, 16
      %v1765 = vrot.slane %v1763, 1
      %v1766 = vsel %vm894, %v1761, %v1765
      %v1768 = vshrl.u32 %v1681, 16
      %v1770 = vshll.u32 %v1681, 16
      %v1772 = vrot.slane %v1770, 1
      %v1773 = vor.u32 %v1768, %v1772
      %v1775 = vshll.u32 %v1729, 16
      %v1777 = vrot.slane %v1775, 1
      %v1778 = vsel %vm894, %v1773, %v1777
      %v1780 = vshrl.u32 %v1682, 16
      %v1782 = vshll.u32 %v1682, 16
      %v1784 = vrot.slane %v1782, 1
      %v1785 = vor.u32 %v1780, %v1784
      %v1787 = vshll.u32 %v1730, 16
      %v1789 = vrot.slane %v1787, 1
      %v1790 = vsel %vm894, %v1785, %v1789
      %v1792 = vshrl.u32 %v1683, 16
      %v1794 = vshll.u32 %v1683, 16
      %v1796 = vrot.slane %v1794, 1
      %v1797 = vor.u32 %v1792, %v1796
      %v1799 = vshll.u32 %v1731, 16
      %v1801 = vrot.slane %v1799, 1
      %v1802 = vsel %vm894, %v1797, %v1801
      %v1804 = vshrl.u32 %v1684, 16
      %v1806 = vshll.u32 %v1684, 16
      %v1808 = vrot.slane %v1806, 1
      %v1809 = vor.u32 %v1804, %v1808
      %v1811 = vshll.u32 %v1732, 16
      %v1813 = vrot.slane %v1811, 1
      %v1814 = vsel %vm894, %v1809, %v1813
      %v1816 = vshrl.u32 %v1685, 16
      %v1818 = vshll.u32 %v1685, 16
      %v1820 = vrot.slane %v1818, 1
      %v1821 = vor.u32 %v1816, %v1820
      %v1823 = vshll.u32 %v1733, 16
      %v1825 = vrot.slane %v1823, 1
      %v1826 = vsel %vm894, %v1821, %v1825
      %v1828 = vshrl.u32 %v1686, 16
      %v1830 = vshll.u32 %v1686, 16
      %v1832 = vrot.slane %v1830, 1
      %v1833 = vor.u32 %v1828, %v1832
      %v1835 = vshll.u32 %v1734, 16
      %v1837 = vrot.slane %v1835, 1
      %v1838 = vsel %vm894, %v1833, %v1837
      %v1840 = vshrl.u32 %v1687, 16
      %v1842 = vshll.u32 %v1687, 16
      %v1844 = vrot.slane %v1842, 1
      %v1845 = vor.u32 %v1840, %v1844
      %v1847 = vshll.u32 %v1735, 16
      %v1849 = vrot.slane %v1847, 1
      %v1850 = vsel %vm894, %v1845, %v1849
      %v1852 = vshrl.u32 %v1688, 16
      %v1854 = vshll.u32 %v1688, 16
      %v1856 = vrot.slane %v1854, 1
      %v1857 = vor.u32 %v1852, %v1856
      %v1859 = vshll.u32 %v1736, 16
      %v1861 = vrot.slane %v1859, 1
      %v1862 = vsel %vm894, %v1857, %v1861
      %v1864 = vshrl.u32 %v1689, 16
      %v1866 = vshll.u32 %v1689, 16
      %v1868 = vrot.slane %v1866, 1
      %v1869 = vor.u32 %v1864, %v1868
      %v1871 = vshll.u32 %v1737, 16
      %v1873 = vrot.slane %v1871, 1
      %v1874 = vsel %vm894, %v1869, %v1873
      %v1876 = vshrl.u32 %v1690, 16
      %v1878 = vshll.u32 %v1690, 16
      %v1880 = vrot.slane %v1878, 1
      %v1881 = vor.u32 %v1876, %v1880
      %v1883 = vshll.u32 %v1738, 16
      %v1885 = vrot.slane %v1883, 1
      %v1886 = vsel %vm894, %v1881, %v1885
      %v1888 = vshrl.u32 %v1691, 16
      %v1890 = vshll.u32 %v1691, 16
      %v1892 = vrot.slane %v1890, 1
      %v1893 = vor.u32 %v1888, %v1892
      %v1895 = vshll.u32 %v1739, 16
      %v1897 = vrot.slane %v1895, 1
      %v1898 = vsel %vm894, %v1893, %v1897
      %v1900 = vshrl.u32 %v1692, 16
      %v1902 = vshll.u32 %v1692, 16
      %v1904 = vrot.slane %v1902, 1
      %v1905 = vor.u32 %v1900, %v1904
      %v1907 = vshll.u32 %v1740, 16
      %v1909 = vrot.slane %v1907, 1
      %v1910 = vsel %vm894, %v1905, %v1909
      %v1912 = vshrl.u32 %v1693, 16
      %v1914 = vshll.u32 %v1693, 16
      %v1916 = vrot.slane %v1914, 1
      %v1917 = vor.u32 %v1912, %v1916
      %v1919 = vshll.u32 %v1741, 16
      %v1921 = vrot.slane %v1919, 1
      %v1922 = vsel %vm894, %v1917, %v1921
      %v1924 = vshrl.u32 %v1694, 16
      %v1926 = vshll.u32 %v1694, 16
      %v1928 = vrot.slane %v1926, 1
      %v1929 = vor.u32 %v1924, %v1928
      %v1931 = vshll.u32 %v1742, 16
      %v1933 = vrot.slane %v1931, 1
      %v1934 = vsel %vm894, %v1929, %v1933
      %1935 = vrot.lane.b32.xlu0 %v1754, 4
      %v1936 = vpop.permute.xlu0 %1935
      %1937 = vrot.lane.b32.xlu0 %v1766, 4
      %v1938 = vpop.permute.xlu0 %1937
      %1939 = vrot.lane.b32.xlu0 %v1778, 4
      %v1940 = vpop.permute.xlu0 %1939
      %1941 = vrot.lane.b32.xlu0 %v1790, 4
      %v1942 = vpop.permute.xlu0 %1941
      %1943 = vrot.lane.b32.xlu0 %v1802, 4
      %v1944 = vpop.permute.xlu0 %1943
      %1945 = vrot.lane.b32.xlu0 %v1814, 4
      %v1946 = vpop.permute.xlu0 %1945
      %1947 = vrot.lane.b32.xlu0 %v1826, 4
      %v1948 = vpop.permute.xlu0 %1947
      %1949 = vrot.lane.b32.xlu0 %v1838, 4
      %v1950 = vpop.permute.xlu0 %1949
      %1951 = vrot.lane.b32.xlu0 %v1850, 4
      %v1952 = vpop.permute.xlu0 %1951
      %1953 = vrot.lane.b32.xlu0 %v1862, 4
      %v1954 = vpop.permute.xlu0 %1953
      %1955 = vrot.lane.b32.xlu0 %v1874, 4
      %v1956 = vpop.permute.xlu0 %1955
      %1957 = vrot.lane.b32.xlu0 %v1886, 4
      %v1958 = vpop.permute.xlu0 %1957
      %1959 = vrot.lane.b32.xlu0 %v1898, 4
      %v1960 = vpop.permute.xlu0 %1959
      %1961 = vrot.lane.b32.xlu0 %v1910, 4
      %v1962 = vpop.permute.xlu0 %1961
      %1963 = vrot.lane.b32.xlu0 %v1922, 4
      %v1964 = vpop.permute.xlu0 %1963
      %1965 = vrot.lane.b32.xlu0 %v1934, 4
      %v1966 = vpop.permute.xlu0 %1965
      %v1983 = vunpack.c.l.b16 %v1599
      %v1984 = vunpack.c.l.b16 %v1600
      %v1985 = vunpack.c.l.b16 %v1601
      %v1986 = vunpack.c.l.b16 %v1602
      %v1987 = vunpack.c.l.b16 %v1603
      %v1988 = vunpack.c.l.b16 %v1604
      %v1989 = vunpack.c.l.b16 %v1605
      %v1990 = vunpack.c.l.b16 %v1606
      %v1991 = vunpack.c.l.b16 %v1607
      %v1992 = vunpack.c.l.b16 %v1608
      %v1993 = vunpack.c.l.b16 %v1609
      %v1994 = vunpack.c.l.b16 %v1610
      %v1995 = vunpack.c.l.b16 %v1611
      %v1996 = vunpack.c.l.b16 %v1612
      %v1997 = vunpack.c.l.b16 %v1613
      %v1998 = vunpack.c.l.b16 %v1614
      %v1999 = vpack.c.b16 %v1648, %v1983
      %v2000 = vpack.c.b16 %v1650, %v1984
      %v2001 = vpack.c.b16 %v1652, %v1985
      %v2002 = vpack.c.b16 %v1654, %v1986
      %v2003 = vpack.c.b16 %v1656, %v1987
      %v2004 = vpack.c.b16 %v1658, %v1988
      %v2005 = vpack.c.b16 %v1660, %v1989
      %v2006 = vpack.c.b16 %v1662, %v1990
      %v2007 = vpack.c.b16 %v1664, %v1991
      %v2008 = vpack.c.b16 %v1666, %v1992
      %v2009 = vpack.c.b16 %v1668, %v1993
      %v2010 = vpack.c.b16 %v1670, %v1994
      %v2011 = vpack.c.b16 %v1672, %v1995
      %v2012 = vpack.c.b16 %v1674, %v1996
      %v2013 = vpack.c.b16 %v1676, %v1997
      %v2014 = vpack.c.b16 %v1678, %v1998
      %v2015 = vrot.slane %v1999, 1
      %v2016 = vrot.slane %v1727, 1
      %v2017 = vsel %vm1167, %v2015, %v2016
      %v2018 = vrot.slane %v2000, 1
      %v2019 = vrot.slane %v1728, 1
      %v2020 = vsel %vm1167, %v2018, %v2019
      %v2021 = vrot.slane %v2001, 1
      %v2022 = vrot.slane %v1729, 1
      %v2023 = vsel %vm1167, %v2021, %v2022
      %v2024 = vrot.slane %v2002, 1
      %v2025 = vrot.slane %v1730, 1
      %v2026 = vsel %vm1167, %v2024, %v2025
      %v2027 = vrot.slane %v2003, 1
      %v2028 = vrot.slane %v1731, 1
      %v2029 = vsel %vm1167, %v2027, %v2028
      %v2030 = vrot.slane %v2004, 1
      %v2031 = vrot.slane %v1732, 1
      %v2032 = vsel %vm1167, %v2030, %v2031
      %v2033 = vrot.slane %v2005, 1
      %v2034 = vrot.slane %v1733, 1
      %v2035 = vsel %vm1167, %v2033, %v2034
      %v2036 = vrot.slane %v2006, 1
      %v2037 = vrot.slane %v1734, 1
      %v2038 = vsel %vm1167, %v2036, %v2037
      %v2039 = vrot.slane %v2007, 1
      %v2040 = vrot.slane %v1735, 1
      %v2041 = vsel %vm1167, %v2039, %v2040
      %v2042 = vrot.slane %v2008, 1
      %v2043 = vrot.slane %v1736, 1
      %v2044 = vsel %vm1167, %v2042, %v2043
      %v2045 = vrot.slane %v2009, 1
      %v2046 = vrot.slane %v1737, 1
      %v2047 = vsel %vm1167, %v2045, %v2046
      %v2048 = vrot.slane %v2010, 1
      %v2049 = vrot.slane %v1738, 1
      %v2050 = vsel %vm1167, %v2048, %v2049
      %v2051 = vrot.slane %v2011, 1
      %v2052 = vrot.slane %v1739, 1
      %v2053 = vsel %vm1167, %v2051, %v2052
      %v2054 = vrot.slane %v2012, 1
      %v2055 = vrot.slane %v1740, 1
      %v2056 = vsel %vm1167, %v2054, %v2055
      %v2057 = vrot.slane %v2013, 1
      %v2058 = vrot.slane %v1741, 1
      %v2059 = vsel %vm1167, %v2057, %v2058
      %v2060 = vrot.slane %v2014, 1
      %v2061 = vrot.slane %v1742, 1
      %v2062 = vsel %vm1167, %v2060, %v2061
      %2063 = vrot.lane.b32.xlu0 %v2017, 8
      %v2064 = vpop.permute.xlu0 %2063
      %2065 = vrot.lane.b32.xlu0 %v2020, 8
      %v2066 = vpop.permute.xlu0 %2065
      %2067 = vrot.lane.b32.xlu0 %v2023, 8
      %v2068 = vpop.permute.xlu0 %2067
      %2069 = vrot.lane.b32.xlu0 %v2026, 8
      %v2070 = vpop.permute.xlu0 %2069
      %2071 = vrot.lane.b32.xlu0 %v2029, 8
      %v2072 = vpop.permute.xlu0 %2071
      %2073 = vrot.lane.b32.xlu0 %v2032, 8
      %v2074 = vpop.permute.xlu0 %2073
      %2075 = vrot.lane.b32.xlu0 %v2035, 8
      %v2076 = vpop.permute.xlu0 %2075
      %2077 = vrot.lane.b32.xlu0 %v2038, 8
      %v2078 = vpop.permute.xlu0 %2077
      %2079 = vrot.lane.b32.xlu0 %v2041, 8
      %v2080 = vpop.permute.xlu0 %2079
      %2081 = vrot.lane.b32.xlu0 %v2044, 8
      %v2082 = vpop.permute.xlu0 %2081
      %2083 = vrot.lane.b32.xlu0 %v2047, 8
      %v2084 = vpop.permute.xlu0 %2083
      %2085 = vrot.lane.b32.xlu0 %v2050, 8
      %v2086 = vpop.permute.xlu0 %2085
      %2087 = vrot.lane.b32.xlu0 %v2053, 8
      %v2088 = vpop.permute.xlu0 %2087
      %2089 = vrot.lane.b32.xlu0 %v2056, 8
      %v2090 = vpop.permute.xlu0 %2089
      %2091 = vrot.lane.b32.xlu0 %v2059, 8
      %v2092 = vpop.permute.xlu0 %2091
      %2093 = vrot.lane.b32.xlu0 %v2062, 8
      %v2094 = vpop.permute.xlu0 %2093
      %v2096 = vsel %vm1248, %v1679, %v1936
      %v2098 = vsel %vm1248, %v1680, %v1938
      %v2100 = vsel %vm1248, %v1681, %v1940
      %v2102 = vsel %vm1248, %v1682, %v1942
      %v2104 = vsel %vm1248, %v1683, %v1944
      %v2106 = vsel %vm1248, %v1684, %v1946
      %v2108 = vsel %vm1248, %v1685, %v1948
      %v2110 = vsel %vm1248, %v1686, %v1950
      %v2112 = vsel %vm1248, %v1687, %v1952
      %v2114 = vsel %vm1248, %v1688, %v1954
      %v2116 = vsel %vm1248, %v1689, %v1956
      %v2118 = vsel %vm1248, %v1690, %v1958
      %v2120 = vsel %vm1248, %v1691, %v1960
      %v2122 = vsel %vm1248, %v1692, %v1962
      %v2124 = vsel %vm1248, %v1693, %v1964
      %v2126 = vsel %vm1248, %v1694, %v1966
      %v2128 = vsel %vm1281, %v2096, %v2064
      %v2130 = vsel %vm1281, %v2098, %v2066
      %v2132 = vsel %vm1281, %v2100, %v2068
      %v2134 = vsel %vm1281, %v2102, %v2070
      %v2136 = vsel %vm1281, %v2104, %v2072
      %v2138 = vsel %vm1281, %v2106, %v2074
      %v2140 = vsel %vm1281, %v2108, %v2076
      %v2142 = vsel %vm1281, %v2110, %v2078
      %v2144 = vsel %vm1281, %v2112, %v2080
      %v2146 = vsel %vm1281, %v2114, %v2082
      %v2148 = vsel %vm1281, %v2116, %v2084
      %v2150 = vsel %vm1281, %v2118, %v2086
      %v2152 = vsel %vm1281, %v2120, %v2088
      %v2154 = vsel %vm1281, %v2122, %v2090
      %v2156 = vsel %vm1281, %v2124, %v2092
      %v2158 = vsel %vm1281, %v2126, %v2094
      %s2159 = scalar_lea.vmem %s1, 8
      %v2160 = vld [vmem:[%s2159] sm:$0xf]
      %v2161 = vld [vmem:[%s2159 + $0x4] sm:$0x3]
      %v2164 = vunpack.c.l.b16 %v2160
      %v2165 = vunpack.c.l.b16 %v2161
      %v2166 = vpack.c.b16 %v2165, %v2164
      %v2167 = vsel %vm1321, %v2128, 0
      %v2169 = vsel %vm1321, %v2130, 0
      %v2171 = vsel %vm1321, %v2132, 0
      %v2173 = vsel %vm1321, %v2134, 0
      %v2175 = vsel %vm1321, %v2136, 0
      %v2177 = vsel %vm1321, %v2138, 0
      %v2179 = vsel %vm1321, %v2140, 0
      %v2181 = vsel %vm1321, %v2142, 0
      %v2183 = vsel %vm1321, %v2144, 0
      %v2185 = vsel %vm1321, %v2146, 0
      %v2187 = vsel %vm1321, %v2148, 0
      %v2189 = vsel %vm1321, %v2150, 0
      %v2191 = vsel %vm1321, %v2152, 0
      %v2193 = vsel %vm1321, %v2154, 0
      %v2195 = vsel %vm1321, %v2156, 0
      %v2197 = vsel %vm1321, %v2158, 0
      %v2200 = vsel %vm1354, %v2166, 0
      %2202 = vmatprep.subr.bf16.mxu0 0
      %2203 = vmatpush1.bf16.msra.mxu0 0
      %2204 = vmatprep.subr.bf16.mxu0 0
      %2205 = vmatpush1.bf16.msra.mxu0 0
      %2206 = vmatprep.subr.bf16.mxu0 0
      %2207 = vmatpush1.bf16.msra.mxu0 0
      %2208 = vmatprep.subr.bf16.mxu0 0
      %2209 = vmatpush1.bf16.msra.mxu0 0
      %2210 = vmatprep.subr.bf16.mxu0 0
      %2211 = vmatpush1.bf16.msra.mxu0 0
      %2212 = vmatprep.subr.bf16.mxu0 0
      %2213 = vmatpush1.bf16.msra.mxu0 0
      %2214 = vmatprep.subr.bf16.mxu0 0
      %2215 = vmatpush1.bf16.msra.mxu0 0
      %2216 = vmatprep.subr.bf16.mxu0 0
      %2217 = vmatpush1.bf16.msra.mxu0 %v2200
      %2218 = vmatprep.subr.bf16.mxu0 0
      %2219 = vmatpush2.bf16.msra.mxu0 0
      %2220 = vmatprep.subr.bf16.mxu0 0
      %2221 = vmatpush2.bf16.msra.mxu0 0
      %2222 = vmatprep.subr.bf16.mxu0 0
      %2223 = vmatpush2.bf16.msra.mxu0 0
      %2224 = vmatprep.subr.bf16.mxu0 0
      %2225 = vmatpush2.bf16.msra.mxu0 0
      %2226 = vmatprep.subr.bf16.mxu0 0
      %2227 = vmatpush2.bf16.msra.mxu0 0
      %2228 = vmatprep.subr.bf16.mxu0 0
      %2229 = vmatpush2.bf16.msra.mxu0 0
      %2230 = vmatprep.subr.bf16.mxu0 0
      %2231 = vmatpush2.bf16.msra.mxu0 0
      %2232 = vmatprep.subr.bf16.mxu0 0
      %2233 = vmatpush2.bf16.msra.mxu0 0
      %2234 = vmatprep.mubr.bf16.mxu0 0
      %2235 = vmatmul.mubr.bf16.gmra.mxu0 %v2167
      %v2236 = vpop.f32.mrf.mxu0
      %v2237 = vadd.f32 0.0, %v2236
      %v2238 = vpop.f32.mrf.mxu0
      %v2239 = vpop.f32.mrf.mxu0
      %v2240 = vadd.f32 0.0, %v2239
      %v2241 = vpop.f32.mrf.mxu0
      %2242 = vmatprep.mubr.bf16.mxu0 0
      %2243 = vmatmul.mubr.bf16.gmra.mxu0 %v2169
      %v2244 = vpop.f32.mrf.mxu0
      %v2245 = vadd.f32 0.0, %v2244
      %v2246 = vpop.f32.mrf.mxu0
      %v2247 = vpop.f32.mrf.mxu0
      %v2248 = vadd.f32 0.0, %v2247
      %v2249 = vpop.f32.mrf.mxu0
      %2250 = vmatprep.mubr.bf16.mxu0 0
      %2251 = vmatmul.mubr.bf16.gmra.mxu0 %v2171
      %v2252 = vpop.f32.mrf.mxu0
      %v2253 = vadd.f32 0.0, %v2252
      %v2254 = vpop.f32.mrf.mxu0
      %v2255 = vpop.f32.mrf.mxu0
      %v2256 = vadd.f32 0.0, %v2255
      %v2257 = vpop.f32.mrf.mxu0
      %2258 = vmatprep.mubr.bf16.mxu0 0
      %2259 = vmatmul.mubr.bf16.gmra.mxu0 %v2173
      %v2260 = vpop.f32.mrf.mxu0
      %v2261 = vadd.f32 0.0, %v2260
      %v2262 = vpop.f32.mrf.mxu0
      %v2263 = vpop.f32.mrf.mxu0
      %v2264 = vadd.f32 0.0, %v2263
      %v2265 = vpop.f32.mrf.mxu0
      %2266 = vmatprep.mubr.bf16.mxu0 0
      %2267 = vmatmul.mubr.bf16.gmra.mxu0 %v2175
      %v2268 = vpop.f32.mrf.mxu0
      %v2269 = vadd.f32 0.0, %v2268
      %v2270 = vpop.f32.mrf.mxu0
      %v2271 = vpop.f32.mrf.mxu0
      %v2272 = vadd.f32 0.0, %v2271
      %v2273 = vpop.f32.mrf.mxu0
      %2274 = vmatprep.mubr.bf16.mxu0 0
      %2275 = vmatmul.mubr.bf16.gmra.mxu0 %v2177
      %v2276 = vpop.f32.mrf.mxu0
      %v2277 = vadd.f32 0.0, %v2276
      %v2278 = vpop.f32.mrf.mxu0
      %v2279 = vpop.f32.mrf.mxu0
      %v2280 = vadd.f32 0.0, %v2279
      %v2281 = vpop.f32.mrf.mxu0
      %2282 = vmatprep.mubr.bf16.mxu0 0
      %2283 = vmatmul.mubr.bf16.gmra.mxu0 %v2179
      %v2284 = vpop.f32.mrf.mxu0
      %v2285 = vadd.f32 0.0, %v2284
      %v2286 = vpop.f32.mrf.mxu0
      %v2287 = vpop.f32.mrf.mxu0
      %v2288 = vadd.f32 0.0, %v2287
      %v2289 = vpop.f32.mrf.mxu0
      %2290 = vmatprep.mubr.bf16.mxu0 0
      %2291 = vmatmul.mubr.bf16.gmra.mxu0 %v2181
      %v2292 = vpop.f32.mrf.mxu0
      %v2293 = vadd.f32 0.0, %v2292
      %v2294 = vpop.f32.mrf.mxu0
      %v2295 = vpop.f32.mrf.mxu0
      %v2296 = vadd.f32 0.0, %v2295
      %v2297 = vpop.f32.mrf.mxu0
      %2298 = vmatprep.mubr.bf16.mxu0 0
      %2299 = vmatmul.mubr.bf16.gmra.mxu0 %v2183
      %v2300 = vpop.f32.mrf.mxu0
      %v2301 = vadd.f32 0.0, %v2300
      %v2302 = vpop.f32.mrf.mxu0
      %v2303 = vpop.f32.mrf.mxu0
      %v2304 = vadd.f32 0.0, %v2303
      %v2305 = vpop.f32.mrf.mxu0
      %2306 = vmatprep.mubr.bf16.mxu0 0
      %2307 = vmatmul.mubr.bf16.gmra.mxu0 %v2185
      %v2308 = vpop.f32.mrf.mxu0
      %v2309 = vadd.f32 0.0, %v2308
      %v2310 = vpop.f32.mrf.mxu0
      %v2311 = vpop.f32.mrf.mxu0
      %v2312 = vadd.f32 0.0, %v2311
      %v2313 = vpop.f32.mrf.mxu0
      %2314 = vmatprep.mubr.bf16.mxu0 0
      %2315 = vmatmul.mubr.bf16.gmra.mxu0 %v2187
      %v2316 = vpop.f32.mrf.mxu0
      %v2317 = vadd.f32 0.0, %v2316
      %v2318 = vpop.f32.mrf.mxu0
      %v2319 = vpop.f32.mrf.mxu0
      %v2320 = vadd.f32 0.0, %v2319
      %v2321 = vpop.f32.mrf.mxu0
      %2322 = vmatprep.mubr.bf16.mxu0 0
      %2323 = vmatmul.mubr.bf16.gmra.mxu0 %v2189
      %v2324 = vpop.f32.mrf.mxu0
      %v2325 = vadd.f32 0.0, %v2324
      %v2326 = vpop.f32.mrf.mxu0
      %v2327 = vpop.f32.mrf.mxu0
      %v2328 = vadd.f32 0.0, %v2327
      %v2329 = vpop.f32.mrf.mxu0
      %2330 = vmatprep.mubr.bf16.mxu0 0
      %2331 = vmatmul.mubr.bf16.gmra.mxu0 %v2191
      %v2332 = vpop.f32.mrf.mxu0
      %v2333 = vadd.f32 0.0, %v2332
      %v2334 = vpop.f32.mrf.mxu0
      %v2335 = vpop.f32.mrf.mxu0
      %v2336 = vadd.f32 0.0, %v2335
      %v2337 = vpop.f32.mrf.mxu0
      %2338 = vmatprep.mubr.bf16.mxu0 0
      %2339 = vmatmul.mubr.bf16.gmra.mxu0 %v2193
      %v2340 = vpop.f32.mrf.mxu0
      %v2341 = vadd.f32 0.0, %v2340
      %v2342 = vpop.f32.mrf.mxu0
      %v2343 = vpop.f32.mrf.mxu0
      %v2344 = vadd.f32 0.0, %v2343
      %v2345 = vpop.f32.mrf.mxu0
      %2346 = vmatprep.mubr.bf16.mxu0 0
      %2347 = vmatmul.mubr.bf16.gmra.mxu0 %v2195
      %v2348 = vpop.f32.mrf.mxu0
      %v2349 = vadd.f32 0.0, %v2348
      %v2350 = vpop.f32.mrf.mxu0
      %v2351 = vpop.f32.mrf.mxu0
      %v2352 = vadd.f32 0.0, %v2351
      %v2353 = vpop.f32.mrf.mxu0
      %2354 = vmatprep.mubr.bf16.mxu0 0
      %2355 = vmatmul.mubr.bf16.gmra.mxu0 %v2197
      %v2356 = vpop.f32.mrf.mxu0
      %v2357 = vadd.f32 0.0, %v2356
      %v2358 = vpop.f32.mrf.mxu0
      %v2359 = vpop.f32.mrf.mxu0
      %v2360 = vadd.f32 0.0, %v2359
      %v2361 = vpop.f32.mrf.mxu0
      %2362 = vdwg.mxu0
      %v2363 = vld [vmem:[#allocation3] sm:$0xff]
      %v2364 = vld [vmem:[#allocation3 + $0x8] sm:$0xff]
      %v2365 = vld [vmem:[#allocation3 + $0x10] sm:$0xff]
      %v2366 = vld [vmem:[#allocation3 + $0x18] sm:$0xff]
      %v2367 = vld [vmem:[#allocation3 + $0x20] sm:$0xff]
      %v2368 = vld [vmem:[#allocation3 + $0x28] sm:$0xff]
      %v2369 = vld [vmem:[#allocation3 + $0x30] sm:$0xff]
      %v2370 = vld [vmem:[#allocation3 + $0x38] sm:$0xff]
      %v2371 = vld [vmem:[#allocation3 + $0x40] sm:$0xff]
      %v2372 = vld [vmem:[#allocation3 + $0x48] sm:$0xff]
      %v2373 = vld [vmem:[#allocation3 + $0x50] sm:$0xff]
      %v2374 = vld [vmem:[#allocation3 + $0x58] sm:$0xff]
      %v2375 = vld [vmem:[#allocation3 + $0x60] sm:$0xff]
      %v2376 = vld [vmem:[#allocation3 + $0x68] sm:$0xff]
      %v2377 = vld [vmem:[#allocation3 + $0x70] sm:$0xff]
      %v2378 = vld [vmem:[#allocation3 + $0x78] sm:$0xff]
      %v2379 = vld [vmem:[#allocation3 + $0x80] sm:$0xff]
      %v2380 = vld [vmem:[#allocation3 + $0x88] sm:$0xff]
      %v2381 = vld [vmem:[#allocation3 + $0x90] sm:$0xff]
      %v2382 = vld [vmem:[#allocation3 + $0x98] sm:$0xff]
      %v2383 = vld [vmem:[#allocation3 + $0xa0] sm:$0xff]
      %v2384 = vld [vmem:[#allocation3 + $0xa8] sm:$0xff]
      %v2385 = vld [vmem:[#allocation3 + $0xb0] sm:$0xff]
      %v2386 = vld [vmem:[#allocation3 + $0xb8] sm:$0xff]
      %v2387 = vld [vmem:[#allocation3 + $0xc0] sm:$0xff]
      %v2388 = vld [vmem:[#allocation3 + $0xc8] sm:$0xff]
      %v2389 = vld [vmem:[#allocation3 + $0xd0] sm:$0xff]
      %v2390 = vld [vmem:[#allocation3 + $0xd8] sm:$0xff]
      %v2391 = vld [vmem:[#allocation3 + $0xe0] sm:$0xff]
      %v2392 = vld [vmem:[#allocation3 + $0xe8] sm:$0xff]
      %v2393 = vld [vmem:[#allocation3 + $0xf0] sm:$0xff]
      %v2394 = vld [vmem:[#allocation3 + $0xf8] sm:$0xff]
      %v2395 = vadd.f32 %v2363, %v2237
      %v2396 = vadd.f32 %v2364, %v2240
      %v2397 = vadd.f32 %v2365, %v2245
      %v2398 = vadd.f32 %v2366, %v2248
      %v2399 = vadd.f32 %v2367, %v2253
      %v2400 = vadd.f32 %v2368, %v2256
      %v2401 = vadd.f32 %v2369, %v2261
      %v2402 = vadd.f32 %v2370, %v2264
      %v2403 = vadd.f32 %v2371, %v2269
      %v2404 = vadd.f32 %v2372, %v2272
      %v2405 = vadd.f32 %v2373, %v2277
      %v2406 = vadd.f32 %v2374, %v2280
      %v2407 = vadd.f32 %v2375, %v2285
      %v2408 = vadd.f32 %v2376, %v2288
      %v2409 = vadd.f32 %v2377, %v2293
      %v2410 = vadd.f32 %v2378, %v2296
      %v2411 = vadd.f32 %v2379, %v2301
      %v2412 = vadd.f32 %v2380, %v2304
      %v2413 = vadd.f32 %v2381, %v2309
      %v2414 = vadd.f32 %v2382, %v2312
      %v2415 = vadd.f32 %v2383, %v2317
      %v2416 = vadd.f32 %v2384, %v2320
      %v2417 = vadd.f32 %v2385, %v2325
      %v2418 = vadd.f32 %v2386, %v2328
      %v2419 = vadd.f32 %v2387, %v2333
      %v2420 = vadd.f32 %v2388, %v2336
      %v2421 = vadd.f32 %v2389, %v2341
      %v2422 = vadd.f32 %v2390, %v2344
      %v2423 = vadd.f32 %v2391, %v2349
      %v2424 = vadd.f32 %v2392, %v2352
      %v2425 = vadd.f32 %v2393, %v2357
      %v2426 = vadd.f32 %v2394, %v2360
      %2427 = vst.msk [vmem:[#allocation3] sm:$0xff] %vm1248, %v2395
      %2428 = vst.msk [vmem:[#allocation3 + $0x8] sm:$0xff] %vm1248, %v2396
      %2429 = vst.msk [vmem:[#allocation3 + $0x10] sm:$0xff] %vm1248, %v2397
      %2430 = vst.msk [vmem:[#allocation3 + $0x18] sm:$0xff] %vm1248, %v2398
      %2431 = vst.msk [vmem:[#allocation3 + $0x20] sm:$0xff] %vm1248, %v2399
      %2432 = vst.msk [vmem:[#allocation3 + $0x28] sm:$0xff] %vm1248, %v2400
      %2433 = vst.msk [vmem:[#allocation3 + $0x30] sm:$0xff] %vm1248, %v2401
      %2434 = vst.msk [vmem:[#allocation3 + $0x38] sm:$0xff] %vm1248, %v2402
      %2435 = vst.msk [vmem:[#allocation3 + $0x40] sm:$0xff] %vm1248, %v2403
      %2436 = vst.msk [vmem:[#allocation3 + $0x48] sm:$0xff] %vm1248, %v2404
      %2437 = vst.msk [vmem:[#allocation3 + $0x50] sm:$0xff] %vm1248, %v2405
      %2438 = vst.msk [vmem:[#allocation3 + $0x58] sm:$0xff] %vm1248, %v2406
      %2439 = vst.msk [vmem:[#allocation3 + $0x60] sm:$0xff] %vm1248, %v2407
      %2440 = vst.msk [vmem:[#allocation3 + $0x68] sm:$0xff] %vm1248, %v2408
      %2441 = vst.msk [vmem:[#allocation3 + $0x70] sm:$0xff] %vm1248, %v2409
      %2442 = vst.msk [vmem:[#allocation3 + $0x78] sm:$0xff] %vm1248, %v2410
      %2443 = vst.msk [vmem:[#allocation3 + $0x80] sm:$0xff] %vm1248, %v2411
      %2444 = vst.msk [vmem:[#allocation3 + $0x88] sm:$0xff] %vm1248, %v2412
      %2445 = vst.msk [vmem:[#allocation3 + $0x90] sm:$0xff] %vm1248, %v2413
      %2446 = vst.msk [vmem:[#allocation3 + $0x98] sm:$0xff] %vm1248, %v2414
      %2447 = vst.msk [vmem:[#allocation3 + $0xa0] sm:$0xff] %vm1248, %v2415
      %2448 = vst.msk [vmem:[#allocation3 + $0xa8] sm:$0xff] %vm1248, %v2416
      %2449 = vst.msk [vmem:[#allocation3 + $0xb0] sm:$0xff] %vm1248, %v2417
      %2450 = vst.msk [vmem:[#allocation3 + $0xb8] sm:$0xff] %vm1248, %v2418
      %2451 = vst.msk [vmem:[#allocation3 + $0xc0] sm:$0xff] %vm1248, %v2419
      %2452 = vst.msk [vmem:[#allocation3 + $0xc8] sm:$0xff] %vm1248, %v2420
      %2453 = vst.msk [vmem:[#allocation3 + $0xd0] sm:$0xff] %vm1248, %v2421
      %2454 = vst.msk [vmem:[#allocation3 + $0xd8] sm:$0xff] %vm1248, %v2422
      %2455 = vst.msk [vmem:[#allocation3 + $0xe0] sm:$0xff] %vm1248, %v2423
      %2456 = vst.msk [vmem:[#allocation3 + $0xe8] sm:$0xff] %vm1248, %v2424
      %2457 = vst.msk [vmem:[#allocation3 + $0xf0] sm:$0xff] %vm1248, %v2425
      %2458 = vst.msk [vmem:[#allocation3 + $0xf8] sm:$0xff] %vm1248, %v2426
      %s2459 = scalar_lea.vmem [#allocation2], 24
      %v2460 = vld [vmem:[%s2459] sm:$0xf]
      %v2461 = vld [vmem:[%s2459 + $0x4] sm:$0xf]
      %v2462 = vld [vmem:[%s2459 + $0xc] sm:$0xf]
      %v2463 = vld [vmem:[%s2459 + $0x10] sm:$0xf]
      %v2464 = vld [vmem:[%s2459 + $0x18] sm:$0xf]
      %v2465 = vld [vmem:[%s2459 + $0x1c] sm:$0xf]
      %v2466 = vld [vmem:[%s2459 + $0x24] sm:$0xf]
      %v2467 = vld [vmem:[%s2459 + $0x28] sm:$0xf]
      %v2468 = vld [vmem:[%s2459 + $0x30] sm:$0xf]
      %v2469 = vld [vmem:[%s2459 + $0x34] sm:$0xf]
      %v2470 = vld [vmem:[%s2459 + $0x3c] sm:$0xf]
      %v2471 = vld [vmem:[%s2459 + $0x40] sm:$0xf]
      %v2472 = vld [vmem:[%s2459 + $0x48] sm:$0xf]
      %v2473 = vld [vmem:[%s2459 + $0x4c] sm:$0xf]
      %v2474 = vld [vmem:[%s2459 + $0x54] sm:$0xf]
      %v2475 = vld [vmem:[%s2459 + $0x58] sm:$0xf]
      %v2476 = vld [vmem:[%s2459 + $0x60] sm:$0xf]
      %v2477 = vld [vmem:[%s2459 + $0x64] sm:$0xf]
      %v2478 = vld [vmem:[%s2459 + $0x6c] sm:$0xf]
      %v2479 = vld [vmem:[%s2459 + $0x70] sm:$0xf]
      %v2480 = vld [vmem:[%s2459 + $0x78] sm:$0xf]
      %v2481 = vld [vmem:[%s2459 + $0x7c] sm:$0xf]
      %v2482 = vld [vmem:[%s2459 + $0x84] sm:$0xf]
      %v2483 = vld [vmem:[%s2459 + $0x88] sm:$0xf]
      %v2484 = vld [vmem:[%s2459 + $0x90] sm:$0xf]
      %v2485 = vld [vmem:[%s2459 + $0x94] sm:$0xf]
      %v2486 = vld [vmem:[%s2459 + $0x9c] sm:$0xf]
      %v2487 = vld [vmem:[%s2459 + $0xa0] sm:$0xf]
      %v2488 = vld [vmem:[%s2459 + $0xa8] sm:$0xf]
      %v2489 = vld [vmem:[%s2459 + $0xac] sm:$0xf]
      %v2490 = vld [vmem:[%s2459 + $0xb4] sm:$0xf]
      %v2491 = vld [vmem:[%s2459 + $0xb8] sm:$0xf]
      %v2492 = vld [vmem:[%s2459 + $0x8] sm:$0x1]
      %v2493 = vld [vmem:[%s2459 + $0x14] sm:$0x1]
      %v2494 = vld [vmem:[%s2459 + $0x20] sm:$0x1]
      %v2495 = vld [vmem:[%s2459 + $0x2c] sm:$0x1]
      %v2496 = vld [vmem:[%s2459 + $0x38] sm:$0x1]
      %v2497 = vld [vmem:[%s2459 + $0x44] sm:$0x1]
      %v2498 = vld [vmem:[%s2459 + $0x50] sm:$0x1]
      %v2499 = vld [vmem:[%s2459 + $0x5c] sm:$0x1]
      %v2500 = vld [vmem:[%s2459 + $0x68] sm:$0x1]
      %v2501 = vld [vmem:[%s2459 + $0x74] sm:$0x1]
      %v2502 = vld [vmem:[%s2459 + $0x80] sm:$0x1]
      %v2503 = vld [vmem:[%s2459 + $0x8c] sm:$0x1]
      %v2504 = vld [vmem:[%s2459 + $0x98] sm:$0x1]
      %v2505 = vld [vmem:[%s2459 + $0xa4] sm:$0x1]
      %v2506 = vld [vmem:[%s2459 + $0xb0] sm:$0x1]
      %v2507 = vld [vmem:[%s2459 + $0xbc] sm:$0x1]
      %v2508 = vld [vmem:[%s2459] sm:$0xe]
      %v2509 = vld [vmem:[%s2459 + $0xc] sm:$0xe]
      %v2510 = vld [vmem:[%s2459 + $0x18] sm:$0xe]
      %v2511 = vld [vmem:[%s2459 + $0x24] sm:$0xe]
      %v2512 = vld [vmem:[%s2459 + $0x30] sm:$0xe]
      %v2513 = vld [vmem:[%s2459 + $0x3c] sm:$0xe]
      %v2514 = vld [vmem:[%s2459 + $0x48] sm:$0xe]
      %v2515 = vld [vmem:[%s2459 + $0x54] sm:$0xe]
      %v2516 = vld [vmem:[%s2459 + $0x60] sm:$0xe]
      %v2517 = vld [vmem:[%s2459 + $0x6c] sm:$0xe]
      %v2518 = vld [vmem:[%s2459 + $0x78] sm:$0xe]
      %v2519 = vld [vmem:[%s2459 + $0x84] sm:$0xe]
      %v2520 = vld [vmem:[%s2459 + $0x90] sm:$0xe]
      %v2521 = vld [vmem:[%s2459 + $0x9c] sm:$0xe]
      %v2522 = vld [vmem:[%s2459 + $0xa8] sm:$0xe]
      %v2523 = vld [vmem:[%s2459 + $0xb4] sm:$0xe]
      %v2556 = vunpack.c.l.b16 %v2460
      %v2557 = vunpack.c.l.b16 %v2461
      %v2558 = vunpack.c.l.b16 %v2462
      %v2559 = vunpack.c.l.b16 %v2463
      %v2560 = vunpack.c.l.b16 %v2464
      %v2561 = vunpack.c.l.b16 %v2465
      %v2562 = vunpack.c.l.b16 %v2466
      %v2563 = vunpack.c.l.b16 %v2467
      %v2564 = vunpack.c.l.b16 %v2468
      %v2565 = vunpack.c.l.b16 %v2469
      %v2566 = vunpack.c.l.b16 %v2470
      %v2567 = vunpack.c.l.b16 %v2471
      %v2568 = vunpack.c.l.b16 %v2472
      %v2569 = vunpack.c.l.b16 %v2473
      %v2570 = vunpack.c.l.b16 %v2474
      %v2571 = vunpack.c.l.b16 %v2475
      %v2572 = vunpack.c.l.b16 %v2476
      %v2573 = vunpack.c.l.b16 %v2477
      %v2574 = vunpack.c.l.b16 %v2478
      %v2575 = vunpack.c.l.b16 %v2479
      %v2576 = vunpack.c.l.b16 %v2480
      %v2577 = vunpack.c.l.b16 %v2481
      %v2578 = vunpack.c.l.b16 %v2482
      %v2579 = vunpack.c.l.b16 %v2483
      %v2580 = vunpack.c.l.b16 %v2484
      %v2581 = vunpack.c.l.b16 %v2485
      %v2582 = vunpack.c.l.b16 %v2486
      %v2583 = vunpack.c.l.b16 %v2487
      %v2584 = vunpack.c.l.b16 %v2488
      %v2585 = vunpack.c.l.b16 %v2489
      %v2586 = vunpack.c.l.b16 %v2490
      %v2587 = vunpack.c.l.b16 %v2491
      %v2588 = vpack.c.b16 %v2557, %v2556
      %v2589 = vpack.c.b16 %v2559, %v2558
      %v2590 = vpack.c.b16 %v2561, %v2560
      %v2591 = vpack.c.b16 %v2563, %v2562
      %v2592 = vpack.c.b16 %v2565, %v2564
      %v2593 = vpack.c.b16 %v2567, %v2566
      %v2594 = vpack.c.b16 %v2569, %v2568
      %v2595 = vpack.c.b16 %v2571, %v2570
      %v2596 = vpack.c.b16 %v2573, %v2572
      %v2597 = vpack.c.b16 %v2575, %v2574
      %v2598 = vpack.c.b16 %v2577, %v2576
      %v2599 = vpack.c.b16 %v2579, %v2578
      %v2600 = vpack.c.b16 %v2581, %v2580
      %v2601 = vpack.c.b16 %v2583, %v2582
      %v2602 = vpack.c.b16 %v2585, %v2584
      %v2603 = vpack.c.b16 %v2587, %v2586
      %v2620 = vunpack.c.l.b16 %v2492
      %v2621 = vunpack.c.l.b16 %v2493
      %v2622 = vunpack.c.l.b16 %v2494
      %v2623 = vunpack.c.l.b16 %v2495
      %v2624 = vunpack.c.l.b16 %v2496
      %v2625 = vunpack.c.l.b16 %v2497
      %v2626 = vunpack.c.l.b16 %v2498
      %v2627 = vunpack.c.l.b16 %v2499
      %v2628 = vunpack.c.l.b16 %v2500
      %v2629 = vunpack.c.l.b16 %v2501
      %v2630 = vunpack.c.l.b16 %v2502
      %v2631 = vunpack.c.l.b16 %v2503
      %v2632 = vunpack.c.l.b16 %v2504
      %v2633 = vunpack.c.l.b16 %v2505
      %v2634 = vunpack.c.l.b16 %v2506
      %v2635 = vunpack.c.l.b16 %v2507
      %v2636 = vpack.c.b16 %v2620, %v2620
      %v2637 = vpack.c.b16 %v2621, %v2621
      %v2638 = vpack.c.b16 %v2622, %v2622
      %v2639 = vpack.c.b16 %v2623, %v2623
      %v2640 = vpack.c.b16 %v2624, %v2624
      %v2641 = vpack.c.b16 %v2625, %v2625
      %v2642 = vpack.c.b16 %v2626, %v2626
      %v2643 = vpack.c.b16 %v2627, %v2627
      %v2644 = vpack.c.b16 %v2628, %v2628
      %v2645 = vpack.c.b16 %v2629, %v2629
      %v2646 = vpack.c.b16 %v2630, %v2630
      %v2647 = vpack.c.b16 %v2631, %v2631
      %v2648 = vpack.c.b16 %v2632, %v2632
      %v2649 = vpack.c.b16 %v2633, %v2633
      %v2650 = vpack.c.b16 %v2634, %v2634
      %v2651 = vpack.c.b16 %v2635, %v2635
      %v2653 = vshrl.u32 %v2588, 16
      %v2655 = vshll.u32 %v2588, 16
      %v2657 = vrot.slane %v2655, 1
      %v2658 = vor.u32 %v2653, %v2657
      %v2660 = vshll.u32 %v2636, 16
      %v2662 = vrot.slane %v2660, 1
      %v2663 = vsel %vm894, %v2658, %v2662
      %v2665 = vshrl.u32 %v2589, 16
      %v2667 = vshll.u32 %v2589, 16
      %v2669 = vrot.slane %v2667, 1
      %v2670 = vor.u32 %v2665, %v2669
      %v2672 = vshll.u32 %v2637, 16
      %v2674 = vrot.slane %v2672, 1
      %v2675 = vsel %vm894, %v2670, %v2674
      %v2677 = vshrl.u32 %v2590, 16
      %v2679 = vshll.u32 %v2590, 16
      %v2681 = vrot.slane %v2679, 1
      %v2682 = vor.u32 %v2677, %v2681
      %v2684 = vshll.u32 %v2638, 16
      %v2686 = vrot.slane %v2684, 1
      %v2687 = vsel %vm894, %v2682, %v2686
      %v2689 = vshrl.u32 %v2591, 16
      %v2691 = vshll.u32 %v2591, 16
      %v2693 = vrot.slane %v2691, 1
      %v2694 = vor.u32 %v2689, %v2693
      %v2696 = vshll.u32 %v2639, 16
      %v2698 = vrot.slane %v2696, 1
      %v2699 = vsel %vm894, %v2694, %v2698
      %v2701 = vshrl.u32 %v2592, 16
      %v2703 = vshll.u32 %v2592, 16
      %v2705 = vrot.slane %v2703, 1
      %v2706 = vor.u32 %v2701, %v2705
      %v2708 = vshll.u32 %v2640, 16
      %v2710 = vrot.slane %v2708, 1
      %v2711 = vsel %vm894, %v2706, %v2710
      %v2713 = vshrl.u32 %v2593, 16
      %v2715 = vshll.u32 %v2593, 16
      %v2717 = vrot.slane %v2715, 1
      %v2718 = vor.u32 %v2713, %v2717
      %v2720 = vshll.u32 %v2641, 16
      %v2722 = vrot.slane %v2720, 1
      %v2723 = vsel %vm894, %v2718, %v2722
      %v2725 = vshrl.u32 %v2594, 16
      %v2727 = vshll.u32 %v2594, 16
      %v2729 = vrot.slane %v2727, 1
      %v2730 = vor.u32 %v2725, %v2729
      %v2732 = vshll.u32 %v2642, 16
      %v2734 = vrot.slane %v2732, 1
      %v2735 = vsel %vm894, %v2730, %v2734
      %v2737 = vshrl.u32 %v2595, 16
      %v2739 = vshll.u32 %v2595, 16
      %v2741 = vrot.slane %v2739, 1
      %v2742 = vor.u32 %v2737, %v2741
      %v2744 = vshll.u32 %v2643, 16
      %v2746 = vrot.slane %v2744, 1
      %v2747 = vsel %vm894, %v2742, %v2746
      %v2749 = vshrl.u32 %v2596, 16
      %v2751 = vshll.u32 %v2596, 16
      %v2753 = vrot.slane %v2751, 1
      %v2754 = vor.u32 %v2749, %v2753
      %v2756 = vshll.u32 %v2644, 16
      %v2758 = vrot.slane %v2756, 1
      %v2759 = vsel %vm894, %v2754, %v2758
      %v2761 = vshrl.u32 %v2597, 16
      %v2763 = vshll.u32 %v2597, 16
      %v2765 = vrot.slane %v2763, 1
      %v2766 = vor.u32 %v2761, %v2765
      %v2768 = vshll.u32 %v2645, 16
      %v2770 = vrot.slane %v2768, 1
      %v2771 = vsel %vm894, %v2766, %v2770
      %v2773 = vshrl.u32 %v2598, 16
      %v2775 = vshll.u32 %v2598, 16
      %v2777 = vrot.slane %v2775, 1
      %v2778 = vor.u32 %v2773, %v2777
      %v2780 = vshll.u32 %v2646, 16
      %v2782 = vrot.slane %v2780, 1
      %v2783 = vsel %vm894, %v2778, %v2782
      %v2785 = vshrl.u32 %v2599, 16
      %v2787 = vshll.u32 %v2599, 16
      %v2789 = vrot.slane %v2787, 1
      %v2790 = vor.u32 %v2785, %v2789
      %v2792 = vshll.u32 %v2647, 16
      %v2794 = vrot.slane %v2792, 1
      %v2795 = vsel %vm894, %v2790, %v2794
      %v2797 = vshrl.u32 %v2600, 16
      %v2799 = vshll.u32 %v2600, 16
      %v2801 = vrot.slane %v2799, 1
      %v2802 = vor.u32 %v2797, %v2801
      %v2804 = vshll.u32 %v2648, 16
      %v2806 = vrot.slane %v2804, 1
      %v2807 = vsel %vm894, %v2802, %v2806
      %v2809 = vshrl.u32 %v2601, 16
      %v2811 = vshll.u32 %v2601, 16
      %v2813 = vrot.slane %v2811, 1
      %v2814 = vor.u32 %v2809, %v2813
      %v2816 = vshll.u32 %v2649, 16
      %v2818 = vrot.slane %v2816, 1
      %v2819 = vsel %vm894, %v2814, %v2818
      %v2821 = vshrl.u32 %v2602, 16
      %v2823 = vshll.u32 %v2602, 16
      %v2825 = vrot.slane %v2823, 1
      %v2826 = vor.u32 %v2821, %v2825
      %v2828 = vshll.u32 %v2650, 16
      %v2830 = vrot.slane %v2828, 1
      %v2831 = vsel %vm894, %v2826, %v2830
      %v2833 = vshrl.u32 %v2603, 16
      %v2835 = vshll.u32 %v2603, 16
      %v2837 = vrot.slane %v2835, 1
      %v2838 = vor.u32 %v2833, %v2837
      %v2840 = vshll.u32 %v2651, 16
      %v2842 = vrot.slane %v2840, 1
      %v2843 = vsel %vm894, %v2838, %v2842
      %2844 = vrot.lane.b32.xlu0 %v2663, 4
      %v2845 = vpop.permute.xlu0 %2844
      %2846 = vrot.lane.b32.xlu0 %v2675, 4
      %v2847 = vpop.permute.xlu0 %2846
      %2848 = vrot.lane.b32.xlu0 %v2687, 4
      %v2849 = vpop.permute.xlu0 %2848
      %2850 = vrot.lane.b32.xlu0 %v2699, 4
      %v2851 = vpop.permute.xlu0 %2850
      %2852 = vrot.lane.b32.xlu0 %v2711, 4
      %v2853 = vpop.permute.xlu0 %2852
      %2854 = vrot.lane.b32.xlu0 %v2723, 4
      %v2855 = vpop.permute.xlu0 %2854
      %2856 = vrot.lane.b32.xlu0 %v2735, 4
      %v2857 = vpop.permute.xlu0 %2856
      %2858 = vrot.lane.b32.xlu0 %v2747, 4
      %v2859 = vpop.permute.xlu0 %2858
      %2860 = vrot.lane.b32.xlu0 %v2759, 4
      %v2861 = vpop.permute.xlu0 %2860
      %2862 = vrot.lane.b32.xlu0 %v2771, 4
      %v2863 = vpop.permute.xlu0 %2862
      %2864 = vrot.lane.b32.xlu0 %v2783, 4
      %v2865 = vpop.permute.xlu0 %2864
      %2866 = vrot.lane.b32.xlu0 %v2795, 4
      %v2867 = vpop.permute.xlu0 %2866
      %2868 = vrot.lane.b32.xlu0 %v2807, 4
      %v2869 = vpop.permute.xlu0 %2868
      %2870 = vrot.lane.b32.xlu0 %v2819, 4
      %v2871 = vpop.permute.xlu0 %2870
      %2872 = vrot.lane.b32.xlu0 %v2831, 4
      %v2873 = vpop.permute.xlu0 %2872
      %2874 = vrot.lane.b32.xlu0 %v2843, 4
      %v2875 = vpop.permute.xlu0 %2874
      %v2892 = vunpack.c.l.b16 %v2508
      %v2893 = vunpack.c.l.b16 %v2509
      %v2894 = vunpack.c.l.b16 %v2510
      %v2895 = vunpack.c.l.b16 %v2511
      %v2896 = vunpack.c.l.b16 %v2512
      %v2897 = vunpack.c.l.b16 %v2513
      %v2898 = vunpack.c.l.b16 %v2514
      %v2899 = vunpack.c.l.b16 %v2515
      %v2900 = vunpack.c.l.b16 %v2516
      %v2901 = vunpack.c.l.b16 %v2517
      %v2902 = vunpack.c.l.b16 %v2518
      %v2903 = vunpack.c.l.b16 %v2519
      %v2904 = vunpack.c.l.b16 %v2520
      %v2905 = vunpack.c.l.b16 %v2521
      %v2906 = vunpack.c.l.b16 %v2522
      %v2907 = vunpack.c.l.b16 %v2523
      %v2908 = vpack.c.b16 %v2557, %v2892
      %v2909 = vpack.c.b16 %v2559, %v2893
      %v2910 = vpack.c.b16 %v2561, %v2894
      %v2911 = vpack.c.b16 %v2563, %v2895
      %v2912 = vpack.c.b16 %v2565, %v2896
      %v2913 = vpack.c.b16 %v2567, %v2897
      %v2914 = vpack.c.b16 %v2569, %v2898
      %v2915 = vpack.c.b16 %v2571, %v2899
      %v2916 = vpack.c.b16 %v2573, %v2900
      %v2917 = vpack.c.b16 %v2575, %v2901
      %v2918 = vpack.c.b16 %v2577, %v2902
      %v2919 = vpack.c.b16 %v2579, %v2903
      %v2920 = vpack.c.b16 %v2581, %v2904
      %v2921 = vpack.c.b16 %v2583, %v2905
      %v2922 = vpack.c.b16 %v2585, %v2906
      %v2923 = vpack.c.b16 %v2587, %v2907
      %v2924 = vrot.slane %v2908, 1
      %v2925 = vrot.slane %v2636, 1
      %v2926 = vsel %vm1167, %v2924, %v2925
      %v2927 = vrot.slane %v2909, 1
      %v2928 = vrot.slane %v2637, 1
      %v2929 = vsel %vm1167, %v2927, %v2928
      %v2930 = vrot.slane %v2910, 1
      %v2931 = vrot.slane %v2638, 1
      %v2932 = vsel %vm1167, %v2930, %v2931
      %v2933 = vrot.slane %v2911, 1
      %v2934 = vrot.slane %v2639, 1
      %v2935 = vsel %vm1167, %v2933, %v2934
      %v2936 = vrot.slane %v2912, 1
      %v2937 = vrot.slane %v2640, 1
      %v2938 = vsel %vm1167, %v2936, %v2937
      %v2939 = vrot.slane %v2913, 1
      %v2940 = vrot.slane %v2641, 1
      %v2941 = vsel %vm1167, %v2939, %v2940
      %v2942 = vrot.slane %v2914, 1
      %v2943 = vrot.slane %v2642, 1
      %v2944 = vsel %vm1167, %v2942, %v2943
      %v2945 = vrot.slane %v2915, 1
      %v2946 = vrot.slane %v2643, 1
      %v2947 = vsel %vm1167, %v2945, %v2946
      %v2948 = vrot.slane %v2916, 1
      %v2949 = vrot.slane %v2644, 1
      %v2950 = vsel %vm1167, %v2948, %v2949
      %v2951 = vrot.slane %v2917, 1
      %v2952 = vrot.slane %v2645, 1
      %v2953 = vsel %vm1167, %v2951, %v2952
      %v2954 = vrot.slane %v2918, 1
      %v2955 = vrot.slane %v2646, 1
      %v2956 = vsel %vm1167, %v2954, %v2955
      %v2957 = vrot.slane %v2919, 1
      %v2958 = vrot.slane %v2647, 1
      %v2959 = vsel %vm1167, %v2957, %v2958
      %v2960 = vrot.slane %v2920, 1
      %v2961 = vrot.slane %v2648, 1
      %v2962 = vsel %vm1167, %v2960, %v2961
      %v2963 = vrot.slane %v2921, 1
      %v2964 = vrot.slane %v2649, 1
      %v2965 = vsel %vm1167, %v2963, %v2964
      %v2966 = vrot.slane %v2922, 1
      %v2967 = vrot.slane %v2650, 1
      %v2968 = vsel %vm1167, %v2966, %v2967
      %v2969 = vrot.slane %v2923, 1
      %v2970 = vrot.slane %v2651, 1
      %v2971 = vsel %vm1167, %v2969, %v2970
      %2972 = vrot.lane.b32.xlu0 %v2926, 8
      %v2973 = vpop.permute.xlu0 %2972
      %2974 = vrot.lane.b32.xlu0 %v2929, 8
      %v2975 = vpop.permute.xlu0 %2974
      %2976 = vrot.lane.b32.xlu0 %v2932, 8
      %v2977 = vpop.permute.xlu0 %2976
      %2978 = vrot.lane.b32.xlu0 %v2935, 8
      %v2979 = vpop.permute.xlu0 %2978
      %2980 = vrot.lane.b32.xlu0 %v2938, 8
      %v2981 = vpop.permute.xlu0 %2980
      %2982 = vrot.lane.b32.xlu0 %v2941, 8
      %v2983 = vpop.permute.xlu0 %2982
      %2984 = vrot.lane.b32.xlu0 %v2944, 8
      %v2985 = vpop.permute.xlu0 %2984
      %2986 = vrot.lane.b32.xlu0 %v2947, 8
      %v2987 = vpop.permute.xlu0 %2986
      %2988 = vrot.lane.b32.xlu0 %v2950, 8
      %v2989 = vpop.permute.xlu0 %2988
      %2990 = vrot.lane.b32.xlu0 %v2953, 8
      %v2991 = vpop.permute.xlu0 %2990
      %2992 = vrot.lane.b32.xlu0 %v2956, 8
      %v2993 = vpop.permute.xlu0 %2992
      %2994 = vrot.lane.b32.xlu0 %v2959, 8
      %v2995 = vpop.permute.xlu0 %2994
      %2996 = vrot.lane.b32.xlu0 %v2962, 8
      %v2997 = vpop.permute.xlu0 %2996
      %2998 = vrot.lane.b32.xlu0 %v2965, 8
      %v2999 = vpop.permute.xlu0 %2998
      %3000 = vrot.lane.b32.xlu0 %v2968, 8
      %v3001 = vpop.permute.xlu0 %3000
      %3002 = vrot.lane.b32.xlu0 %v2971, 8
      %v3003 = vpop.permute.xlu0 %3002
      %v3005 = vsel %vm1248, %v2588, %v2845
      %v3007 = vsel %vm1248, %v2589, %v2847
      %v3009 = vsel %vm1248, %v2590, %v2849
      %v3011 = vsel %vm1248, %v2591, %v2851
      %v3013 = vsel %vm1248, %v2592, %v2853
      %v3015 = vsel %vm1248, %v2593, %v2855
      %v3017 = vsel %vm1248, %v2594, %v2857
      %v3019 = vsel %vm1248, %v2595, %v2859
      %v3021 = vsel %vm1248, %v2596, %v2861
      %v3023 = vsel %vm1248, %v2597, %v2863
      %v3025 = vsel %vm1248, %v2598, %v2865
      %v3027 = vsel %vm1248, %v2599, %v2867
      %v3029 = vsel %vm1248, %v2600, %v2869
      %v3031 = vsel %vm1248, %v2601, %v2871
      %v3033 = vsel %vm1248, %v2602, %v2873
      %v3035 = vsel %vm1248, %v2603, %v2875
      %v3037 = vsel %vm1281, %v3005, %v2973
      %v3039 = vsel %vm1281, %v3007, %v2975
      %v3041 = vsel %vm1281, %v3009, %v2977
      %v3043 = vsel %vm1281, %v3011, %v2979
      %v3045 = vsel %vm1281, %v3013, %v2981
      %v3047 = vsel %vm1281, %v3015, %v2983
      %v3049 = vsel %vm1281, %v3017, %v2985
      %v3051 = vsel %vm1281, %v3019, %v2987
      %v3053 = vsel %vm1281, %v3021, %v2989
      %v3055 = vsel %vm1281, %v3023, %v2991
      %v3057 = vsel %vm1281, %v3025, %v2993
      %v3059 = vsel %vm1281, %v3027, %v2995
      %v3061 = vsel %vm1281, %v3029, %v2997
      %v3063 = vsel %vm1281, %v3031, %v2999
      %v3065 = vsel %vm1281, %v3033, %v3001
      %v3067 = vsel %vm1281, %v3035, %v3003
      %s3068 = scalar_lea.vmem %s1, 16
      %v3069 = vld [vmem:[%s3068] sm:$0xf]
      %v3070 = vld [vmem:[%s3068 + $0x4] sm:$0x3]
      %v3073 = vunpack.c.l.b16 %v3069
      %v3074 = vunpack.c.l.b16 %v3070
      %v3075 = vpack.c.b16 %v3074, %v3073
      %v3076 = vsel %vm1321, %v3037, 0
      %v3078 = vsel %vm1321, %v3039, 0
      %v3080 = vsel %vm1321, %v3041, 0
      %v3082 = vsel %vm1321, %v3043, 0
      %v3084 = vsel %vm1321, %v3045, 0
      %v3086 = vsel %vm1321, %v3047, 0
      %v3088 = vsel %vm1321, %v3049, 0
      %v3090 = vsel %vm1321, %v3051, 0
      %v3092 = vsel %vm1321, %v3053, 0
      %v3094 = vsel %vm1321, %v3055, 0
      %v3096 = vsel %vm1321, %v3057, 0
      %v3098 = vsel %vm1321, %v3059, 0
      %v3100 = vsel %vm1321, %v3061, 0
      %v3102 = vsel %vm1321, %v3063, 0
      %v3104 = vsel %vm1321, %v3065, 0
      %v3106 = vsel %vm1321, %v3067, 0
      %v3109 = vsel %vm1354, %v3075, 0
      %3111 = vmatprep.subr.bf16.mxu0 0
      %3112 = vmatpush1.bf16.msra.mxu0 0
      %3113 = vmatprep.subr.bf16.mxu0 0
      %3114 = vmatpush1.bf16.msra.mxu0 0
      %3115 = vmatprep.subr.bf16.mxu0 0
      %3116 = vmatpush1.bf16.msra.mxu0 0
      %3117 = vmatprep.subr.bf16.mxu0 0
      %3118 = vmatpush1.bf16.msra.mxu0 0
      %3119 = vmatprep.subr.bf16.mxu0 0
      %3120 = vmatpush1.bf16.msra.mxu0 0
      %3121 = vmatprep.subr.bf16.mxu0 0
      %3122 = vmatpush1.bf16.msra.mxu0 0
      %3123 = vmatprep.subr.bf16.mxu0 0
      %3124 = vmatpush1.bf16.msra.mxu0 0
      %3125 = vmatprep.subr.bf16.mxu0 0
      %3126 = vmatpush1.bf16.msra.mxu0 %v3109
      %3127 = vmatprep.subr.bf16.mxu0 0
      %3128 = vmatpush2.bf16.msra.mxu0 0
      %3129 = vmatprep.subr.bf16.mxu0 0
      %3130 = vmatpush2.bf16.msra.mxu0 0
      %3131 = vmatprep.subr.bf16.mxu0 0
      %3132 = vmatpush2.bf16.msra.mxu0 0
      %3133 = vmatprep.subr.bf16.mxu0 0
      %3134 = vmatpush2.bf16.msra.mxu0 0
      %3135 = vmatprep.subr.bf16.mxu0 0
      %3136 = vmatpush2.bf16.msra.mxu0 0
      %3137 = vmatprep.subr.bf16.mxu0 0
      %3138 = vmatpush2.bf16.msra.mxu0 0
      %3139 = vmatprep.subr.bf16.mxu0 0
      %3140 = vmatpush2.bf16.msra.mxu0 0
      %3141 = vmatprep.subr.bf16.mxu0 0
      %3142 = vmatpush2.bf16.msra.mxu0 0
      %3143 = vmatprep.mubr.bf16.mxu0 0
      %3144 = vmatmul.mubr.bf16.gmra.mxu0 %v3076
      %v3145 = vpop.f32.mrf.mxu0
      %v3146 = vadd.f32 0.0, %v3145
      %v3147 = vpop.f32.mrf.mxu0
      %v3148 = vpop.f32.mrf.mxu0
      %v3149 = vadd.f32 0.0, %v3148
      %v3150 = vpop.f32.mrf.mxu0
      %3151 = vmatprep.mubr.bf16.mxu0 0
      %3152 = vmatmul.mubr.bf16.gmra.mxu0 %v3078
      %v3153 = vpop.f32.mrf.mxu0
      %v3154 = vadd.f32 0.0, %v3153
      %v3155 = vpop.f32.mrf.mxu0
      %v3156 = vpop.f32.mrf.mxu0
      %v3157 = vadd.f32 0.0, %v3156
      %v3158 = vpop.f32.mrf.mxu0
      %3159 = vmatprep.mubr.bf16.mxu0 0
      %3160 = vmatmul.mubr.bf16.gmra.mxu0 %v3080
      %v3161 = vpop.f32.mrf.mxu0
      %v3162 = vadd.f32 0.0, %v3161
      %v3163 = vpop.f32.mrf.mxu0
      %v3164 = vpop.f32.mrf.mxu0
      %v3165 = vadd.f32 0.0, %v3164
      %v3166 = vpop.f32.mrf.mxu0
      %3167 = vmatprep.mubr.bf16.mxu0 0
      %3168 = vmatmul.mubr.bf16.gmra.mxu0 %v3082
      %v3169 = vpop.f32.mrf.mxu0
      %v3170 = vadd.f32 0.0, %v3169
      %v3171 = vpop.f32.mrf.mxu0
      %v3172 = vpop.f32.mrf.mxu0
      %v3173 = vadd.f32 0.0, %v3172
      %v3174 = vpop.f32.mrf.mxu0
      %3175 = vmatprep.mubr.bf16.mxu0 0
      %3176 = vmatmul.mubr.bf16.gmra.mxu0 %v3084
      %v3177 = vpop.f32.mrf.mxu0
      %v3178 = vadd.f32 0.0, %v3177
      %v3179 = vpop.f32.mrf.mxu0
      %v3180 = vpop.f32.mrf.mxu0
      %v3181 = vadd.f32 0.0, %v3180
      %v3182 = vpop.f32.mrf.mxu0
      %3183 = vmatprep.mubr.bf16.mxu0 0
      %3184 = vmatmul.mubr.bf16.gmra.mxu0 %v3086
      %v3185 = vpop.f32.mrf.mxu0
      %v3186 = vadd.f32 0.0, %v3185
      %v3187 = vpop.f32.mrf.mxu0
      %v3188 = vpop.f32.mrf.mxu0
      %v3189 = vadd.f32 0.0, %v3188
      %v3190 = vpop.f32.mrf.mxu0
      %3191 = vmatprep.mubr.bf16.mxu0 0
      %3192 = vmatmul.mubr.bf16.gmra.mxu0 %v3088
      %v3193 = vpop.f32.mrf.mxu0
      %v3194 = vadd.f32 0.0, %v3193
      %v3195 = vpop.f32.mrf.mxu0
      %v3196 = vpop.f32.mrf.mxu0
      %v3197 = vadd.f32 0.0, %v3196
      %v3198 = vpop.f32.mrf.mxu0
      %3199 = vmatprep.mubr.bf16.mxu0 0
      %3200 = vmatmul.mubr.bf16.gmra.mxu0 %v3090
      %v3201 = vpop.f32.mrf.mxu0
      %v3202 = vadd.f32 0.0, %v3201
      %v3203 = vpop.f32.mrf.mxu0
      %v3204 = vpop.f32.mrf.mxu0
      %v3205 = vadd.f32 0.0, %v3204
      %v3206 = vpop.f32.mrf.mxu0
      %3207 = vmatprep.mubr.bf16.mxu0 0
      %3208 = vmatmul.mubr.bf16.gmra.mxu0 %v3092
      %v3209 = vpop.f32.mrf.mxu0
      %v3210 = vadd.f32 0.0, %v3209
      %v3211 = vpop.f32.mrf.mxu0
      %v3212 = vpop.f32.mrf.mxu0
      %v3213 = vadd.f32 0.0, %v3212
      %v3214 = vpop.f32.mrf.mxu0
      %3215 = vmatprep.mubr.bf16.mxu0 0
      %3216 = vmatmul.mubr.bf16.gmra.mxu0 %v3094
      %v3217 = vpop.f32.mrf.mxu0
      %v3218 = vadd.f32 0.0, %v3217
      %v3219 = vpop.f32.mrf.mxu0
      %v3220 = vpop.f32.mrf.mxu0
      %v3221 = vadd.f32 0.0, %v3220
      %v3222 = vpop.f32.mrf.mxu0
      %3223 = vmatprep.mubr.bf16.mxu0 0
      %3224 = vmatmul.mubr.bf16.gmra.mxu0 %v3096
      %v3225 = vpop.f32.mrf.mxu0
      %v3226 = vadd.f32 0.0, %v3225
      %v3227 = vpop.f32.mrf.mxu0
      %v3228 = vpop.f32.mrf.mxu0
      %v3229 = vadd.f32 0.0, %v3228
      %v3230 = vpop.f32.mrf.mxu0
      %3231 = vmatprep.mubr.bf16.mxu0 0
      %3232 = vmatmul.mubr.bf16.gmra.mxu0 %v3098
      %v3233 = vpop.f32.mrf.mxu0
      %v3234 = vadd.f32 0.0, %v3233
      %v3235 = vpop.f32.mrf.mxu0
      %v3236 = vpop.f32.mrf.mxu0
      %v3237 = vadd.f32 0.0, %v3236
      %v3238 = vpop.f32.mrf.mxu0
      %3239 = vmatprep.mubr.bf16.mxu0 0
      %3240 = vmatmul.mubr.bf16.gmra.mxu0 %v3100
      %v3241 = vpop.f32.mrf.mxu0
      %v3242 = vadd.f32 0.0, %v3241
      %v3243 = vpop.f32.mrf.mxu0
      %v3244 = vpop.f32.mrf.mxu0
      %v3245 = vadd.f32 0.0, %v3244
      %v3246 = vpop.f32.mrf.mxu0
      %3247 = vmatprep.mubr.bf16.mxu0 0
      %3248 = vmatmul.mubr.bf16.gmra.mxu0 %v3102
      %v3249 = vpop.f32.mrf.mxu0
      %v3250 = vadd.f32 0.0, %v3249
      %v3251 = vpop.f32.mrf.mxu0
      %v3252 = vpop.f32.mrf.mxu0
      %v3253 = vadd.f32 0.0, %v3252
      %v3254 = vpop.f32.mrf.mxu0
      %3255 = vmatprep.mubr.bf16.mxu0 0
      %3256 = vmatmul.mubr.bf16.gmra.mxu0 %v3104
      %v3257 = vpop.f32.mrf.mxu0
      %v3258 = vadd.f32 0.0, %v3257
      %v3259 = vpop.f32.mrf.mxu0
      %v3260 = vpop.f32.mrf.mxu0
      %v3261 = vadd.f32 0.0, %v3260
      %v3262 = vpop.f32.mrf.mxu0
      %3263 = vmatprep.mubr.bf16.mxu0 0
      %3264 = vmatmul.mubr.bf16.gmra.mxu0 %v3106
      %v3265 = vpop.f32.mrf.mxu0
      %v3266 = vadd.f32 0.0, %v3265
      %v3267 = vpop.f32.mrf.mxu0
      %v3268 = vpop.f32.mrf.mxu0
      %v3269 = vadd.f32 0.0, %v3268
      %v3270 = vpop.f32.mrf.mxu0
      %3271 = vdwg.mxu0
      %v3272 = vld [vmem:[#allocation3] sm:$0xff]
      %v3273 = vld [vmem:[#allocation3 + $0x8] sm:$0xff]
      %v3274 = vld [vmem:[#allocation3 + $0x10] sm:$0xff]
      %v3275 = vld [vmem:[#allocation3 + $0x18] sm:$0xff]
      %v3276 = vld [vmem:[#allocation3 + $0x20] sm:$0xff]
      %v3277 = vld [vmem:[#allocation3 + $0x28] sm:$0xff]
      %v3278 = vld [vmem:[#allocation3 + $0x30] sm:$0xff]
      %v3279 = vld [vmem:[#allocation3 + $0x38] sm:$0xff]
      %v3280 = vld [vmem:[#allocation3 + $0x40] sm:$0xff]
      %v3281 = vld [vmem:[#allocation3 + $0x48] sm:$0xff]
      %v3282 = vld [vmem:[#allocation3 + $0x50] sm:$0xff]
      %v3283 = vld [vmem:[#allocation3 + $0x58] sm:$0xff]
      %v3284 = vld [vmem:[#allocation3 + $0x60] sm:$0xff]
      %v3285 = vld [vmem:[#allocation3 + $0x68] sm:$0xff]
      %v3286 = vld [vmem:[#allocation3 + $0x70] sm:$0xff]
      %v3287 = vld [vmem:[#allocation3 + $0x78] sm:$0xff]
      %v3288 = vld [vmem:[#allocation3 + $0x80] sm:$0xff]
      %v3289 = vld [vmem:[#allocation3 + $0x88] sm:$0xff]
      %v3290 = vld [vmem:[#allocation3 + $0x90] sm:$0xff]
      %v3291 = vld [vmem:[#allocation3 + $0x98] sm:$0xff]
      %v3292 = vld [vmem:[#allocation3 + $0xa0] sm:$0xff]
      %v3293 = vld [vmem:[#allocation3 + $0xa8] sm:$0xff]
      %v3294 = vld [vmem:[#allocation3 + $0xb0] sm:$0xff]
      %v3295 = vld [vmem:[#allocation3 + $0xb8] sm:$0xff]
      %v3296 = vld [vmem:[#allocation3 + $0xc0] sm:$0xff]
      %v3297 = vld [vmem:[#allocation3 + $0xc8] sm:$0xff]
      %v3298 = vld [vmem:[#allocation3 + $0xd0] sm:$0xff]
      %v3299 = vld [vmem:[#allocation3 + $0xd8] sm:$0xff]
      %v3300 = vld [vmem:[#allocation3 + $0xe0] sm:$0xff]
      %v3301 = vld [vmem:[#allocation3 + $0xe8] sm:$0xff]
      %v3302 = vld [vmem:[#allocation3 + $0xf0] sm:$0xff]
      %v3303 = vld [vmem:[#allocation3 + $0xf8] sm:$0xff]
      %v3304 = vadd.f32 %v3272, %v3146
      %v3305 = vadd.f32 %v3273, %v3149
      %v3306 = vadd.f32 %v3274, %v3154
      %v3307 = vadd.f32 %v3275, %v3157
      %v3308 = vadd.f32 %v3276, %v3162
      %v3309 = vadd.f32 %v3277, %v3165
      %v3310 = vadd.f32 %v3278, %v3170
      %v3311 = vadd.f32 %v3279, %v3173
      %v3312 = vadd.f32 %v3280, %v3178
      %v3313 = vadd.f32 %v3281, %v3181
      %v3314 = vadd.f32 %v3282, %v3186
      %v3315 = vadd.f32 %v3283, %v3189
      %v3316 = vadd.f32 %v3284, %v3194
      %v3317 = vadd.f32 %v3285, %v3197
      %v3318 = vadd.f32 %v3286, %v3202
      %v3319 = vadd.f32 %v3287, %v3205
      %v3320 = vadd.f32 %v3288, %v3210
      %v3321 = vadd.f32 %v3289, %v3213
      %v3322 = vadd.f32 %v3290, %v3218
      %v3323 = vadd.f32 %v3291, %v3221
      %v3324 = vadd.f32 %v3292, %v3226
      %v3325 = vadd.f32 %v3293, %v3229
      %v3326 = vadd.f32 %v3294, %v3234
      %v3327 = vadd.f32 %v3295, %v3237
      %v3328 = vadd.f32 %v3296, %v3242
      %v3329 = vadd.f32 %v3297, %v3245
      %v3330 = vadd.f32 %v3298, %v3250
      %v3331 = vadd.f32 %v3299, %v3253
      %v3332 = vadd.f32 %v3300, %v3258
      %v3333 = vadd.f32 %v3301, %v3261
      %v3334 = vadd.f32 %v3302, %v3266
      %v3335 = vadd.f32 %v3303, %v3269
      %3336 = vst.msk [vmem:[#allocation3] sm:$0xff] %vm1248, %v3304
      %3337 = vst.msk [vmem:[#allocation3 + $0x8] sm:$0xff] %vm1248, %v3305
      %3338 = vst.msk [vmem:[#allocation3 + $0x10] sm:$0xff] %vm1248, %v3306
      %3339 = vst.msk [vmem:[#allocation3 + $0x18] sm:$0xff] %vm1248, %v3307
      %3340 = vst.msk [vmem:[#allocation3 + $0x20] sm:$0xff] %vm1248, %v3308
      %3341 = vst.msk [vmem:[#allocation3 + $0x28] sm:$0xff] %vm1248, %v3309
      %3342 = vst.msk [vmem:[#allocation3 + $0x30] sm:$0xff] %vm1248, %v3310
      %3343 = vst.msk [vmem:[#allocation3 + $0x38] sm:$0xff] %vm1248, %v3311
      %3344 = vst.msk [vmem:[#allocation3 + $0x40] sm:$0xff] %vm1248, %v3312
      %3345 = vst.msk [vmem:[#allocation3 + $0x48] sm:$0xff] %vm1248, %v3313
      %3346 = vst.msk [vmem:[#allocation3 + $0x50] sm:$0xff] %vm1248, %v3314
      %3347 = vst.msk [vmem:[#allocation3 + $0x58] sm:$0xff] %vm1248, %v3315
      %3348 = vst.msk [vmem:[#allocation3 + $0x60] sm:$0xff] %vm1248, %v3316
      %3349 = vst.msk [vmem:[#allocation3 + $0x68] sm:$0xff] %vm1248, %v3317
      %3350 = vst.msk [vmem:[#allocation3 + $0x70] sm:$0xff] %vm1248, %v3318
      %3351 = vst.msk [vmem:[#allocation3 + $0x78] sm:$0xff] %vm1248, %v3319
      %3352 = vst.msk [vmem:[#allocation3 + $0x80] sm:$0xff] %vm1248, %v3320
      %3353 = vst.msk [vmem:[#allocation3 + $0x88] sm:$0xff] %vm1248, %v3321
      %3354 = vst.msk [vmem:[#allocation3 + $0x90] sm:$0xff] %vm1248, %v3322
      %3355 = vst.msk [vmem:[#allocation3 + $0x98] sm:$0xff] %vm1248, %v3323
      %3356 = vst.msk [vmem:[#allocation3 + $0xa0] sm:$0xff] %vm1248, %v3324
      %3357 = vst.msk [vmem:[#allocation3 + $0xa8] sm:$0xff] %vm1248, %v3325
      %3358 = vst.msk [vmem:[#allocation3 + $0xb0] sm:$0xff] %vm1248, %v3326
      %3359 = vst.msk [vmem:[#allocation3 + $0xb8] sm:$0xff] %vm1248, %v3327
      %3360 = vst.msk [vmem:[#allocation3 + $0xc0] sm:$0xff] %vm1248, %v3328
      %3361 = vst.msk [vmem:[#allocation3 + $0xc8] sm:$0xff] %vm1248, %v3329
      %3362 = vst.msk [vmem:[#allocation3 + $0xd0] sm:$0xff] %vm1248, %v3330
      %3363 = vst.msk [vmem:[#allocation3 + $0xd8] sm:$0xff] %vm1248, %v3331
      %3364 = vst.msk [vmem:[#allocation3 + $0xe0] sm:$0xff] %vm1248, %v3332
      %3365 = vst.msk [vmem:[#allocation3 + $0xe8] sm:$0xff] %vm1248, %v3333
      %3366 = vst.msk [vmem:[#allocation3 + $0xf0] sm:$0xff] %vm1248, %v3334
      %3367 = vst.msk [vmem:[#allocation3 + $0xf8] sm:$0xff] %vm1248, %v3335
      %v3368 = vld [vmem:[#allocation3] sm:$0xff]
      %v3369 = vld [vmem:[#allocation3 + $0x8] sm:$0xff]
      %v3370 = vld [vmem:[#allocation3 + $0x10] sm:$0xff]
      %v3371 = vld [vmem:[#allocation3 + $0x18] sm:$0xff]
      %v3372 = vld [vmem:[#allocation3 + $0x20] sm:$0xff]
      %v3373 = vld [vmem:[#allocation3 + $0x28] sm:$0xff]
      %v3374 = vld [vmem:[#allocation3 + $0x30] sm:$0xff]
      %v3375 = vld [vmem:[#allocation3 + $0x38] sm:$0xff]
      %v3376 = vld [vmem:[#allocation3 + $0x40] sm:$0xff]
      %v3377 = vld [vmem:[#allocation3 + $0x48] sm:$0xff]
      %v3378 = vld [vmem:[#allocation3 + $0x50] sm:$0xff]
      %v3379 = vld [vmem:[#allocation3 + $0x58] sm:$0xff]
      %v3380 = vld [vmem:[#allocation3 + $0x60] sm:$0xff]
      %v3381 = vld [vmem:[#allocation3 + $0x68] sm:$0xff]
      %v3382 = vld [vmem:[#allocation3 + $0x70] sm:$0xff]
      %v3383 = vld [vmem:[#allocation3 + $0x78] sm:$0xff]
      %v3384 = vld [vmem:[#allocation3 + $0x80] sm:$0xff]
      %v3385 = vld [vmem:[#allocation3 + $0x88] sm:$0xff]
      %v3386 = vld [vmem:[#allocation3 + $0x90] sm:$0xff]
      %v3387 = vld [vmem:[#allocation3 + $0x98] sm:$0xff]
      %v3388 = vld [vmem:[#allocation3 + $0xa0] sm:$0xff]
      %v3389 = vld [vmem:[#allocation3 + $0xa8] sm:$0xff]
      %v3390 = vld [vmem:[#allocation3 + $0xb0] sm:$0xff]
      %v3391 = vld [vmem:[#allocation3 + $0xb8] sm:$0xff]
      %v3392 = vld [vmem:[#allocation3 + $0xc0] sm:$0xff]
      %v3393 = vld [vmem:[#allocation3 + $0xc8] sm:$0xff]
      %v3394 = vld [vmem:[#allocation3 + $0xd0] sm:$0xff]
      %v3395 = vld [vmem:[#allocation3 + $0xd8] sm:$0xff]
      %v3396 = vld [vmem:[#allocation3 + $0xe0] sm:$0xff]
      %v3397 = vld [vmem:[#allocation3 + $0xe8] sm:$0xff]
      %v3398 = vld [vmem:[#allocation3 + $0xf0] sm:$0xff]
      %v3399 = vld [vmem:[#allocation3 + $0xf8] sm:$0xff]
      %v3400 = vld [vmem:[%s2] sm:$0x1]
      %v3402 = vlaneseq
      %v3403 = vshrl.u32 %v3402, 7
      %v3404 = vsub.s32 0, %v3403
      %v3405 = vrot.slane %v3400, %v3404
      %v3407 = vadd.f32 %v3368, %v3405
      %v3408 = vadd.f32 %v3369, %v3405
      %v3409 = vadd.f32 %v3370, %v3405
      %v3410 = vadd.f32 %v3371, %v3405
      %v3411 = vadd.f32 %v3372, %v3405
      %v3412 = vadd.f32 %v3373, %v3405
      %v3413 = vadd.f32 %v3374, %v3405
      %v3414 = vadd.f32 %v3375, %v3405
      %v3415 = vadd.f32 %v3376, %v3405
      %v3416 = vadd.f32 %v3377, %v3405
      %v3417 = vadd.f32 %v3378, %v3405
      %v3418 = vadd.f32 %v3379, %v3405
      %v3419 = vadd.f32 %v3380, %v3405
      %v3420 = vadd.f32 %v3381, %v3405
      %v3421 = vadd.f32 %v3382, %v3405
      %v3422 = vadd.f32 %v3383, %v3405
      %v3423 = vadd.f32 %v3384, %v3405
      %v3424 = vadd.f32 %v3385, %v3405
      %v3425 = vadd.f32 %v3386, %v3405
      %v3426 = vadd.f32 %v3387, %v3405
      %v3427 = vadd.f32 %v3388, %v3405
      %v3428 = vadd.f32 %v3389, %v3405
      %v3429 = vadd.f32 %v3390, %v3405
      %v3430 = vadd.f32 %v3391, %v3405
      %v3431 = vadd.f32 %v3392, %v3405
      %v3432 = vadd.f32 %v3393, %v3405
      %v3433 = vadd.f32 %v3394, %v3405
      %v3434 = vadd.f32 %v3395, %v3405
      %v3435 = vadd.f32 %v3396, %v3405
      %v3436 = vadd.f32 %v3397, %v3405
      %v3437 = vadd.f32 %v3398, %v3405
      %v3438 = vadd.f32 %v3399, %v3405
      %v3439 = vmax.f32 %v3407, 0.0
      %v3440 = vmax.f32 %v3408, 0.0
      %v3441 = vmax.f32 %v3409, 0.0
      %v3442 = vmax.f32 %v3410, 0.0
      %v3443 = vmax.f32 %v3411, 0.0
      %v3444 = vmax.f32 %v3412, 0.0
      %v3445 = vmax.f32 %v3413, 0.0
      %v3446 = vmax.f32 %v3414, 0.0
      %v3447 = vmax.f32 %v3415, 0.0
      %v3448 = vmax.f32 %v3416, 0.0
      %v3449 = vmax.f32 %v3417, 0.0
      %v3450 = vmax.f32 %v3418, 0.0
      %v3451 = vmax.f32 %v3419, 0.0
      %v3452 = vmax.f32 %v3420, 0.0
      %v3453 = vmax.f32 %v3421, 0.0
      %v3454 = vmax.f32 %v3422, 0.0
      %v3455 = vmax.f32 %v3423, 0.0
      %v3456 = vmax.f32 %v3424, 0.0
      %v3457 = vmax.f32 %v3425, 0.0
      %v3458 = vmax.f32 %v3426, 0.0
      %v3459 = vmax.f32 %v3427, 0.0
      %v3460 = vmax.f32 %v3428, 0.0
      %v3461 = vmax.f32 %v3429, 0.0
      %v3462 = vmax.f32 %v3430, 0.0
      %v3463 = vmax.f32 %v3431, 0.0
      %v3464 = vmax.f32 %v3432, 0.0
      %v3465 = vmax.f32 %v3433, 0.0
      %v3466 = vmax.f32 %v3434, 0.0
      %v3467 = vmax.f32 %v3435, 0.0
      %v3468 = vmax.f32 %v3436, 0.0
      %v3469 = vmax.f32 %v3437, 0.0
      %v3470 = vmax.f32 %v3438, 0.0
      %v3471 = vld [vmem:[%s165] sm:$0xf]
      %v3472 = vld [vmem:[%s165 + $0x4] sm:$0xf]
      %v3473 = vld [vmem:[%s165 + $0x8] sm:$0xf]
      %v3474 = vld [vmem:[%s165 + $0xc] sm:$0xf]
      %v3475 = vld [vmem:[%s165 + $0x10] sm:$0xf]
      %v3476 = vld [vmem:[%s165 + $0x14] sm:$0xf]
      %v3477 = vld [vmem:[%s165 + $0x18] sm:$0xf]
      %v3478 = vld [vmem:[%s165 + $0x1c] sm:$0xf]
      %v3479 = vld [vmem:[%s165 + $0x20] sm:$0xf]
      %v3480 = vld [vmem:[%s165 + $0x24] sm:$0xf]
      %v3481 = vld [vmem:[%s165 + $0x28] sm:$0xf]
      %v3482 = vld [vmem:[%s165 + $0x2c] sm:$0xf]
      %v3483 = vld [vmem:[%s165 + $0x30] sm:$0xf]
      %v3484 = vld [vmem:[%s165 + $0x34] sm:$0xf]
      %v3485 = vld [vmem:[%s165 + $0x38] sm:$0xf]
      %v3486 = vld [vmem:[%s165 + $0x3c] sm:$0xf]
      %v3487 = vld [vmem:[%s165 + $0x40] sm:$0xf]
      %v3488 = vld [vmem:[%s165 + $0x44] sm:$0xf]
      %v3489 = vld [vmem:[%s165 + $0x48] sm:$0xf]
      %v3490 = vld [vmem:[%s165 + $0x4c] sm:$0xf]
      %v3491 = vld [vmem:[%s165 + $0x50] sm:$0xf]
      %v3492 = vld [vmem:[%s165 + $0x54] sm:$0xf]
      %v3493 = vld [vmem:[%s165 + $0x58] sm:$0xf]
      %v3494 = vld [vmem:[%s165 + $0x5c] sm:$0xf]
      %v3495 = vld [vmem:[%s165 + $0x60] sm:$0xf]
      %v3496 = vld [vmem:[%s165 + $0x64] sm:$0xf]
      %v3497 = vld [vmem:[%s165 + $0x68] sm:$0xf]
      %v3498 = vld [vmem:[%s165 + $0x6c] sm:$0xf]
      %v3499 = vld [vmem:[%s165 + $0x70] sm:$0xf]
      %v3500 = vld [vmem:[%s165 + $0x74] sm:$0xf]
      %v3501 = vld [vmem:[%s165 + $0x78] sm:$0xf]
      %v3502 = vld [vmem:[%s165 + $0x7c] sm:$0xf]
      %v3503 = vunpack.c.l.bf16 %v3471
      %v3504 = vunpack.c.l.bf16 %v3472
      %v3505 = vunpack.c.l.bf16 %v3473
      %v3506 = vunpack.c.l.bf16 %v3474
      %v3507 = vunpack.c.l.bf16 %v3475
      %v3508 = vunpack.c.l.bf16 %v3476
      %v3509 = vunpack.c.l.bf16 %v3477
      %v3510 = vunpack.c.l.bf16 %v3478
      %v3511 = vunpack.c.l.bf16 %v3479
      %v3512 = vunpack.c.l.bf16 %v3480
      %v3513 = vunpack.c.l.bf16 %v3481
      %v3514 = vunpack.c.l.bf16 %v3482
      %v3515 = vunpack.c.l.bf16 %v3483
      %v3516 = vunpack.c.l.bf16 %v3484
      %v3517 = vunpack.c.l.bf16 %v3485
      %v3518 = vunpack.c.l.bf16 %v3486
      %v3519 = vunpack.c.l.bf16 %v3487
      %v3520 = vunpack.c.l.bf16 %v3488
      %v3521 = vunpack.c.l.bf16 %v3489
      %v3522 = vunpack.c.l.bf16 %v3490
      %v3523 = vunpack.c.l.bf16 %v3491
      %v3524 = vunpack.c.l.bf16 %v3492
      %v3525 = vunpack.c.l.bf16 %v3493
      %v3526 = vunpack.c.l.bf16 %v3494
      %v3527 = vunpack.c.l.bf16 %v3495
      %v3528 = vunpack.c.l.bf16 %v3496
      %v3529 = vunpack.c.l.bf16 %v3497
      %v3530 = vunpack.c.l.bf16 %v3498
      %v3531 = vunpack.c.l.bf16 %v3499
      %v3532 = vunpack.c.l.bf16 %v3500
      %v3533 = vunpack.c.l.bf16 %v3501
      %v3534 = vunpack.c.l.bf16 %v3502
      %v3535 = vadd.f32 %v3503, %v3439
      %v3536 = vadd.f32 %v3504, %v3440
      %v3537 = vadd.f32 %v3505, %v3441
      %v3538 = vadd.f32 %v3506, %v3442
      %v3539 = vadd.f32 %v3507, %v3443
      %v3540 = vadd.f32 %v3508, %v3444
      %v3541 = vadd.f32 %v3509, %v3445
      %v3542 = vadd.f32 %v3510, %v3446
      %v3543 = vadd.f32 %v3511, %v3447
      %v3544 = vadd.f32 %v3512, %v3448
      %v3545 = vadd.f32 %v3513, %v3449
      %v3546 = vadd.f32 %v3514, %v3450
      %v3547 = vadd.f32 %v3515, %v3451
      %v3548 = vadd.f32 %v3516, %v3452
      %v3549 = vadd.f32 %v3517, %v3453
      %v3550 = vadd.f32 %v3518, %v3454
      %v3551 = vadd.f32 %v3519, %v3455
      %v3552 = vadd.f32 %v3520, %v3456
      %v3553 = vadd.f32 %v3521, %v3457
      %v3554 = vadd.f32 %v3522, %v3458
      %v3555 = vadd.f32 %v3523, %v3459
      %v3556 = vadd.f32 %v3524, %v3460
      %v3557 = vadd.f32 %v3525, %v3461
      %v3558 = vadd.f32 %v3526, %v3462
      %v3559 = vadd.f32 %v3527, %v3463
      %v3560 = vadd.f32 %v3528, %v3464
      %v3561 = vadd.f32 %v3529, %v3465
      %v3562 = vadd.f32 %v3530, %v3466
      %v3563 = vadd.f32 %v3531, %v3467
      %v3564 = vadd.f32 %v3532, %v3468
      %v3565 = vadd.f32 %v3533, %v3469
      %v3566 = vadd.f32 %v3534, %v3470
      %v3567 = vpack.c.bf16 %v3536, %v3535
      %v3568 = vpack.c.bf16 %v3538, %v3537
      %v3569 = vpack.c.bf16 %v3540, %v3539
      %v3570 = vpack.c.bf16 %v3542, %v3541
      %v3571 = vpack.c.bf16 %v3544, %v3543
      %v3572 = vpack.c.bf16 %v3546, %v3545
      %v3573 = vpack.c.bf16 %v3548, %v3547
      %v3574 = vpack.c.bf16 %v3550, %v3549
      %v3575 = vpack.c.bf16 %v3552, %v3551
      %v3576 = vpack.c.bf16 %v3554, %v3553
      %v3577 = vpack.c.bf16 %v3556, %v3555
      %v3578 = vpack.c.bf16 %v3558, %v3557
      %v3579 = vpack.c.bf16 %v3560, %v3559
      %v3580 = vpack.c.bf16 %v3562, %v3561
      %v3581 = vpack.c.bf16 %v3564, %v3563
      %v3582 = vpack.c.bf16 %v3566, %v3565
      %v3599 = vunpack.c.l.b16 %v3567
      %v3600 = vunpack.c.h.b16 %v3567
      %v3601 = vunpack.c.l.b16 %v3568
      %v3602 = vunpack.c.h.b16 %v3568
      %v3603 = vunpack.c.l.b16 %v3569
      %v3604 = vunpack.c.h.b16 %v3569
      %v3605 = vunpack.c.l.b16 %v3570
      %v3606 = vunpack.c.h.b16 %v3570
      %v3607 = vunpack.c.l.b16 %v3571
      %v3608 = vunpack.c.h.b16 %v3571
      %v3609 = vunpack.c.l.b16 %v3572
      %v3610 = vunpack.c.h.b16 %v3572
      %v3611 = vunpack.c.l.b16 %v3573
      %v3612 = vunpack.c.h.b16 %v3573
      %v3613 = vunpack.c.l.b16 %v3574
      %v3614 = vunpack.c.h.b16 %v3574
      %v3615 = vunpack.c.l.b16 %v3575
      %v3616 = vunpack.c.h.b16 %v3575
      %v3617 = vunpack.c.l.b16 %v3576
      %v3618 = vunpack.c.h.b16 %v3576
      %v3619 = vunpack.c.l.b16 %v3577
      %v3620 = vunpack.c.h.b16 %v3577
      %v3621 = vunpack.c.l.b16 %v3578
      %v3622 = vunpack.c.h.b16 %v3578
      %v3623 = vunpack.c.l.b16 %v3579
      %v3624 = vunpack.c.h.b16 %v3579
      %v3625 = vunpack.c.l.b16 %v3580
      %v3626 = vunpack.c.h.b16 %v3580
      %v3627 = vunpack.c.l.b16 %v3581
      %v3628 = vunpack.c.h.b16 %v3581
      %v3629 = vunpack.c.l.b16 %v3582
      %v3630 = vunpack.c.h.b16 %v3582
      %v3631 = vpack.c.b16 %v3599, %v3599
      %v3632 = vpack.c.b16 %v3600, %v3600
      %v3633 = vpack.c.b16 %v3601, %v3601
      %v3634 = vpack.c.b16 %v3602, %v3602
      %v3635 = vpack.c.b16 %v3603, %v3603
      %v3636 = vpack.c.b16 %v3604, %v3604
      %v3637 = vpack.c.b16 %v3605, %v3605
      %v3638 = vpack.c.b16 %v3606, %v3606
      %v3639 = vpack.c.b16 %v3607, %v3607
      %v3640 = vpack.c.b16 %v3608, %v3608
      %v3641 = vpack.c.b16 %v3609, %v3609
      %v3642 = vpack.c.b16 %v3610, %v3610
      %v3643 = vpack.c.b16 %v3611, %v3611
      %v3644 = vpack.c.b16 %v3612, %v3612
      %v3645 = vpack.c.b16 %v3613, %v3613
      %v3646 = vpack.c.b16 %v3614, %v3614
      %v3647 = vpack.c.b16 %v3615, %v3615
      %v3648 = vpack.c.b16 %v3616, %v3616
      %v3649 = vpack.c.b16 %v3617, %v3617
      %v3650 = vpack.c.b16 %v3618, %v3618
      %v3651 = vpack.c.b16 %v3619, %v3619
      %v3652 = vpack.c.b16 %v3620, %v3620
      %v3653 = vpack.c.b16 %v3621, %v3621
      %v3654 = vpack.c.b16 %v3622, %v3622
      %v3655 = vpack.c.b16 %v3623, %v3623
      %v3656 = vpack.c.b16 %v3624, %v3624
      %v3657 = vpack.c.b16 %v3625, %v3625
      %v3658 = vpack.c.b16 %v3626, %v3626
      %v3659 = vpack.c.b16 %v3627, %v3627
      %v3660 = vpack.c.b16 %v3628, %v3628
      %v3661 = vpack.c.b16 %v3629, %v3629
      %v3662 = vpack.c.b16 %v3630, %v3630
      %3695 = vst.msk [vmem:[%s170] sm:$0xf] %vm173, %v3631
      %3696 = vst.msk [vmem:[%s170 + $0x4] sm:$0xf] %vm173, %v3632
      %3697 = vst.msk [vmem:[%s170 + $0x8] sm:$0xf] %vm173, %v3633
      %3698 = vst.msk [vmem:[%s170 + $0xc] sm:$0xf] %vm173, %v3634
      %3699 = vst.msk [vmem:[%s170 + $0x10] sm:$0xf] %vm173, %v3635
      %3700 = vst.msk [vmem:[%s170 + $0x14] sm:$0xf] %vm173, %v3636
      %3701 = vst.msk [vmem:[%s170 + $0x18] sm:$0xf] %vm173, %v3637
      %3702 = vst.msk [vmem:[%s170 + $0x1c] sm:$0xf] %vm173, %v3638
      %3703 = vst.msk [vmem:[%s170 + $0x20] sm:$0xf] %vm173, %v3639
      %3704 = vst.msk [vmem:[%s170 + $0x24] sm:$0xf] %vm173, %v3640
      %3705 = vst.msk [vmem:[%s170 + $0x28] sm:$0xf] %vm173, %v3641
      %3706 = vst.msk [vmem:[%s170 + $0x2c] sm:$0xf] %vm173, %v3642
      %3707 = vst.msk [vmem:[%s170 + $0x30] sm:$0xf] %vm173, %v3643
      %3708 = vst.msk [vmem:[%s170 + $0x34] sm:$0xf] %vm173, %v3644
      %3709 = vst.msk [vmem:[%s170 + $0x38] sm:$0xf] %vm173, %v3645
      %3710 = vst.msk [vmem:[%s170 + $0x3c] sm:$0xf] %vm173, %v3646
      %3711 = vst.msk [vmem:[%s170 + $0x40] sm:$0xf] %vm173, %v3647
      %3712 = vst.msk [vmem:[%s170 + $0x44] sm:$0xf] %vm173, %v3648
      %3713 = vst.msk [vmem:[%s170 + $0x48] sm:$0xf] %vm173, %v3649
      %3714 = vst.msk [vmem:[%s170 + $0x4c] sm:$0xf] %vm173, %v3650
      %3715 = vst.msk [vmem:[%s170 + $0x50] sm:$0xf] %vm173, %v3651
      %3716 = vst.msk [vmem:[%s170 + $0x54] sm:$0xf] %vm173, %v3652
      %3717 = vst.msk [vmem:[%s170 + $0x58] sm:$0xf] %vm173, %v3653
      %3718 = vst.msk [vmem:[%s170 + $0x5c] sm:$0xf] %vm173, %v3654
      %3719 = vst.msk [vmem:[%s170 + $0x60] sm:$0xf] %vm173, %v3655
      %3720 = vst.msk [vmem:[%s170 + $0x64] sm:$0xf] %vm173, %v3656
      %3721 = vst.msk [vmem:[%s170 + $0x68] sm:$0xf] %vm173, %v3657
      %3722 = vst.msk [vmem:[%s170 + $0x6c] sm:$0xf] %vm173, %v3658
      %3723 = vst.msk [vmem:[%s170 + $0x70] sm:$0xf] %vm173, %v3659
      %3724 = vst.msk [vmem:[%s170 + $0x74] sm:$0xf] %vm173, %v3660
      %3725 = vst.msk [vmem:[%s170 + $0x78] sm:$0xf] %vm173, %v3661
      %3726 = vst.msk [vmem:[%s170 + $0x7c] sm:$0xf] %vm173, %v3662
      %s3727 = smul.u32 32, %s14
      %p3728 = scmp.lt.s32.totalorder %s3727, 63
      %s3729 = scalar_select %p3728, %s3727, 63
      %s3730 = smul.addr %s3729, 4
      %s3731 = scalar_lea.vmem %s3, %s3730
      // Predicated region
      $region33: #{residual_forward.1} parent=31 // pred_check
        %p3732 = pneg %p100
      $region34: #{residual_forward.1} parent=31 // pred_check_branch
        %3734 = sbr.rel (%p3732) target = $region36
      $region35: #{residual_forward.1} parent=31 // pred_region
        %s3735 = smul.u32 32, %s14
      $region36: #{residual_forward.1} parent=31 // pred_fallthru
        _
    $region32: #{residual_forward.1} parent=5 // pred_fallthru
      _
    %p3736 = scmp.le.s32.totalorder 2, %s9
    // Predicated region
    $region37: #{residual_forward.1} parent=5 // pred_check
      %p3737 = pneg %p3736
    $region38: #{residual_forward.1} parent=5 // pred_check_branch
      %3739 = sbr.rel (%p3737) target = $region40
    $region39: #{residual_forward.1} parent=5 // pred_region
      %s3740 = ssub.s32 %s9, 2
      // Predicated region
      $region41: #{residual_forward.1} parent=39 // pred_check
        %p3741 = pneg %p106
      $region42: #{residual_forward.1} parent=39 // pred_check_branch
        %3743 = sbr.rel (%p3741) target = $region44
      $region43: #{residual_forward.1} parent=39 // pred_region
        %s3744 = smul.u32 32, %s15
        %p3745 = scmp.lt.s32.totalorder %s3744, 63
        %s3746 = scalar_select %p3745, %s3744, 63
        %s3747 = smul.addr %s3746, 4
        %s3748 = scalar_lea.vmem %s3, %s3747
      $region44: #{residual_forward.1} parent=39 // pred_fallthru
        _
    $region40: #{residual_forward.1} parent=5 // pred_fallthru
      _
  $region6: #{residual_forward.1} parent=0 // loop_footer
    %s13 = sadd.s32 1, %s9
  $region7: #{residual_forward.1} parent=0 // loop_footer_branch
    %8 = sbr.rel target = $region3
  $region8: #{residual_forward.1} parent=0 // loop_exit
    _

</llo_original>
